<compile_context>
chip_gen: v7x
topology: tpu7x:2x2x1
jax: 0.10.0
libtpu: 0.0.40
codegen_flags: <defaults>
</compile_context>

<pallas_src>
import functools

import jax
import jax.numpy as jnp
from jax import lax
from jax.experimental import pallas as pl
from jax.experimental.pallas import tpu as pltpu

_NEG_BIG = -1e30          # finite "-inf" for the online-softmax running max


# ---------------------------------------------------------------------------
# Small helpers
# ---------------------------------------------------------------------------
def _round_up(x, m):
    return ((x + m - 1) // m) * m


@functools.lru_cache(maxsize=None)
def _vmem_limit_bytes():
    """Generation-dependent scoped-VMEM limit (~3/4 of physical, capped)."""
    try:
        cap = int(pltpu.get_tpu_info().vmem_capacity_bytes)
    except Exception:                      # conservative fallback (v7x-safe)
        cap = 64 * 1024 * 1024
    return max(32 * 1024 * 1024, min(cap * 3 // 4, 100 * 1024 * 1024))


def _max_seq_tile():
    # 512-row tiles on 128 MiB-VMEM parts (v5e/v6e), 256 on v7x (64 MiB).
    return 512 if _vmem_limit_bytes() >= 96 * 1024 * 1024 else 256


def _choose_seq_tile(S):
    """Sequence tile: multiple of 8, chosen to minimize zero-padding of S."""
    mx = _max_seq_tile()
    if S <= mx:
        return _round_up(S, 8)
    best_t, best_pad = mx, _round_up(S, mx) - S
    t = mx
    while t >= mx // 2:
        pad = _round_up(S, t) - S
        if pad < best_pad:
            best_t, best_pad = t, pad
        t -= 8
    return best_t


def _cparams(*dims):
    return pltpu.CompilerParams(dimension_semantics=dims,
                                vmem_limit_bytes=_vmem_limit_bytes())


def _wspec(shape, index_map):
    """Constant-index weight tile: single-buffered (saves 1x its VMEM)."""
    return pl.BlockSpec(shape, index_map, pipeline_mode=pl.Buffered(1))


def _gelu_tanh(x):
    # Matches torch.nn.functional.gelu(x, approximate='tanh')
    c = jnp.sqrt(2.0 / jnp.pi).astype(x.dtype)
    return 0.5 * x * (1.0 + jnp.tanh(c * (x + 0.044715 * x * x * x)))


def _layernorm(x, g, b, eps):
    mu = jnp.mean(x, axis=-1, keepdims=True)
    var = jnp.mean((x - mu) ** 2, axis=-1, keepdims=True)
    return (x - mu) * lax.rsqrt(var + eps) * g + b


def _patchify(pixel_values, patch_size):
    """(B,C,H,W) -> (B, num_patches, C*P*P); exact space-to-depth for a
    Conv2d with kernel_size == stride (identical to torch conv+flatten)."""
    B, C, H, W = pixel_values.shape
    P = patch_size
    x = pixel_values.reshape(B, C, H // P, P, W // P, P)
    x = x.transpose(0, 2, 4, 1, 3, 5)                 # (B, Hp, Wp, C, P, P)
    return x.reshape(B, (H // P) * (W // P), C * P * P)


# ---------------------------------------------------------------------------
# Kernels
# ---------------------------------------------------------------------------
def _embed_kernel(patch_ref, wp_ref, bp_ref, pos_ref, out_ref):
    e = jnp.dot(patch_ref[0], wp_ref[...], preferred_element_type=jnp.float32)
    out_ref[0] = (e + bp_ref[0] + pos_ref[...]).astype(out_ref.dtype)


def _ln_qkv_kernel(x_ref, g_ref, b_ref, wqkv_ref, bqkv_ref, qkv_ref, *, eps):
    x = x_ref[0].astype(jnp.float32)                          # (tS, D)
    h = _layernorm(x, g_ref[0], b_ref[0], eps)
    qkv = jnp.dot(h.astype(jnp.bfloat16), wqkv_ref[...],
                  preferred_element_type=jnp.float32) + bqkv_ref[0]
    qkv_ref[0] = qkv.astype(qkv_ref.dtype)                    # bf16 (tS, 3D)


def _flash_attn_kernel(q_ref, k_ref, v_ref, x_ref, wo_ref, bo_ref, out_ref,
                       acc_sc, m_sc, l_sc, *, num_heads, head_dim,
                       seq_len, seq_len_padded, kv_tile):
    ki = pl.program_id(2)

    @pl.when(ki == 0)
    def _init():
        m_sc[...] = jnp.full(m_sc.shape, _NEG_BIG, jnp.float32)
        l_sc[...] = jnp.zeros(l_sc.shape, jnp.float32)
        acc_sc[...] = jnp.zeros(acc_sc.shape, jnp.float32)

    q = q_ref[0]            # (tq, D) bf16 (1/sqrt(hd) folded into Wq on host)
    k = k_ref[0]            # (tk, D) bf16
    v = v_ref[0]            # (tk, D) bf16
    tq = q.shape[0]

    if seq_len_padded > seq_len:          # static: only if S was zero-padded
        col = ki * kv_tile + lax.broadcasted_iota(jnp.int32, (tq, kv_tile), 1)
        pad_mask = col >= seq_len
    else:
        pad_mask = None

    contract = (((1,), (1,)), ((), ()))   # q @ k^T without materializing k^T

    for h in range(num_heads):            # heads = static lane-column slices
        hs, he = h * head_dim, (h + 1) * head_dim
        s = lax.dot_general(q[:, hs:he], k[:, hs:he], contract,
                            preferred_element_type=jnp.float32)  # (tq, tk) f32
        if pad_mask is not None:
            s = jnp.where(pad_mask, _NEG_BIG, s)

        m_old = m_sc[:, h:h + 1]
        m_new = jnp.maximum(m_old, jnp.max(s, axis=-1, keepdims=True))
        alpha = jnp.exp(m_old - m_new)
        p = jnp.exp(s - m_new)
        l_sc[:, h:h + 1] = alpha * l_sc[:, h:h + 1] + jnp.sum(p, axis=-1,
                                                              keepdims=True)
        acc_sc[:, hs:he] = alpha * acc_sc[:, hs:he] + jnp.dot(
            p.astype(jnp.bfloat16), v[:, hs:he],
            preferred_element_type=jnp.float32)
        m_sc[:, h:h + 1] = m_new

    @pl.when(ki == pl.num_programs(2) - 1)
    def _finalize():
        inv_l = pl.reciprocal(l_sc[...], approx=True)          # (tq, H)
        for h in range(num_heads):
            hs, he = h * head_dim, (h + 1) * head_dim
            acc_sc[:, hs:he] = acc_sc[:, hs:he] * inv_l[:, h:h + 1]
        ctx = acc_sc[...].astype(jnp.bfloat16)                 # lane-dense (tq, D)
        attn = jnp.dot(ctx, wo_ref[...],
                       preferred_element_type=jnp.float32) + bo_ref[0]
        out_ref[0] = (x_ref[0].astype(jnp.float32) + attn).astype(out_ref.dtype)


def _mlp_core(x_ref, g_ref, b_ref, w1_ref, b1_ref, w2_ref, b2_ref, eps):
    # TODO(synk): for very large intermediate sizes on v7x (64 MiB VMEM) add an
    # intermediate-dim grid axis over w1/w2 with an f32 accumulator scratch.
    x = x_ref[0].astype(jnp.float32)                           # (tS, D)
    h = _layernorm(x, g_ref[0], b_ref[0], eps)
    m = jnp.dot(h.astype(jnp.bfloat16), w1_ref[...],
                preferred_element_type=jnp.float32) + b1_ref[0]
    m = _gelu_tanh(m)
    m = jnp.dot(m.astype(jnp.bfloat16), w2_ref[...],
                preferred_element_type=jnp.float32) + b2_ref[0]
    return x + m


def _mlp_kernel(x_ref, g_ref, b_ref, w1_ref, b1_ref, w2_ref, b2_ref, out_ref,
                *, eps):
    y = _mlp_core(x_ref, g_ref, b_ref, w1_ref, b1_ref, w2_ref, b2_ref, eps)
    out_ref[0] = y.astype(out_ref.dtype)


def _mlp_final_kernel(x_ref, g_ref, b_ref, w1_ref, b1_ref, w2_ref, b2_ref,
                      pg_ref, pb_ref, out_ref, *, eps):
    y = _mlp_core(x_ref, g_ref, b_ref, w1_ref, b1_ref, w2_ref, b2_ref, eps)
    out_ref[0] = _layernorm(y, pg_ref[0], pb_ref[0], eps).astype(out_ref.dtype)


# ---------------------------------------------------------------------------
# pallas_call wrappers
# ---------------------------------------------------------------------------
def _embed(patches, wp, bp, pos, tS):
    B, Sp, Pd = patches.shape
    D = wp.shape[1]
    return pl.pallas_call(
        _embed_kernel,
        out_shape=jax.ShapeDtypeStruct((B, Sp, D), jnp.bfloat16),
        grid_spec=pltpu.PrefetchScalarGridSpec(
            num_scalar_prefetch=0,
            grid=(B, Sp // tS),
            in_specs=[
                pl.BlockSpec((1, tS, Pd), lambda b, s: (b, s, 0)),
                _wspec((Pd, D), lambda b, s: (0, 0)),
                pl.BlockSpec((1, D), lambda b, s: (0, 0)),
                pl.BlockSpec((tS, D), lambda b, s: (s, 0)),
            ],
            out_specs=pl.BlockSpec((1, tS, D), lambda b, s: (b, s, 0))),
        compiler_params=_cparams("parallel", "parallel"),
    )(patches, wp, bp, pos)


def _ln_qkv(x, lp, tS, *, eps):
    B, Sp, D = x.shape
    return pl.pallas_call(
        functools.partial(_ln_qkv_kernel, eps=eps),
        out_shape=jax.ShapeDtypeStruct((B, Sp, 3 * D), jnp.bfloat16),
        grid_spec=pltpu.PrefetchScalarGridSpec(
            num_scalar_prefetch=0,
            grid=(B, Sp // tS),
            in_specs=[
                pl.BlockSpec((1, tS, D), lambda b, s: (b, s, 0)),
                pl.BlockSpec((1, D), lambda b, s: (0, 0)),
                pl.BlockSpec((1, D), lambda b, s: (0, 0)),
                _wspec((D, 3 * D), lambda b, s: (0, 0)),
                pl.BlockSpec((1, 3 * D), lambda b, s: (0, 0)),
            ],
            out_specs=pl.BlockSpec((1, tS, 3 * D), lambda b, s: (b, s, 0))),
        compiler_params=_cparams("parallel", "parallel"),
    )(x, lp["ln1g"], lp["ln1b"], lp["wqkv"], lp["bqkv"])


def _flash_attention(qkv, x, lp, tS, *, num_heads, seq_len):
    B, Sp, D = x.shape
    head_dim = D // num_heads
    nT = Sp // tS
    kernel = functools.partial(_flash_attn_kernel, num_heads=num_heads,
                               head_dim=head_dim, seq_len=seq_len,
                               seq_len_padded=Sp, kv_tile=tS)
    return pl.pallas_call(
        kernel,
        out_shape=jax.ShapeDtypeStruct((B, Sp, D), jnp.bfloat16),
        grid_spec=pltpu.PrefetchScalarGridSpec(
            num_scalar_prefetch=0,
            grid=(B, nT, nT),
            in_specs=[
                pl.BlockSpec((1, tS, D), lambda b, qi, ki: (b, qi, 0)),  # q cols
                pl.BlockSpec((1, tS, D), lambda b, qi, ki: (b, ki, 1)),  # k cols
                pl.BlockSpec((1, tS, D), lambda b, qi, ki: (b, ki, 2)),  # v cols
                pl.BlockSpec((1, tS, D), lambda b, qi, ki: (b, qi, 0)),  # residual
                _wspec((D, D), lambda b, qi, ki: (0, 0)),                # wo
                pl.BlockSpec((1, D), lambda b, qi, ki: (0, 0)),          # bo
            ],
            out_specs=pl.BlockSpec((1, tS, D), lambda b, qi, ki: (b, qi, 0)),
            scratch_shapes=[
                pltpu.VMEM((tS, D), jnp.float32),           # lane-dense acc
                pltpu.VMEM((tS, num_heads), jnp.float32),   # running max
                pltpu.VMEM((tS, num_heads), jnp.float32),   # running denom
            ]),
        input_output_aliases={3: 0},          # residual stream written in place
        compiler_params=_cparams("parallel", "parallel", "arbitrary"),
    )(qkv, qkv, qkv, x, lp["wo"], lp["bo"])


def _mlp_block(x, lp, tS, *, eps, final_ln=None):
    B, Sp, D = x.shape
    I = lp["w1"].shape[1]
    in_specs = [
        pl.BlockSpec((1, tS, D), lambda b, s: (b, s, 0)),
        pl.BlockSpec((1, D), lambda b, s: (0, 0)),
        pl.BlockSpec((1, D), lambda b, s: (0, 0)),
        _wspec((D, I), lambda b, s: (0, 0)),
        pl.BlockSpec((1, I), lambda b, s: (0, 0)),
        _wspec((I, D), lambda b, s: (0, 0)),
        pl.BlockSpec((1, D), lambda b, s: (0, 0)),
    ]
    args = [x, lp["ln2g"], lp["ln2b"], lp["w1"], lp["b1"], lp["w2"], lp["b2"]]
    if final_ln is None:
        kernel = functools.partial(_mlp_kernel, eps=eps)
        out_dtype = jnp.bfloat16
        aliases = {0: 0}
    else:
        pg, pb = final_ln
        kernel = functools.partial(_mlp_final_kernel, eps=eps)
        in_specs = in_specs + [pl.BlockSpec((1, D), lambda b, s: (0, 0)),
                               pl.BlockSpec((1, D), lambda b, s: (0, 0))]
        args = args + [pg, pb]
        out_dtype = jnp.float32       # final model output in f32
        aliases = {}
    return pl.pallas_call(
        kernel,
        out_shape=jax.ShapeDtypeStruct((B, Sp, D), out_dtype),
        grid_spec=pltpu.PrefetchScalarGridSpec(
            num_scalar_prefetch=0,
            grid=(B, Sp // tS),
            in_specs=in_specs,
            out_specs=pl.BlockSpec((1, tS, D), lambda b, s: (b, s, 0))),
        input_output_aliases=aliases,
        compiler_params=_cparams("parallel", "parallel"),
    )(*args)


def siglip_vision_forward(pixel_values, kparams, *, num_heads, patch_size,
                          eps=1e-6):
    """Full SiglipVisionModel forward: embeddings -> encoder -> post-LN."""
    patches = _patchify(pixel_values, patch_size).astype(jnp.bfloat16)
    B, S, Pd = patches.shape
    tS = _choose_seq_tile(S)
    Sp = _round_up(S, tS)
    if Sp != S:                                   # pad to tile multiple
        patches = jnp.pad(patches, ((0, 0), (0, Sp - S), (0, 0)))
    pos = kparams["pos"]
    if Sp != pos.shape[0]:
        pos = jnp.pad(pos, ((0, Sp - pos.shape[0]), (0, 0)))

    x = _embed(patches, kparams["wp"], kparams["bp"], pos, tS)  # bf16 (B,Sp,D)

    n_layers = len(kparams["layers"])
    for li, lp in enumerate(kparams["layers"]):
        qkv = _ln_qkv(x, lp, tS, eps=eps)
        x = _flash_attention(qkv, x, lp, tS, num_heads=num_heads, seq_len=S)
        final_ln = ((kparams["postg"], kparams["postb"])
                    if li == n_layers - 1 else None)
        x = _mlp_block(x, lp, tS, eps=eps, final_ln=final_ln)

    return x[:, :S, :]


# ---------------------------------------------------------------------------
# Parameters (synthetic, deterministic; shapes follow SiglipVisionConfig).
# Linear weights are stored pre-transposed (in, out); wqkv = [Wq | Wk | Wv].
# ---------------------------------------------------------------------------
def init_params(key, *, num_layers, hidden, intermediate, num_channels,
                image_size, patch_size):
    D, I = hidden, intermediate
    Pd = num_channels * patch_size * patch_size
    nP = (image_size // patch_size) ** 2

    def nrm(k, shape, scale=0.05):
        return scale * jax.random.normal(k, shape, jnp.float32)

    ke = jax.random.split(jax.random.fold_in(key, 10_000), 3)
    params = {
        # == torch conv weight (D,C,P,P).reshape(D, C*P*P).T
        "wp": nrm(ke[0], (Pd, D)),
        "bp": nrm(ke[1], (1, D)),
        "pos": nrm(ke[2], (nP, D)),
        "postg": 1.0 + nrm(jax.random.fold_in(key, 20_000), (1, D)),
        "postb": nrm(jax.random.fold_in(key, 20_001), (1, D)),
        "layers": [],
    }
    for li in range(num_layers):
        ks = jax.random.split(jax.random.fold_in(key, li), 10)
        params["layers"].append({
            "ln1g": 1.0 + nrm(ks[0], (1, D)),
            "ln1b": nrm(ks[1], (1, D)),
            "wqkv": nrm(ks[2], (D, 3 * D)),
            "bqkv": nrm(ks[3], (1, 3 * D)),
            "wo": nrm(ks[4], (D, D)),
            "bo": nrm(ks[5], (1, D)),
            "ln2g": 1.0 + nrm(ks[6], (1, D)),
            "ln2b": nrm(ks[7], (1, D)),
            "w1": nrm(ks[8], (D, I)),
            "b1": jnp.zeros((1, I), jnp.float32),
            "w2": nrm(ks[9], (I, D)),
            "b2": jnp.zeros((1, D), jnp.float32),
        })
    return params


def to_kernel_params(params, *, num_heads):
    """Cast big matmul weights to bf16 and fold 1/sqrt(head_dim) into the
    q-columns of the fused QKV weight/bias.  LN params / biases stay f32."""
    kp = dict(params)
    kp["wp"] = params["wp"].astype(jnp.bfloat16)
    layers = []
    for p in params["layers"]:
        q = dict(p)
        D = p["wo"].shape[0]
        scale = (D // num_heads) ** (-0.5)
        q["wqkv"] = p["wqkv"].at[:, :D].multiply(scale).astype(jnp.bfloat16)
        q["bqkv"] = p["bqkv"].at[:, :D].multiply(scale)
        for name in ("wo", "w1", "w2"):
            q[name] = p[name].astype(jnp.bfloat16)
        layers.append(q)
    kp["layers"] = layers
    return kp


# ---------------------------------------------------------------------------
# Pure-JAX f32 reference (mirrors the PyTorch forward exactly)
# ---------------------------------------------------------------------------
def ref_forward(pixel_values, params, *, num_heads, patch_size, eps=1e-6):
    patches = _patchify(pixel_values, patch_size)
    x = patches @ params["wp"] + params["bp"][0] + params["pos"]
    B, S, D = x.shape
    hd = D // num_heads
    for p in params["layers"]:
        h = _layernorm(x, p["ln1g"][0], p["ln1b"][0], eps)
        qkv = h @ p["wqkv"] + p["bqkv"][0]
        q, k, v = qkv[..., :D], qkv[..., D:2 * D], qkv[..., 2 * D:]

        def split(t):
            return t.reshape(B, S, num_heads, hd).transpose(0, 2, 1, 3)

        qh, kh, vh = split(q), split(k), split(v)
        s = jnp.einsum("bhqd,bhkd->bhqk", qh, kh) * hd ** (-0.5)
        a = jax.nn.softmax(s.astype(jnp.float32), axis=-1)
        o = jnp.einsum("bhqk,bhkd->bhqd", a, vh)
        o = o.transpose(0, 2, 1, 3).reshape(B, S, D)
        x = x + (o @ p["wo"] + p["bo"][0])

        h = _layernorm(x, p["ln2g"][0], p["ln2b"][0], eps)
        m = _gelu_tanh(h @ p["w1"] + p["b1"][0])
        x = x + (m @ p["w2"] + p["b2"][0])
    return _layernorm(x, params["postg"][0], params["postb"][0], eps)


if __name__ == "__main__":
    # Small config consistent with SiglipVisionConfig semantics
    # (D kept a multiple of 128 so output slabs are lane-dense).
    B, C, IMG, P = 2, 3, 16, 4            # -> 16 patches
    D, I, H, L = 128, 256, 4, 2           # hidden, mlp, heads, layers
    EPS = 1e-6

    key = jax.random.PRNGKey(0)
    params = init_params(key, num_layers=L, hidden=D, intermediate=I,
                         num_channels=C, image_size=IMG, patch_size=P)
    pixels = jax.random.normal(jax.random.fold_in(key, 999),
                               (B, C, IMG, IMG), jnp.float32)

    kparams = to_kernel_params(params, num_heads=H)
    fwd = jax.jit(functools.partial(siglip_vision_forward, num_heads=H,
                                    patch_size=P, eps=EPS))
    out = jax.block_until_ready(fwd(pixels, kparams))

    ref = ref_forward(pixels, params, num_heads=H, patch_size=P, eps=EPS)

    n_patches = (IMG // P) ** 2
    assert out.shape == (B, n_patches, D), out.shape
    max_err = float(jnp.max(jnp.abs(out - ref)))
    # bf16 matmuls + bf16 residual stream vs f32 reference -> relaxed tolerance.
    assert max_err < 5e-2, f"max abs err {max_err}"
    print("KERNEL_OK")
</pallas_src>

<mosaic_0001>
module attributes {stable_mosaic.version = 11 : i64} {
  func.func @_embed_kernel(%arg0: i32, %arg1: i32, %arg2: memref<1x16x48xbf16, #tpu.memory_space<vmem>>, %arg3: memref<48x128xbf16, #tpu.memory_space<vmem>>, %arg4: memref<1x128xf32, #tpu.memory_space<vmem>>, %arg5: memref<16x128xf32, #tpu.memory_space<vmem>>, %arg6: memref<1x16x128xbf16, #tpu.memory_space<vmem>>) attributes {dimension_semantics = [#tpu.dimension_semantics<parallel>, #tpu.dimension_semantics<parallel>], iteration_bounds = array<i64: 2, 1>, scalar_prefetch = 0 : i64, scratch_operands = 0 : i64, tpu.core_type = #tpu.core_type<tc>, window_params = [{transform_indices = @transform_0, window_bounds = array<i64: 1, 16, 48>}, {pipeline_mode = #tpu.pipeline_mode<synchronous>, transform_indices = @transform_1, window_bounds = array<i64: 48, 128>}, {pipeline_mode = #tpu.pipeline_mode<synchronous>, transform_indices = @transform_2, window_bounds = array<i64: 1, 128>}, {transform_indices = @transform_3, window_bounds = array<i64: 16, 128>}, {transform_indices = @transform_4, window_bounds = array<i64: 1, 16, 128>}]} {
    %c0 = arith.constant 0 : index
    %c0_0 = arith.constant 0 : index
    %c0_1 = arith.constant 0 : index
    %0 = vector.load %arg2[%c0, %c0_0, %c0_1] : memref<1x16x48xbf16, #tpu.memory_space<vmem>>, vector<1x16x48xbf16>
    %1 = vector.shape_cast %0 : vector<1x16x48xbf16> to vector<16x48xbf16>
    %c0_2 = arith.constant 0 : index
    %c0_3 = arith.constant 0 : index
    %2 = vector.load %arg3[%c0_2, %c0_3] : memref<48x128xbf16, #tpu.memory_space<vmem>>, vector<48x128xbf16>
    %cst = arith.constant dense<0.000000e+00> : vector<16x128xf32>
    %3 = tpu.matmul %1, %2, %cst {dimension_numbers = #tpu.dot_dimension_numbers<[1], [0], [0], [1], [0, 0, 1, 1], [], []>} : vector<16x48xbf16>, vector<48x128xbf16>, vector<16x128xf32> -> vector<16x128xf32>
    %c0_4 = arith.constant 0 : index
    %c0_5 = arith.constant 0 : index
    %4 = vector.load %arg4[%c0_4, %c0_5] : memref<1x128xf32, #tpu.memory_space<vmem>>, vector<1x128xf32>
    %5 = vector.shape_cast %4 : vector<1x128xf32> to vector<128xf32>
    %6 = vector.shape_cast %5 : vector<128xf32> to vector<1x128xf32>
    %7 = vector.broadcast %6 : vector<1x128xf32> to vector<16x128xf32>
    %8 = arith.addf %3, %7 : vector<16x128xf32>
    %c0_6 = arith.constant 0 : index
    %c0_7 = arith.constant 0 : index
    %9 = vector.load %arg5[%c0_6, %c0_7] : memref<16x128xf32, #tpu.memory_space<vmem>>, vector<16x128xf32>
    %10 = arith.addf %8, %9 : vector<16x128xf32>
    %11 = arith.truncf %10 : vector<16x128xf32> to vector<16x128xbf16>
    %c0_8 = arith.constant 0 : index
    %c0_9 = arith.constant 0 : index
    %c0_10 = arith.constant 0 : index
    %12 = vector.load %arg6[%c0_8, %c0_9, %c0_10] : memref<1x16x128xbf16, #tpu.memory_space<vmem>>, vector<1x16x128xbf16>
    %13 = vector.shape_cast %12 : vector<1x16x128xbf16> to vector<16x128xbf16>
    %14 = vector.shape_cast %11 : vector<16x128xbf16> to vector<1x16x128xbf16>
    tpu.vector_store %arg6[%c0_8, %c0_9, %c0_10], %14 {strides = array<i32>} : memref<1x16x128xbf16, #tpu.memory_space<vmem>>, vector<1x16x128xbf16>,
    return
  }
  func.func @transform_0(%arg0: i32, %arg1: i32) -> (i32, i32, i32) {
    %c0_i32 = arith.constant 0 : i32
    %c0_i32_0 = arith.constant 0 : i32
    return %arg0, %arg1, %c0_i32 : i32, i32, i32
  }
  func.func @transform_1(%arg0: i32, %arg1: i32) -> (i32, i32) {
    %c0_i32 = arith.constant 0 : i32
    %c0_i32_0 = arith.constant 0 : i32
    %c0_i32_1 = arith.constant 0 : i32
    return %c0_i32, %c0_i32_0 : i32, i32
  }
  func.func @transform_2(%arg0: i32, %arg1: i32) -> (i32, i32) {
    %c0_i32 = arith.constant 0 : i32
    %c0_i32_0 = arith.constant 0 : i32
    %c0_i32_1 = arith.constant 0 : i32
    return %c0_i32, %c0_i32_0 : i32, i32
  }
  func.func @transform_3(%arg0: i32, %arg1: i32) -> (i32, i32) {
    %c0_i32 = arith.constant 0 : i32
    %c0_i32_0 = arith.constant 0 : i32
    return %arg1, %c0_i32 : i32, i32
  }
  func.func @transform_4(%arg0: i32, %arg1: i32) -> (i32, i32, i32) {
    %c0_i32 = arith.constant 0 : i32
    %c0_i32_0 = arith.constant 0 : i32
    return %arg0, %arg1, %c0_i32 : i32, i32, i32
  }
}

module attributes {stable_mosaic.version = 11 : i64} {
  func.func @_ln_qkv_kernel(%arg0: i32, %arg1: i32, %arg2: memref<1x16x128xbf16, #tpu.memory_space<vmem>>, %arg3: memref<1x128xf32, #tpu.memory_space<vmem>>, %arg4: memref<1x128xf32, #tpu.memory_space<vmem>>, %arg5: memref<128x384xbf16, #tpu.memory_space<vmem>>, %arg6: memref<1x384xf32, #tpu.memory_space<vmem>>, %arg7: memref<1x16x384xbf16, #tpu.memory_space<vmem>>) attributes {dimension_semantics = [#tpu.dimension_semantics<parallel>, #tpu.dimension_semantics<parallel>], iteration_bounds = array<i64: 2, 1>, scalar_prefetch = 0 : i64, scratch_operands = 0 : i64, tpu.core_type = #tpu.core_type<tc>, window_params = [{transform_indices = @transform_0, window_bounds = array<i64: 1, 16, 128>}, {pipeline_mode = #tpu.pipeline_mode<synchronous>, transform_indices = @transform_1, window_bounds = array<i64: 1, 128>}, {pipeline_mode = #tpu.pipeline_mode<synchronous>, transform_indices = @transform_2, window_bounds = array<i64: 1, 128>}, {pipeline_mode = #tpu.pipeline_mode<synchronous>, transform_indices = @transform_3, window_bounds = array<i64: 128, 384>}, {pipeline_mode = #tpu.pipeline_mode<synchronous>, transform_indices = @transform_4, window_bounds = array<i64: 1, 384>}, {transform_indices = @transform_5, window_bounds = array<i64: 1, 16, 384>}]} {
    %c0 = arith.constant 0 : index
    %c0_0 = arith.constant 0 : index
    %c0_1 = arith.constant 0 : index
    %0 = vector.load %arg2[%c0, %c0_0, %c0_1] : memref<1x16x128xbf16, #tpu.memory_space<vmem>>, vector<1x16x128xbf16>
    %1 = vector.shape_cast %0 : vector<1x16x128xbf16> to vector<16x128xbf16>
    %2 = arith.extf %1 : vector<16x128xbf16> to vector<16x128xf32>
    %c0_2 = arith.constant 0 : index
    %c0_3 = arith.constant 0 : index
    %3 = vector.load %arg3[%c0_2, %c0_3] : memref<1x128xf32, #tpu.memory_space<vmem>>, vector<1x128xf32>
    %4 = vector.shape_cast %3 : vector<1x128xf32> to vector<128xf32>
    %c0_4 = arith.constant 0 : index
    %c0_5 = arith.constant 0 : index
    %5 = vector.load %arg4[%c0_4, %c0_5] : memref<1x128xf32, #tpu.memory_space<vmem>>, vector<1x128xf32>
    %6 = vector.shape_cast %5 : vector<1x128xf32> to vector<128xf32>
    %cst = arith.constant dense<0.000000e+00> : vector<16xf32>
    %7 = vector.multi_reduction <add>, %2, %cst [1] : vector<16x128xf32> to vector<16xf32>
    %8 = vector.shape_cast %7 : vector<16xf32> to vector<16x1xf32>
    %cst_6 = arith.constant 1.280000e+02 : f32
    %9 = vector.broadcast %cst_6 : f32 to vector<16x1xf32>
    %10 = arith.divf %8, %9 : vector<16x1xf32>
    %11 = vector.broadcast %10 : vector<16x1xf32> to vector<16x128xf32>
    %12 = arith.subf %2, %11 : vector<16x128xf32>
    %13 = arith.mulf %12, %12 : vector<16x128xf32>
    %cst_7 = arith.constant dense<0.000000e+00> : vector<16xf32>
    %14 = vector.multi_reduction <add>, %13, %cst_7 [1] : vector<16x128xf32> to vector<16xf32>
    %15 = vector.shape_cast %14 : vector<16xf32> to vector<16x1xf32>
    %cst_8 = arith.constant 1.280000e+02 : f32
    %16 = vector.broadcast %cst_8 : f32 to vector<16x1xf32>
    %17 = arith.divf %15, %16 : vector<16x1xf32>
    %18 = vector.broadcast %10 : vector<16x1xf32> to vector<16x128xf32>
    %19 = arith.subf %2, %18 : vector<16x128xf32>
    %cst_9 = arith.constant 9.99999997E-7 : f32
    %20 = vector.broadcast %cst_9 : f32 to vector<16x1xf32>
    %21 = arith.addf %17, %20 : vector<16x1xf32>
    %22 = math.rsqrt %21 : vector<16x1xf32>
    %23 = vector.broadcast %22 : vector<16x1xf32> to vector<16x128xf32>
    %24 = arith.mulf %19, %23 : vector<16x128xf32>
    %25 = vector.shape_cast %4 : vector<128xf32> to vector<1x128xf32>
    %26 = vector.broadcast %25 : vector<1x128xf32> to vector<16x128xf32>
    %27 = arith.mulf %24, %26 : vector<16x128xf32>
    %28 = vector.shape_cast %6 : vector<128xf32> to vector<1x128xf32>
    %29 = vector.broadcast %28 : vector<1x128xf32> to vector<16x128xf32>
    %30 = arith.addf %27, %29 : vector<16x128xf32>
    %31 = arith.truncf %30 : vector<16x128xf32> to vector<16x128xbf16>
    %c0_10 = arith.constant 0 : index
    %c0_11 = arith.constant 0 : index
    %32 = vector.load %arg5[%c0_10, %c0_11] : memref<128x384xbf16, #tpu.memory_space<vmem>>, vector<128x384xbf16>
    %cst_12 = arith.constant dense<0.000000e+00> : vector<16x384xf32>
    %33 = tpu.matmul %31, %32, %cst_12 {dimension_numbers = #tpu.dot_dimension_numbers<[1], [0], [0], [1], [0, 0, 1, 1], [], []>} : vector<16x128xbf16>, vector<128x384xbf16>, vector<16x384xf32> -> vector<16x384xf32>
    %c0_13 = arith.constant 0 : index
    %c0_14 = arith.constant 0 : index
    %34 = vector.load %arg6[%c0_13, %c0_14] : memref<1x384xf32, #tpu.memory_space<vmem>>, vector<1x384xf32>
    %35 = vector.shape_cast %34 : vector<1x384xf32> to vector<384xf32>
    %36 = vector.shape_cast %35 : vector<384xf32> to vector<1x384xf32>
    %37 = vector.broadcast %36 : vector<1x384xf32> to vector<16x384xf32>
    %38 = arith.addf %33, %37 : vector<16x384xf32>
    %39 = arith.truncf %38 : vector<16x384xf32> to vector<16x384xbf16>
    %c0_15 = arith.constant 0 : index
    %c0_16 = arith.constant 0 : index
    %c0_17 = arith.constant 0 : index
    %40 = vector.load %arg7[%c0_15, %c0_16, %c0_17] : memref<1x16x384xbf16, #tpu.memory_space<vmem>>, vector<1x16x384xbf16>
    %41 = vector.shape_cast %40 : vector<1x16x384xbf16> to vector<16x384xbf16>
    %42 = vector.shape_cast %39 : vector<16x384xbf16> to vector<1x16x384xbf16>
    tpu.vector_store %arg7[%c0_15, %c0_16, %c0_17], %42 {strides = array<i32>} : memref<1x16x384xbf16, #tpu.memory_space<vmem>>, vector<1x16x384xbf16>,
    return
  }
  func.func @transform_0(%arg0: i32, %arg1: i32) -> (i32, i32, i32) {
    %c0_i32 = arith.constant 0 : i32
    %c0_i32_0 = arith.constant 0 : i32
    return %arg0, %arg1, %c0_i32 : i32, i32, i32
  }
  func.func @transform_1(%arg0: i32, %arg1: i32) -> (i32, i32) {
    %c0_i32 = arith.constant 0 : i32
    %c0_i32_0 = arith.constant 0 : i32
    %c0_i32_1 = arith.constant 0 : i32
    return %c0_i32, %c0_i32_0 : i32, i32
  }
  func.func @transform_2(%arg0: i32, %arg1: i32) -> (i32, i32) {
    %c0_i32 = arith.constant 0 : i32
    %c0_i32_0 = arith.constant 0 : i32
    %c0_i32_1 = arith.constant 0 : i32
    return %c0_i32, %c0_i32_0 : i32, i32
  }
  func.func @transform_3(%arg0: i32, %arg1: i32) -> (i32, i32) {
    %c0_i32 = arith.constant 0 : i32
    %c0_i32_0 = arith.constant 0 : i32
    %c0_i32_1 = arith.constant 0 : i32
    return %c0_i32, %c0_i32_0 : i32, i32
  }
  func.func @transform_4(%arg0: i32, %arg1: i32) -> (i32, i32) {
    %c0_i32 = arith.constant 0 : i32
    %c0_i32_0 = arith.constant 0 : i32
    %c0_i32_1 = arith.constant 0 : i32
    return %c0_i32, %c0_i32_0 : i32, i32
  }
  func.func @transform_5(%arg0: i32, %arg1: i32) -> (i32, i32, i32) {
    %c0_i32 = arith.constant 0 : i32
    %c0_i32_0 = arith.constant 0 : i32
    return %arg0, %arg1, %c0_i32 : i32, i32, i32
  }
}

module attributes {stable_mosaic.version = 11 : i64} {
  func.func @_flash_attn_kernel(%arg0: i32, %arg1: i32, %arg2: i32, %arg3: memref<1x16x128xbf16, #tpu.memory_space<vmem>>, %arg4: memref<1x16x128xbf16, #tpu.memory_space<vmem>>, %arg5: memref<1x16x128xbf16, #tpu.memory_space<vmem>>, %arg6: memref<1x16x128xbf16, #tpu.memory_space<vmem>>, %arg7: memref<128x128xbf16, #tpu.memory_space<vmem>>, %arg8: memref<1x128xf32, #tpu.memory_space<vmem>>, %arg9: memref<1x16x128xbf16, #tpu.memory_space<vmem>>, %arg10: memref<16x128xf32, #tpu.memory_space<vmem>>, %arg11: memref<16x4xf32, #tpu.memory_space<vmem>>, %arg12: memref<16x4xf32, #tpu.memory_space<vmem>>) attributes {dimension_semantics = [#tpu.dimension_semantics<parallel>, #tpu.dimension_semantics<parallel>, #tpu.dimension_semantics<arbitrary>], iteration_bounds = array<i64: 2, 1, 1>, scalar_prefetch = 0 : i64, scratch_operands = 3 : i64, tpu.core_type = #tpu.core_type<tc>, window_params = [{transform_indices = @transform_0, window_bounds = array<i64: 1, 16, 128>}, {transform_indices = @transform_1, window_bounds = array<i64: 1, 16, 128>}, {transform_indices = @transform_2, window_bounds = array<i64: 1, 16, 128>}, {transform_indices = @transform_3, window_bounds = array<i64: 1, 16, 128>}, {pipeline_mode = #tpu.pipeline_mode<synchronous>, transform_indices = @transform_4, window_bounds = array<i64: 128, 128>}, {pipeline_mode = #tpu.pipeline_mode<synchronous>, transform_indices = @transform_5, window_bounds = array<i64: 1, 128>}, {transform_indices = @transform_6, window_bounds = array<i64: 1, 16, 128>}]} {
    %c0_i32 = arith.constant 0 : i32
    %0 = arith.cmpi eq, %arg2, %c0_i32 : i32
    %1 = arith.extui %0 : i1 to i32
    %c0_i32_0 = arith.constant 0 : i32
    %2 = arith.cmpi ne, %1, %c0_i32_0 : i32
    scf.if %2 {
      %cst_68 = arith.constant -1.000000e+30 : f32
      %120 = vector.broadcast %cst_68 : f32 to vector<16x4xf32>
      %c0_69 = arith.constant 0 : index
      %c0_70 = arith.constant 0 : index
      %121 = vector.load %arg11[%c0_69, %c0_70] : memref<16x4xf32, #tpu.memory_space<vmem>>, vector<16x4xf32>
      tpu.vector_store %arg11[%c0_69, %c0_70], %120 {strides = array<i32>} : memref<16x4xf32, #tpu.memory_space<vmem>>, vector<16x4xf32>,
      %cst_71 = arith.constant 0.000000e+00 : f32
      %122 = vector.broadcast %cst_71 : f32 to vector<16x4xf32>
      %c0_72 = arith.constant 0 : index
      %c0_73 = arith.constant 0 : index
      %123 = vector.load %arg12[%c0_72, %c0_73] : memref<16x4xf32, #tpu.memory_space<vmem>>, vector<16x4xf32>
      tpu.vector_store %arg12[%c0_72, %c0_73], %122 {strides = array<i32>} : memref<16x4xf32, #tpu.memory_space<vmem>>, vector<16x4xf32>,
      %cst_74 = arith.constant 0.000000e+00 : f32
      %124 = vector.broadcast %cst_74 : f32 to vector<16x128xf32>
      %c0_75 = arith.constant 0 : index
      %c0_76 = arith.constant 0 : index
      %125 = vector.load %arg10[%c0_75, %c0_76] : memref<16x128xf32, #tpu.memory_space<vmem>>, vector<16x128xf32>
      tpu.vector_store %arg10[%c0_75, %c0_76], %124 {strides = array<i32>} : memref<16x128xf32, #tpu.memory_space<vmem>>, vector<16x128xf32>,
    } else {
    }
    %c0 = arith.constant 0 : index
    %c0_1 = arith.constant 0 : index
    %c0_2 = arith.constant 0 : index
    %3 = vector.load %arg3[%c0, %c0_1, %c0_2] : memref<1x16x128xbf16, #tpu.memory_space<vmem>>, vector<1x16x128xbf16>
    %4 = vector.shape_cast %3 : vector<1x16x128xbf16> to vector<16x128xbf16>
    %c0_3 = arith.constant 0 : index
    %c0_4 = arith.constant 0 : index
    %c0_5 = arith.constant 0 : index
    %5 = vector.load %arg4[%c0_3, %c0_4, %c0_5] : memref<1x16x128xbf16, #tpu.memory_space<vmem>>, vector<1x16x128xbf16>
    %6 = vector.shape_cast %5 : vector<1x16x128xbf16> to vector<16x128xbf16>
    %c0_6 = arith.constant 0 : index
    %c0_7 = arith.constant 0 : index
    %c0_8 = arith.constant 0 : index
    %7 = vector.load %arg5[%c0_6, %c0_7, %c0_8] : memref<1x16x128xbf16, #tpu.memory_space<vmem>>, vector<1x16x128xbf16>
    %8 = vector.shape_cast %7 : vector<1x16x128xbf16> to vector<16x128xbf16>
    %9 = vector.extract_strided_slice %4 {offsets = [0, 0], sizes = [16, 32], strides = [1, 1]} : vector<16x128xbf16> to vector<16x32xbf16>
    %10 = vector.extract_strided_slice %6 {offsets = [0, 0], sizes = [16, 32], strides = [1, 1]} : vector<16x128xbf16> to vector<16x32xbf16>
    %cst = arith.constant dense<0.000000e+00> : vector<16x16xf32>
    %11 = tpu.matmul %9, %10, %cst {dimension_numbers = #tpu.dot_dimension_numbers<[1], [1], [0], [0], [0, 0, 1, 0], [], []>} : vector<16x32xbf16>, vector<16x32xbf16>, vector<16x16xf32> -> vector<16x16xf32>
    %c0_9 = arith.constant 0 : index
    %c0_10 = arith.constant 0 : index
    %12 = vector.load %arg11[%c0_9, %c0_10] : memref<16x4xf32, #tpu.memory_space<vmem>>, vector<16x1xf32>
    %cst_11 = arith.constant dense<0xFF800000> : vector<16xf32>
    %13 = vector.multi_reduction <maximumf>, %11, %cst_11 [1] : vector<16x16xf32> to vector<16xf32>
    %14 = vector.shape_cast %13 : vector<16xf32> to vector<16x1xf32>
    %15 = arith.maximumf %12, %14 : vector<16x1xf32>
    %16 = arith.subf %12, %15 : vector<16x1xf32>
    %17 = math.exp %16 : vector<16x1xf32>
    %18 = vector.broadcast %15 : vector<16x1xf32> to vector<16x16xf32>
    %19 = arith.subf %11, %18 : vector<16x16xf32>
    %20 = math.exp %19 : vector<16x16xf32>
    %c0_12 = arith.constant 0 : index
    %c0_13 = arith.constant 0 : index
    %21 = vector.load %arg12[%c0_12, %c0_13] : memref<16x4xf32, #tpu.memory_space<vmem>>, vector<16x1xf32>
    %22 = arith.mulf %17, %21 : vector<16x1xf32>
    %cst_14 = arith.constant dense<0.000000e+00> : vector<16xf32>
    %23 = vector.multi_reduction <add>, %20, %cst_14 [1] : vector<16x16xf32> to vector<16xf32>
    %24 = vector.shape_cast %23 : vector<16xf32> to vector<16x1xf32>
    %25 = arith.addf %22, %24 : vector<16x1xf32>
    %c0_15 = arith.constant 0 : index
    %c0_16 = arith.constant 0 : index
    %26 = vector.load %arg12[%c0_15, %c0_16] : memref<16x4xf32, #tpu.memory_space<vmem>>, vector<16x1xf32>
    tpu.vector_store %arg12[%c0_15, %c0_16], %25 {strides = array<i32>} : memref<16x4xf32, #tpu.memory_space<vmem>>, vector<16x1xf32>,
    %c0_17 = arith.constant 0 : index
    %c0_18 = arith.constant 0 : index
    %27 = vector.load %arg10[%c0_17, %c0_18] : memref<16x128xf32, #tpu.memory_space<vmem>>, vector<16x32xf32>
    %28 = vector.broadcast %17 : vector<16x1xf32> to vector<16x32xf32>
    %29 = arith.mulf %28, %27 : vector<16x32xf32>
    %30 = arith.truncf %20 : vector<16x16xf32> to vector<16x16xbf16>
    %31 = vector.extract_strided_slice %8 {offsets = [0, 0], sizes = [16, 32], strides = [1, 1]} : vector<16x128xbf16> to vector<16x32xbf16>
    %cst_19 = arith.constant dense<0.000000e+00> : vector<16x32xf32>
    %32 = tpu.matmul %30, %31, %cst_19 {dimension_numbers = #tpu.dot_dimension_numbers<[1], [0], [0], [1], [0, 0, 1, 1], [], []>} : vector<16x16xbf16>, vector<16x32xbf16>, vector<16x32xf32> -> vector<16x32xf32>
    %33 = arith.addf %29, %32 : vector<16x32xf32>
    %c0_20 = arith.constant 0 : index
    %c0_21 = arith.constant 0 : index
    %34 = vector.load %arg10[%c0_20, %c0_21] : memref<16x128xf32, #tpu.memory_space<vmem>>, vector<16x32xf32>
    tpu.vector_store %arg10[%c0_20, %c0_21], %33 {strides = array<i32>} : memref<16x128xf32, #tpu.memory_space<vmem>>, vector<16x32xf32>,
    %c0_22 = arith.constant 0 : index
    %c0_23 = arith.constant 0 : index
    %35 = vector.load %arg11[%c0_22, %c0_23] : memref<16x4xf32, #tpu.memory_space<vmem>>, vector<16x1xf32>
    tpu.vector_store %arg11[%c0_22, %c0_23], %15 {strides = array<i32>} : memref<16x4xf32, #tpu.memory_space<vmem>>, vector<16x1xf32>,
    %36 = vector.extract_strided_slice %4 {offsets = [0, 32], sizes = [16, 32], strides = [1, 1]} : vector<16x128xbf16> to vector<16x32xbf16>
    %37 = vector.extract_strided_slice %6 {offsets = [0, 32], sizes = [16, 32], strides = [1, 1]} : vector<16x128xbf16> to vector<16x32xbf16>
    %cst_24 = arith.constant dense<0.000000e+00> : vector<16x16xf32>
    %38 = tpu.matmul %36, %37, %cst_24 {dimension_numbers = #tpu.dot_dimension_numbers<[1], [1], [0], [0], [0, 0, 1, 0], [], []>} : vector<16x32xbf16>, vector<16x32xbf16>, vector<16x16xf32> -> vector<16x16xf32>
    %c0_25 = arith.constant 0 : index
    %c1 = arith.constant 1 : index
    %39 = vector.load %arg11[%c0_25, %c1] : memref<16x4xf32, #tpu.memory_space<vmem>>, vector<16x1xf32>
    %cst_26 = arith.constant dense<0xFF800000> : vector<16xf32>
    %40 = vector.multi_reduction <maximumf>, %38, %cst_26 [1] : vector<16x16xf32> to vector<16xf32>
    %41 = vector.shape_cast %40 : vector<16xf32> to vector<16x1xf32>
    %42 = arith.maximumf %39, %41 : vector<16x1xf32>
    %43 = arith.subf %39, %42 : vector<16x1xf32>
    %44 = math.exp %43 : vector<16x1xf32>
    %45 = vector.broadcast %42 : vector<16x1xf32> to vector<16x16xf32>
    %46 = arith.subf %38, %45 : vector<16x16xf32>
    %47 = math.exp %46 : vector<16x16xf32>
    %c0_27 = arith.constant 0 : index
    %c1_28 = arith.constant 1 : index
    %48 = vector.load %arg12[%c0_27, %c1_28] : memref<16x4xf32, #tpu.memory_space<vmem>>, vector<16x1xf32>
    %49 = arith.mulf %44, %48 : vector<16x1xf32>
    %cst_29 = arith.constant dense<0.000000e+00> : vector<16xf32>
    %50 = vector.multi_reduction <add>, %47, %cst_29 [1] : vector<16x16xf32> to vector<16xf32>
    %51 = vector.shape_cast %50 : vector<16xf32> to vector<16x1xf32>
    %52 = arith.addf %49, %51 : vector<16x1xf32>
    %c0_30 = arith.constant 0 : index
    %c1_31 = arith.constant 1 : index
    %53 = vector.load %arg12[%c0_30, %c1_31] : memref<16x4xf32, #tpu.memory_space<vmem>>, vector<16x1xf32>
    tpu.vector_store %arg12[%c0_30, %c1_31], %52 {strides = array<i32>} : memref<16x4xf32, #tpu.memory_space<vmem>>, vector<16x1xf32>,
    %c0_32 = arith.constant 0 : index
    %c32 = arith.constant 32 : index
    %54 = vector.load %arg10[%c0_32, %c32] : memref<16x128xf32, #tpu.memory_space<vmem>>, vector<16x32xf32>
    %55 = vector.broadcast %44 : vector<16x1xf32> to vector<16x32xf32>
    %56 = arith.mulf %55, %54 : vector<16x32xf32>
    %57 = arith.truncf %47 : vector<16x16xf32> to vector<16x16xbf16>
    %58 = vector.extract_strided_slice %8 {offsets = [0, 32], sizes = [16, 32], strides = [1, 1]} : vector<16x128xbf16> to vector<16x32xbf16>
    %cst_33 = arith.constant dense<0.000000e+00> : vector<16x32xf32>
    %59 = tpu.matmul %57, %58, %cst_33 {dimension_numbers = #tpu.dot_dimension_numbers<[1], [0], [0], [1], [0, 0, 1, 1], [], []>} : vector<16x16xbf16>, vector<16x32xbf16>, vector<16x32xf32> -> vector<16x32xf32>
    %60 = arith.addf %56, %59 : vector<16x32xf32>
    %c0_34 = arith.constant 0 : index
    %c32_35 = arith.constant 32 : index
    %61 = vector.load %arg10[%c0_34, %c32_35] : memref<16x128xf32, #tpu.memory_space<vmem>>, vector<16x32xf32>
    tpu.vector_store %arg10[%c0_34, %c32_35], %60 {strides = array<i32>} : memref<16x128xf32, #tpu.memory_space<vmem>>, vector<16x32xf32>,
    %c0_36 = arith.constant 0 : index
    %c1_37 = arith.constant 1 : index
    %62 = vector.load %arg11[%c0_36, %c1_37] : memref<16x4xf32, #tpu.memory_space<vmem>>, vector<16x1xf32>
    tpu.vector_store %arg11[%c0_36, %c1_37], %42 {strides = array<i32>} : memref<16x4xf32, #tpu.memory_space<vmem>>, vector<16x1xf32>,
    %63 = vector.extract_strided_slice %4 {offsets = [0, 64], sizes = [16, 32], strides = [1, 1]} : vector<16x128xbf16> to vector<16x32xbf16>
    %64 = vector.extract_strided_slice %6 {offsets = [0, 64], sizes = [16, 32], strides = [1, 1]} : vector<16x128xbf16> to vector<16x32xbf16>
    %cst_38 = arith.constant dense<0.000000e+00> : vector<16x16xf32>
    %65 = tpu.matmul %63, %64, %cst_38 {dimension_numbers = #tpu.dot_dimension_numbers<[1], [1], [0], [0], [0, 0, 1, 0], [], []>} : vector<16x32xbf16>, vector<16x32xbf16>, vector<16x16xf32> -> vector<16x16xf32>
    %c0_39 = arith.constant 0 : index
    %c2 = arith.constant 2 : index
    %66 = vector.load %arg11[%c0_39, %c2] : memref<16x4xf32, #tpu.memory_space<vmem>>, vector<16x1xf32>
    %cst_40 = arith.constant dense<0xFF800000> : vector<16xf32>
    %67 = vector.multi_reduction <maximumf>, %65, %cst_40 [1] : vector<16x16xf32> to vector<16xf32>
    %68 = vector.shape_cast %67 : vector<16xf32> to vector<16x1xf32>
    %69 = arith.maximumf %66, %68 : vector<16x1xf32>
    %70 = arith.subf %66, %69 : vector<16x1xf32>
    %71 = math.exp %70 : vector<16x1xf32>
    %72 = vector.broadcast %69 : vector<16x1xf32> to vector<16x16xf32>
    %73 = arith.subf %65, %72 : vector<16x16xf32>
    %74 = math.exp %73 : vector<16x16xf32>
    %c0_41 = arith.constant 0 : index
    %c2_42 = arith.constant 2 : index
    %75 = vector.load %arg12[%c0_41, %c2_42] : memref<16x4xf32, #tpu.memory_space<vmem>>, vector<16x1xf32>
    %76 = arith.mulf %71, %75 : vector<16x1xf32>
    %cst_43 = arith.constant dense<0.000000e+00> : vector<16xf32>
    %77 = vector.multi_reduction <add>, %74, %cst_43 [1] : vector<16x16xf32> to vector<16xf32>
    %78 = vector.shape_cast %77 : vector<16xf32> to vector<16x1xf32>
    %79 = arith.addf %76, %78 : vector<16x1xf32>
    %c0_44 = arith.constant 0 : index
    %c2_45 = arith.constant 2 : index
    %80 = vector.load %arg12[%c0_44, %c2_45] : memref<16x4xf32, #tpu.memory_space<vmem>>, vector<16x1xf32>
    tpu.vector_store %arg12[%c0_44, %c2_45], %79 {strides = array<i32>} : memref<16x4xf32, #tpu.memory_space<vmem>>, vector<16x1xf32>,
    %c0_46 = arith.constant 0 : index
    %c64 = arith.constant 64 : index
    %81 = vector.load %arg10[%c0_46, %c64] : memref<16x128xf32, #tpu.memory_space<vmem>>, vector<16x32xf32>
    %82 = vector.broadcast %71 : vector<16x1xf32> to vector<16x32xf32>
    %83 = arith.mulf %82, %81 : vector<16x32xf32>
    %84 = arith.truncf %74 : vector<16x16xf32> to vector<16x16xbf16>
    %85 = vector.extract_strided_slice %8 {offsets = [0, 64], sizes = [16, 32], strides = [1, 1]} : vector<16x128xbf16> to vector<16x32xbf16>
    %cst_47 = arith.constant dense<0.000000e+00> : vector<16x32xf32>
    %86 = tpu.matmul %84, %85, %cst_47 {dimension_numbers = #tpu.dot_dimension_numbers<[1], [0], [0], [1], [0, 0, 1, 1], [], []>} : vector<16x16xbf16>, vector<16x32xbf16>, vector<16x32xf32> -> vector<16x32xf32>
    %87 = arith.addf %83, %86 : vector<16x32xf32>
    %c0_48 = arith.constant 0 : index
    %c64_49 = arith.constant 64 : index
    %88 = vector.load %arg10[%c0_48, %c64_49] : memref<16x128xf32, #tpu.memory_space<vmem>>, vector<16x32xf32>
    tpu.vector_store %arg10[%c0_48, %c64_49], %87 {strides = array<i32>} : memref<16x128xf32, #tpu.memory_space<vmem>>, vector<16x32xf32>,
    %c0_50 = arith.constant 0 : index
    %c2_51 = arith.constant 2 : index
    %89 = vector.load %arg11[%c0_50, %c2_51] : memref<16x4xf32, #tpu.memory_space<vmem>>, vector<16x1xf32>
    tpu.vector_store %arg11[%c0_50, %c2_51], %69 {strides = array<i32>} : memref<16x4xf32, #tpu.memory_space<vmem>>, vector<16x1xf32>,
    %90 = vector.extract_strided_slice %4 {offsets = [0, 96], sizes = [16, 32], strides = [1, 1]} : vector<16x128xbf16> to vector<16x32xbf16>
    %91 = vector.extract_strided_slice %6 {offsets = [0, 96], sizes = [16, 32], strides = [1, 1]} : vector<16x128xbf16> to vector<16x32xbf16>
    %cst_52 = arith.constant dense<0.000000e+00> : vector<16x16xf32>
    %92 = tpu.matmul %90, %91, %cst_52 {dimension_numbers = #tpu.dot_dimension_numbers<[1], [1], [0], [0], [0, 0, 1, 0], [], []>} : vector<16x32xbf16>, vector<16x32xbf16>, vector<16x16xf32> -> vector<16x16xf32>
    %c0_53 = arith.constant 0 : index
    %c3 = arith.constant 3 : index
    %93 = vector.load %arg11[%c0_53, %c3] : memref<16x4xf32, #tpu.memory_space<vmem>>, vector<16x1xf32>
    %cst_54 = arith.constant dense<0xFF800000> : vector<16xf32>
    %94 = vector.multi_reduction <maximumf>, %92, %cst_54 [1] : vector<16x16xf32> to vector<16xf32>
    %95 = vector.shape_cast %94 : vector<16xf32> to vector<16x1xf32>
    %96 = arith.maximumf %93, %95 : vector<16x1xf32>
    %97 = arith.subf %93, %96 : vector<16x1xf32>
    %98 = math.exp %97 : vector<16x1xf32>
    %99 = vector.broadcast %96 : vector<16x1xf32> to vector<16x16xf32>
    %100 = arith.subf %92, %99 : vector<16x16xf32>
    %101 = math.exp %100 : vector<16x16xf32>
    %c0_55 = arith.constant 0 : index
    %c3_56 = arith.constant 3 : index
    %102 = vector.load %arg12[%c0_55, %c3_56] : memref<16x4xf32, #tpu.memory_space<vmem>>, vector<16x1xf32>
    %103 = arith.mulf %98, %102 : vector<16x1xf32>
    %cst_57 = arith.constant dense<0.000000e+00> : vector<16xf32>
    %104 = vector.multi_reduction <add>, %101, %cst_57 [1] : vector<16x16xf32> to vector<16xf32>
    %105 = vector.shape_cast %104 : vector<16xf32> to vector<16x1xf32>
    %106 = arith.addf %103, %105 : vector<16x1xf32>
    %c0_58 = arith.constant 0 : index
    %c3_59 = arith.constant 3 : index
    %107 = vector.load %arg12[%c0_58, %c3_59] : memref<16x4xf32, #tpu.memory_space<vmem>>, vector<16x1xf32>
    tpu.vector_store %arg12[%c0_58, %c3_59], %106 {strides = array<i32>} : memref<16x4xf32, #tpu.memory_space<vmem>>, vector<16x1xf32>,
    %c0_60 = arith.constant 0 : index
    %c96 = arith.constant 96 : index
    %108 = vector.load %arg10[%c0_60, %c96] : memref<16x128xf32, #tpu.memory_space<vmem>>, vector<16x32xf32>
    %109 = vector.broadcast %98 : vector<16x1xf32> to vector<16x32xf32>
    %110 = arith.mulf %109, %108 : vector<16x32xf32>
    %111 = arith.truncf %101 : vector<16x16xf32> to vector<16x16xbf16>
    %112 = vector.extract_strided_slice %8 {offsets = [0, 96], sizes = [16, 32], strides = [1, 1]} : vector<16x128xbf16> to vector<16x32xbf16>
    %cst_61 = arith.constant dense<0.000000e+00> : vector<16x32xf32>
    %113 = tpu.matmul %111, %112, %cst_61 {dimension_numbers = #tpu.dot_dimension_numbers<[1], [0], [0], [1], [0, 0, 1, 1], [], []>} : vector<16x16xbf16>, vector<16x32xbf16>, vector<16x32xf32> -> vector<16x32xf32>
    %114 = arith.addf %110, %113 : vector<16x32xf32>
    %c0_62 = arith.constant 0 : index
    %c96_63 = arith.constant 96 : index
    %115 = vector.load %arg10[%c0_62, %c96_63] : memref<16x128xf32, #tpu.memory_space<vmem>>, vector<16x32xf32>
    tpu.vector_store %arg10[%c0_62, %c96_63], %114 {strides = array<i32>} : memref<16x128xf32, #tpu.memory_space<vmem>>, vector<16x32xf32>,
    %c0_64 = arith.constant 0 : index
    %c3_65 = arith.constant 3 : index
    %116 = vector.load %arg11[%c0_64, %c3_65] : memref<16x4xf32, #tpu.memory_space<vmem>>, vector<16x1xf32>
    tpu.vector_store %arg11[%c0_64, %c3_65], %96 {strides = array<i32>} : memref<16x4xf32, #tpu.memory_space<vmem>>, vector<16x1xf32>,
    %c0_i32_66 = arith.constant 0 : i32
    %117 = arith.cmpi eq, %arg2, %c0_i32_66 : i32
    %118 = arith.extui %117 : i1 to i32
    %c0_i32_67 = arith.constant 0 : i32
    %119 = arith.cmpi ne, %118, %c0_i32_67 : i32
    scf.if %119 {
      %c0_68 = arith.constant 0 : index
      %c0_69 = arith.constant 0 : index
      %120 = vector.load %arg12[%c0_68, %c0_69] : memref<16x4xf32, #tpu.memory_space<vmem>>, vector<16x4xf32>
      %121 = tpu.reciprocal %120 {approx = true} : vector<16x4xf32> -> vector<16x4xf32>
      %c0_70 = arith.constant 0 : index
      %c0_71 = arith.constant 0 : index
      %122 = vector.load %arg10[%c0_70, %c0_71] : memref<16x128xf32, #tpu.memory_space<vmem>>, vector<16x32xf32>
      %123 = vector.extract_strided_slice %121 {offsets = [0, 0], sizes = [16, 1], strides = [1, 1]} : vector<16x4xf32> to vector<16x1xf32>
      %124 = vector.broadcast %123 : vector<16x1xf32> to vector<16x32xf32>
      %125 = arith.mulf %122, %124 : vector<16x32xf32>
      %c0_72 = arith.constant 0 : index
      %c0_73 = arith.constant 0 : index
      %126 = vector.load %arg10[%c0_72, %c0_73] : memref<16x128xf32, #tpu.memory_space<vmem>>, vector<16x32xf32>
      tpu.vector_store %arg10[%c0_72, %c0_73], %125 {strides = array<i32>} : memref<16x128xf32, #tpu.memory_space<vmem>>, vector<16x32xf32>,
      %c0_74 = arith.constant 0 : index
      %c32_75 = arith.constant 32 : index
      %127 = vector.load %arg10[%c0_74, %c32_75] : memref<16x128xf32, #tpu.memory_space<vmem>>, vector<16x32xf32>
      %128 = vector.extract_strided_slice %121 {offsets = [0, 1], sizes = [16, 1], strides = [1, 1]} : vector<16x4xf32> to vector<16x1xf32>
      %129 = vector.broadcast %128 : vector<16x1xf32> to vector<16x32xf32>
      %130 = arith.mulf %127, %129 : vector<16x32xf32>
      %c0_76 = arith.constant 0 : index
      %c32_77 = arith.constant 32 : index
      %131 = vector.load %arg10[%c0_76, %c32_77] : memref<16x128xf32, #tpu.memory_space<vmem>>, vector<16x32xf32>
      tpu.vector_store %arg10[%c0_76, %c32_77], %130 {strides = array<i32>} : memref<16x128xf32, #tpu.memory_space<vmem>>, vector<16x32xf32>,
      %c0_78 = arith.constant 0 : index
      %c64_79 = arith.constant 64 : index
      %132 = vector.load %arg10[%c0_78, %c64_79] : memref<16x128xf32, #tpu.memory_space<vmem>>, vector<16x32xf32>
      %133 = vector.extract_strided_slice %121 {offsets = [0, 2], sizes = [16, 1], strides = [1, 1]} : vector<16x4xf32> to vector<16x1xf32>
      %134 = vector.broadcast %133 : vector<16x1xf32> to vector<16x32xf32>
      %135 = arith.mulf %132, %134 : vector<16x32xf32>
      %c0_80 = arith.constant 0 : index
      %c64_81 = arith.constant 64 : index
      %136 = vector.load %arg10[%c0_80, %c64_81] : memref<16x128xf32, #tpu.memory_space<vmem>>, vector<16x32xf32>
      tpu.vector_store %arg10[%c0_80, %c64_81], %135 {strides = array<i32>} : memref<16x128xf32, #tpu.memory_space<vmem>>, vector<16x32xf32>,
      %c0_82 = arith.constant 0 : index
      %c96_83 = arith.constant 96 : index
      %137 = vector.load %arg10[%c0_82, %c96_83] : memref<16x128xf32, #tpu.memory_space<vmem>>, vector<16x32xf32>
      %138 = vector.extract_strided_slice %121 {offsets = [0, 3], sizes = [16, 1], strides = [1, 1]} : vector<16x4xf32> to vector<16x1xf32>
      %139 = vector.broadcast %138 : vector<16x1xf32> to vector<16x32xf32>
      %140 = arith.mulf %137, %139 : vector<16x32xf32>
      %c0_84 = arith.constant 0 : index
      %c96_85 = arith.constant 96 : index
      %141 = vector.load %arg10[%c0_84, %c96_85] : memref<16x128xf32, #tpu.memory_space<vmem>>, vector<16x32xf32>
      tpu.vector_store %arg10[%c0_84, %c96_85], %140 {strides = array<i32>} : memref<16x128xf32, #tpu.memory_space<vmem>>, vector<16x32xf32>,
      %c0_86 = arith.constant 0 : index
      %c0_87 = arith.constant 0 : index
      %142 = vector.load %arg10[%c0_86, %c0_87] : memref<16x128xf32, #tpu.memory_space<vmem>>, vector<16x128xf32>
      %143 = arith.truncf %142 : vector<16x128xf32> to vector<16x128xbf16>
      %c0_88 = arith.constant 0 : index
      %c0_89 = arith.constant 0 : index
      %144 = vector.load %arg7[%c0_88, %c0_89] : memref<128x128xbf16, #tpu.memory_space<vmem>>, vector<128x128xbf16>
      %cst_90 = arith.constant dense<0.000000e+00> : vector<16x128xf32>
      %145 = tpu.matmul %143, %144, %cst_90 {dimension_numbers = #tpu.dot_dimension_numbers<[1], [0], [0], [1], [0, 0, 1, 1], [], []>} : vector<16x128xbf16>, vector<128x128xbf16>, vector<16x128xf32> -> vector<16x128xf32>
      %c0_91 = arith.constant 0 : index
      %c0_92 = arith.constant 0 : index
      %146 = vector.load %arg8[%c0_91, %c0_92] : memref<1x128xf32, #tpu.memory_space<vmem>>, vector<1x128xf32>
      %147 = vector.shape_cast %146 : vector<1x128xf32> to vector<128xf32>
      %148 = vector.shape_cast %147 : vector<128xf32> to vector<1x128xf32>
      %149 = vector.broadcast %148 : vector<1x128xf32> to vector<16x128xf32>
      %150 = arith.addf %145, %149 : vector<16x128xf32>
      %c0_93 = arith.constant 0 : index
      %c0_94 = arith.constant 0 : index
      %c0_95 = arith.constant 0 : index
      %151 = vector.load %arg6[%c0_93, %c0_94, %c0_95] : memref<1x16x128xbf16, #tpu.memory_space<vmem>>, vector<1x16x128xbf16>
      %152 = vector.shape_cast %151 : vector<1x16x128xbf16> to vector<16x128xbf16>
      %153 = arith.extf %152 : vector<16x128xbf16> to vector<16x128xf32>
      %154 = arith.addf %153, %150 : vector<16x128xf32>
      %155 = arith.truncf %154 : vector<16x128xf32> to vector<16x128xbf16>
      %c0_96 = arith.constant 0 : index
      %c0_97 = arith.constant 0 : index
      %c0_98 = arith.constant 0 : index
      %156 = vector.load %arg9[%c0_96, %c0_97, %c0_98] : memref<1x16x128xbf16, #tpu.memory_space<vmem>>, vector<1x16x128xbf16>
      %157 = vector.shape_cast %156 : vector<1x16x128xbf16> to vector<16x128xbf16>
      %158 = vector.shape_cast %155 : vector<16x128xbf16> to vector<1x16x128xbf16>
      tpu.vector_store %arg9[%c0_96, %c0_97, %c0_98], %158 {strides = array<i32>} : memref<1x16x128xbf16, #tpu.memory_space<vmem>>, vector<1x16x128xbf16>,
    } else {
    }
    return
  }
  func.func @transform_0(%arg0: i32, %arg1: i32, %arg2: i32) -> (i32, i32, i32) {
    %c0_i32 = arith.constant 0 : i32
    %c0_i32_0 = arith.constant 0 : i32
    return %arg0, %arg1, %c0_i32 : i32, i32, i32
  }
  func.func @transform_1(%arg0: i32, %arg1: i32, %arg2: i32) -> (i32, i32, i32) {
    %c1_i32 = arith.constant 1 : i32
    %c0_i32 = arith.constant 0 : i32
    return %arg0, %arg2, %c1_i32 : i32, i32, i32
  }
  func.func @transform_2(%arg0: i32, %arg1: i32, %arg2: i32) -> (i32, i32, i32) {
    %c2_i32 = arith.constant 2 : i32
    %c0_i32 = arith.constant 0 : i32
    return %arg0, %arg2, %c2_i32 : i32, i32, i32
  }
  func.func @transform_3(%arg0: i32, %arg1: i32, %arg2: i32) -> (i32, i32, i32) {
    %c0_i32 = arith.constant 0 : i32
    %c0_i32_0 = arith.constant 0 : i32
    return %arg0, %arg1, %c0_i32 : i32, i32, i32
  }
  func.func @transform_4(%arg0: i32, %arg1: i32, %arg2: i32) -> (i32, i32) {
    %c0_i32 = arith.constant 0 : i32
    %c0_i32_0 = arith.constant 0 : i32
    %c0_i32_1 = arith.constant 0 : i32
    return %c0_i32, %c0_i32_0 : i32, i32
  }
  func.func @transform_5(%arg0: i32, %arg1: i32, %arg2: i32) -> (i32, i32) {
    %c0_i32 = arith.constant 0 : i32
    %c0_i32_0 = arith.constant 0 : i32
    %c0_i32_1 = arith.constant 0 : i32
    return %c0_i32, %c0_i32_0 : i32, i32
  }
  func.func @transform_6(%arg0: i32, %arg1: i32, %arg2: i32) -> (i32, i32, i32) {
    %c0_i32 = arith.constant 0 : i32
    %c0_i32_0 = arith.constant 0 : i32
    return %arg0, %arg1, %c0_i32 : i32, i32, i32
  }
}

module attributes {stable_mosaic.version = 11 : i64} {
  func.func @_mlp_kernel(%arg0: i32, %arg1: i32, %arg2: memref<1x16x128xbf16, #tpu.memory_space<vmem>>, %arg3: memref<1x128xf32, #tpu.memory_space<vmem>>, %arg4: memref<1x128xf32, #tpu.memory_space<vmem>>, %arg5: memref<128x256xbf16, #tpu.memory_space<vmem>>, %arg6: memref<1x256xf32, #tpu.memory_space<vmem>>, %arg7: memref<256x128xbf16, #tpu.memory_space<vmem>>, %arg8: memref<1x128xf32, #tpu.memory_space<vmem>>, %arg9: memref<1x16x128xbf16, #tpu.memory_space<vmem>>) attributes {dimension_semantics = [#tpu.dimension_semantics<parallel>, #tpu.dimension_semantics<parallel>], iteration_bounds = array<i64: 2, 1>, scalar_prefetch = 0 : i64, scratch_operands = 0 : i64, tpu.core_type = #tpu.core_type<tc>, window_params = [{transform_indices = @transform_0, window_bounds = array<i64: 1, 16, 128>}, {pipeline_mode = #tpu.pipeline_mode<synchronous>, transform_indices = @transform_1, window_bounds = array<i64: 1, 128>}, {pipeline_mode = #tpu.pipeline_mode<synchronous>, transform_indices = @transform_2, window_bounds = array<i64: 1, 128>}, {pipeline_mode = #tpu.pipeline_mode<synchronous>, transform_indices = @transform_3, window_bounds = array<i64: 128, 256>}, {pipeline_mode = #tpu.pipeline_mode<synchronous>, transform_indices = @transform_4, window_bounds = array<i64: 1, 256>}, {pipeline_mode = #tpu.pipeline_mode<synchronous>, transform_indices = @transform_5, window_bounds = array<i64: 256, 128>}, {pipeline_mode = #tpu.pipeline_mode<synchronous>, transform_indices = @transform_6, window_bounds = array<i64: 1, 128>}, {transform_indices = @transform_7, window_bounds = array<i64: 1, 16, 128>}]} {
    %c0 = arith.constant 0 : index
    %c0_0 = arith.constant 0 : index
    %c0_1 = arith.constant 0 : index
    %0 = vector.load %arg2[%c0, %c0_0, %c0_1] : memref<1x16x128xbf16, #tpu.memory_space<vmem>>, vector<1x16x128xbf16>
    %1 = vector.shape_cast %0 : vector<1x16x128xbf16> to vector<16x128xbf16>
    %2 = arith.extf %1 : vector<16x128xbf16> to vector<16x128xf32>
    %c0_2 = arith.constant 0 : index
    %c0_3 = arith.constant 0 : index
    %3 = vector.load %arg3[%c0_2, %c0_3] : memref<1x128xf32, #tpu.memory_space<vmem>>, vector<1x128xf32>
    %4 = vector.shape_cast %3 : vector<1x128xf32> to vector<128xf32>
    %c0_4 = arith.constant 0 : index
    %c0_5 = arith.constant 0 : index
    %5 = vector.load %arg4[%c0_4, %c0_5] : memref<1x128xf32, #tpu.memory_space<vmem>>, vector<1x128xf32>
    %6 = vector.shape_cast %5 : vector<1x128xf32> to vector<128xf32>
    %cst = arith.constant dense<0.000000e+00> : vector<16xf32>
    %7 = vector.multi_reduction <add>, %2, %cst [1] : vector<16x128xf32> to vector<16xf32>
    %8 = vector.shape_cast %7 : vector<16xf32> to vector<16x1xf32>
    %cst_6 = arith.constant 1.280000e+02 : f32
    %9 = vector.broadcast %cst_6 : f32 to vector<16x1xf32>
    %10 = arith.divf %8, %9 : vector<16x1xf32>
    %11 = vector.broadcast %10 : vector<16x1xf32> to vector<16x128xf32>
    %12 = arith.subf %2, %11 : vector<16x128xf32>
    %13 = arith.mulf %12, %12 : vector<16x128xf32>
    %cst_7 = arith.constant dense<0.000000e+00> : vector<16xf32>
    %14 = vector.multi_reduction <add>, %13, %cst_7 [1] : vector<16x128xf32> to vector<16xf32>
    %15 = vector.shape_cast %14 : vector<16xf32> to vector<16x1xf32>
    %cst_8 = arith.constant 1.280000e+02 : f32
    %16 = vector.broadcast %cst_8 : f32 to vector<16x1xf32>
    %17 = arith.divf %15, %16 : vector<16x1xf32>
    %18 = vector.broadcast %10 : vector<16x1xf32> to vector<16x128xf32>
    %19 = arith.subf %2, %18 : vector<16x128xf32>
    %cst_9 = arith.constant 9.99999997E-7 : f32
    %20 = vector.broadcast %cst_9 : f32 to vector<16x1xf32>
    %21 = arith.addf %17, %20 : vector<16x1xf32>
    %22 = math.rsqrt %21 : vector<16x1xf32>
    %23 = vector.broadcast %22 : vector<16x1xf32> to vector<16x128xf32>
    %24 = arith.mulf %19, %23 : vector<16x128xf32>
    %25 = vector.shape_cast %4 : vector<128xf32> to vector<1x128xf32>
    %26 = vector.broadcast %25 : vector<1x128xf32> to vector<16x128xf32>
    %27 = arith.mulf %24, %26 : vector<16x128xf32>
    %28 = vector.shape_cast %6 : vector<128xf32> to vector<1x128xf32>
    %29 = vector.broadcast %28 : vector<1x128xf32> to vector<16x128xf32>
    %30 = arith.addf %27, %29 : vector<16x128xf32>
    %31 = arith.truncf %30 : vector<16x128xf32> to vector<16x128xbf16>
    %c0_10 = arith.constant 0 : index
    %c0_11 = arith.constant 0 : index
    %32 = vector.load %arg5[%c0_10, %c0_11] : memref<128x256xbf16, #tpu.memory_space<vmem>>, vector<128x256xbf16>
    %cst_12 = arith.constant dense<0.000000e+00> : vector<16x256xf32>
    %33 = tpu.matmul %31, %32, %cst_12 {dimension_numbers = #tpu.dot_dimension_numbers<[1], [0], [0], [1], [0, 0, 1, 1], [], []>} : vector<16x128xbf16>, vector<128x256xbf16>, vector<16x256xf32> -> vector<16x256xf32>
    %c0_13 = arith.constant 0 : index
    %c0_14 = arith.constant 0 : index
    %34 = vector.load %arg6[%c0_13, %c0_14] : memref<1x256xf32, #tpu.memory_space<vmem>>, vector<1x256xf32>
    %35 = vector.shape_cast %34 : vector<1x256xf32> to vector<256xf32>
    %36 = vector.shape_cast %35 : vector<256xf32> to vector<1x256xf32>
    %37 = vector.broadcast %36 : vector<1x256xf32> to vector<16x256xf32>
    %38 = arith.addf %33, %37 : vector<16x256xf32>
    %cst_15 = arith.constant 0.636619746 : f32
    %39 = math.sqrt %cst_15 : f32
    %cst_16 = arith.constant 5.000000e-01 : f32
    %40 = vector.broadcast %cst_16 : f32 to vector<16x256xf32>
    %41 = arith.mulf %40, %38 : vector<16x256xf32>
    %cst_17 = arith.constant 4.471500e-02 : f32
    %42 = vector.broadcast %cst_17 : f32 to vector<16x256xf32>
    %43 = arith.mulf %42, %38 : vector<16x256xf32>
    %44 = arith.mulf %43, %38 : vector<16x256xf32>
    %45 = arith.mulf %44, %38 : vector<16x256xf32>
    %46 = arith.addf %38, %45 : vector<16x256xf32>
    %47 = vector.broadcast %39 : f32 to vector<16x256xf32>
    %48 = arith.mulf %47, %46 : vector<16x256xf32>
    %49 = math.tanh %48 : vector<16x256xf32>
    %cst_18 = arith.constant 1.000000e+00 : f32
    %50 = vector.broadcast %cst_18 : f32 to vector<16x256xf32>
    %51 = arith.addf %50, %49 : vector<16x256xf32>
    %52 = arith.mulf %41, %51 : vector<16x256xf32>
    %53 = arith.truncf %52 : vector<16x256xf32> to vector<16x256xbf16>
    %c0_19 = arith.constant 0 : index
    %c0_20 = arith.constant 0 : index
    %54 = vector.load %arg7[%c0_19, %c0_20] : memref<256x128xbf16, #tpu.memory_space<vmem>>, vector<256x128xbf16>
    %cst_21 = arith.constant dense<0.000000e+00> : vector<16x128xf32>
    %55 = tpu.matmul %53, %54, %cst_21 {dimension_numbers = #tpu.dot_dimension_numbers<[1], [0], [0], [1], [0, 0, 1, 1], [], []>} : vector<16x256xbf16>, vector<256x128xbf16>, vector<16x128xf32> -> vector<16x128xf32>
    %c0_22 = arith.constant 0 : index
    %c0_23 = arith.constant 0 : index
    %56 = vector.load %arg8[%c0_22, %c0_23] : memref<1x128xf32, #tpu.memory_space<vmem>>, vector<1x128xf32>
    %57 = vector.shape_cast %56 : vector<1x128xf32> to vector<128xf32>
    %58 = vector.shape_cast %57 : vector<128xf32> to vector<1x128xf32>
    %59 = vector.broadcast %58 : vector<1x128xf32> to vector<16x128xf32>
    %60 = arith.addf %55, %59 : vector<16x128xf32>
    %61 = arith.addf %2, %60 : vector<16x128xf32>
    %62 = arith.truncf %61 : vector<16x128xf32> to vector<16x128xbf16>
    %c0_24 = arith.constant 0 : index
    %c0_25 = arith.constant 0 : index
    %c0_26 = arith.constant 0 : index
    %63 = vector.load %arg9[%c0_24, %c0_25, %c0_26] : memref<1x16x128xbf16, #tpu.memory_space<vmem>>, vector<1x16x128xbf16>
    %64 = vector.shape_cast %63 : vector<1x16x128xbf16> to vector<16x128xbf16>
    %65 = vector.shape_cast %62 : vector<16x128xbf16> to vector<1x16x128xbf16>
    tpu.vector_store %arg9[%c0_24, %c0_25, %c0_26], %65 {strides = array<i32>} : memref<1x16x128xbf16, #tpu.memory_space<vmem>>, vector<1x16x128xbf16>,
    return
  }
  func.func @transform_0(%arg0: i32, %arg1: i32) -> (i32, i32, i32) {
    %c0_i32 = arith.constant 0 : i32
    %c0_i32_0 = arith.constant 0 : i32
    return %arg0, %arg1, %c0_i32 : i32, i32, i32
  }
  func.func @transform_1(%arg0: i32, %arg1: i32) -> (i32, i32) {
    %c0_i32 = arith.constant 0 : i32
    %c0_i32_0 = arith.constant 0 : i32
    %c0_i32_1 = arith.constant 0 : i32
    return %c0_i32, %c0_i32_0 : i32, i32
  }
  func.func @transform_2(%arg0: i32, %arg1: i32) -> (i32, i32) {
    %c0_i32 = arith.constant 0 : i32
    %c0_i32_0 = arith.constant 0 : i32
    %c0_i32_1 = arith.constant 0 : i32
    return %c0_i32, %c0_i32_0 : i32, i32
  }
  func.func @transform_3(%arg0: i32, %arg1: i32) -> (i32, i32) {
    %c0_i32 = arith.constant 0 : i32
    %c0_i32_0 = arith.constant 0 : i32
    %c0_i32_1 = arith.constant 0 : i32
    return %c0_i32, %c0_i32_0 : i32, i32
  }
  func.func @transform_4(%arg0: i32, %arg1: i32) -> (i32, i32) {
    %c0_i32 = arith.constant 0 : i32
    %c0_i32_0 = arith.constant 0 : i32
    %c0_i32_1 = arith.constant 0 : i32
    return %c0_i32, %c0_i32_0 : i32, i32
  }
  func.func @transform_5(%arg0: i32, %arg1: i32) -> (i32, i32) {
    %c0_i32 = arith.constant 0 : i32
    %c0_i32_0 = arith.constant 0 : i32
    %c0_i32_1 = arith.constant 0 : i32
    return %c0_i32, %c0_i32_0 : i32, i32
  }
  func.func @transform_6(%arg0: i32, %arg1: i32) -> (i32, i32) {
    %c0_i32 = arith.constant 0 : i32
    %c0_i32_0 = arith.constant 0 : i32
    %c0_i32_1 = arith.constant 0 : i32
    return %c0_i32, %c0_i32_0 : i32, i32
  }
  func.func @transform_7(%arg0: i32, %arg1: i32) -> (i32, i32, i32) {
    %c0_i32 = arith.constant 0 : i32
    %c0_i32_0 = arith.constant 0 : i32
    return %arg0, %arg1, %c0_i32 : i32, i32, i32
  }
}

module attributes {stable_mosaic.version = 11 : i64} {
  func.func @_mlp_final_kernel(%arg0: i32, %arg1: i32, %arg2: memref<1x16x128xbf16, #tpu.memory_space<vmem>>, %arg3: memref<1x128xf32, #tpu.memory_space<vmem>>, %arg4: memref<1x128xf32, #tpu.memory_space<vmem>>, %arg5: memref<128x256xbf16, #tpu.memory_space<vmem>>, %arg6: memref<1x256xf32, #tpu.memory_space<vmem>>, %arg7: memref<256x128xbf16, #tpu.memory_space<vmem>>, %arg8: memref<1x128xf32, #tpu.memory_space<vmem>>, %arg9: memref<1x128xf32, #tpu.memory_space<vmem>>, %arg10: memref<1x128xf32, #tpu.memory_space<vmem>>, %arg11: memref<1x16x128xf32, #tpu.memory_space<vmem>>) attributes {dimension_semantics = [#tpu.dimension_semantics<parallel>, #tpu.dimension_semantics<parallel>], iteration_bounds = array<i64: 2, 1>, scalar_prefetch = 0 : i64, scratch_operands = 0 : i64, tpu.core_type = #tpu.core_type<tc>, window_params = [{transform_indices = @transform_0, window_bounds = array<i64: 1, 16, 128>}, {pipeline_mode = #tpu.pipeline_mode<synchronous>, transform_indices = @transform_1, window_bounds = array<i64: 1, 128>}, {pipeline_mode = #tpu.pipeline_mode<synchronous>, transform_indices = @transform_2, window_bounds = array<i64: 1, 128>}, {pipeline_mode = #tpu.pipeline_mode<synchronous>, transform_indices = @transform_3, window_bounds = array<i64: 128, 256>}, {pipeline_mode = #tpu.pipeline_mode<synchronous>, transform_indices = @transform_4, window_bounds = array<i64: 1, 256>}, {pipeline_mode = #tpu.pipeline_mode<synchronous>, transform_indices = @transform_5, window_bounds = array<i64: 256, 128>}, {pipeline_mode = #tpu.pipeline_mode<synchronous>, transform_indices = @transform_6, window_bounds = array<i64: 1, 128>}, {pipeline_mode = #tpu.pipeline_mode<synchronous>, transform_indices = @transform_7, window_bounds = array<i64: 1, 128>}, {pipeline_mode = #tpu.pipeline_mode<synchronous>, transform_indices = @transform_8, window_bounds = array<i64: 1, 128>}, {transform_indices = @transform_9, window_bounds = array<i64: 1, 16, 128>}]} {
    %c0 = arith.constant 0 : index
    %c0_0 = arith.constant 0 : index
    %c0_1 = arith.constant 0 : index
    %0 = vector.load %arg2[%c0, %c0_0, %c0_1] : memref<1x16x128xbf16, #tpu.memory_space<vmem>>, vector<1x16x128xbf16>
    %1 = vector.shape_cast %0 : vector<1x16x128xbf16> to vector<16x128xbf16>
    %2 = arith.extf %1 : vector<16x128xbf16> to vector<16x128xf32>
    %c0_2 = arith.constant 0 : index
    %c0_3 = arith.constant 0 : index
    %3 = vector.load %arg3[%c0_2, %c0_3] : memref<1x128xf32, #tpu.memory_space<vmem>>, vector<1x128xf32>
    %4 = vector.shape_cast %3 : vector<1x128xf32> to vector<128xf32>
    %c0_4 = arith.constant 0 : index
    %c0_5 = arith.constant 0 : index
    %5 = vector.load %arg4[%c0_4, %c0_5] : memref<1x128xf32, #tpu.memory_space<vmem>>, vector<1x128xf32>
    %6 = vector.shape_cast %5 : vector<1x128xf32> to vector<128xf32>
    %cst = arith.constant dense<0.000000e+00> : vector<16xf32>
    %7 = vector.multi_reduction <add>, %2, %cst [1] : vector<16x128xf32> to vector<16xf32>
    %8 = vector.shape_cast %7 : vector<16xf32> to vector<16x1xf32>
    %cst_6 = arith.constant 1.280000e+02 : f32
    %9 = vector.broadcast %cst_6 : f32 to vector<16x1xf32>
    %10 = arith.divf %8, %9 : vector<16x1xf32>
    %11 = vector.broadcast %10 : vector<16x1xf32> to vector<16x128xf32>
    %12 = arith.subf %2, %11 : vector<16x128xf32>
    %13 = arith.mulf %12, %12 : vector<16x128xf32>
    %cst_7 = arith.constant dense<0.000000e+00> : vector<16xf32>
    %14 = vector.multi_reduction <add>, %13, %cst_7 [1] : vector<16x128xf32> to vector<16xf32>
    %15 = vector.shape_cast %14 : vector<16xf32> to vector<16x1xf32>
    %cst_8 = arith.constant 1.280000e+02 : f32
    %16 = vector.broadcast %cst_8 : f32 to vector<16x1xf32>
    %17 = arith.divf %15, %16 : vector<16x1xf32>
    %18 = vector.broadcast %10 : vector<16x1xf32> to vector<16x128xf32>
    %19 = arith.subf %2, %18 : vector<16x128xf32>
    %cst_9 = arith.constant 9.99999997E-7 : f32
    %20 = vector.broadcast %cst_9 : f32 to vector<16x1xf32>
    %21 = arith.addf %17, %20 : vector<16x1xf32>
    %22 = math.rsqrt %21 : vector<16x1xf32>
    %23 = vector.broadcast %22 : vector<16x1xf32> to vector<16x128xf32>
    %24 = arith.mulf %19, %23 : vector<16x128xf32>
    %25 = vector.shape_cast %4 : vector<128xf32> to vector<1x128xf32>
    %26 = vector.broadcast %25 : vector<1x128xf32> to vector<16x128xf32>
    %27 = arith.mulf %24, %26 : vector<16x128xf32>
    %28 = vector.shape_cast %6 : vector<128xf32> to vector<1x128xf32>
    %29 = vector.broadcast %28 : vector<1x128xf32> to vector<16x128xf32>
    %30 = arith.addf %27, %29 : vector<16x128xf32>
    %31 = arith.truncf %30 : vector<16x128xf32> to vector<16x128xbf16>
    %c0_10 = arith.constant 0 : index
    %c0_11 = arith.constant 0 : index
    %32 = vector.load %arg5[%c0_10, %c0_11] : memref<128x256xbf16, #tpu.memory_space<vmem>>, vector<128x256xbf16>
    %cst_12 = arith.constant dense<0.000000e+00> : vector<16x256xf32>
    %33 = tpu.matmul %31, %32, %cst_12 {dimension_numbers = #tpu.dot_dimension_numbers<[1], [0], [0], [1], [0, 0, 1, 1], [], []>} : vector<16x128xbf16>, vector<128x256xbf16>, vector<16x256xf32> -> vector<16x256xf32>
    %c0_13 = arith.constant 0 : index
    %c0_14 = arith.constant 0 : index
    %34 = vector.load %arg6[%c0_13, %c0_14] : memref<1x256xf32, #tpu.memory_space<vmem>>, vector<1x256xf32>
    %35 = vector.shape_cast %34 : vector<1x256xf32> to vector<256xf32>
    %36 = vector.shape_cast %35 : vector<256xf32> to vector<1x256xf32>
    %37 = vector.broadcast %36 : vector<1x256xf32> to vector<16x256xf32>
    %38 = arith.addf %33, %37 : vector<16x256xf32>
    %cst_15 = arith.constant 0.636619746 : f32
    %39 = math.sqrt %cst_15 : f32
    %cst_16 = arith.constant 5.000000e-01 : f32
    %40 = vector.broadcast %cst_16 : f32 to vector<16x256xf32>
    %41 = arith.mulf %40, %38 : vector<16x256xf32>
    %cst_17 = arith.constant 4.471500e-02 : f32
    %42 = vector.broadcast %cst_17 : f32 to vector<16x256xf32>
    %43 = arith.mulf %42, %38 : vector<16x256xf32>
    %44 = arith.mulf %43, %38 : vector<16x256xf32>
    %45 = arith.mulf %44, %38 : vector<16x256xf32>
    %46 = arith.addf %38, %45 : vector<16x256xf32>
    %47 = vector.broadcast %39 : f32 to vector<16x256xf32>
    %48 = arith.mulf %47, %46 : vector<16x256xf32>
    %49 = math.tanh %48 : vector<16x256xf32>
    %cst_18 = arith.constant 1.000000e+00 : f32
    %50 = vector.broadcast %cst_18 : f32 to vector<16x256xf32>
    %51 = arith.addf %50, %49 : vector<16x256xf32>
    %52 = arith.mulf %41, %51 : vector<16x256xf32>
    %53 = arith.truncf %52 : vector<16x256xf32> to vector<16x256xbf16>
    %c0_19 = arith.constant 0 : index
    %c0_20 = arith.constant 0 : index
    %54 = vector.load %arg7[%c0_19, %c0_20] : memref<256x128xbf16, #tpu.memory_space<vmem>>, vector<256x128xbf16>
    %cst_21 = arith.constant dense<0.000000e+00> : vector<16x128xf32>
    %55 = tpu.matmul %53, %54, %cst_21 {dimension_numbers = #tpu.dot_dimension_numbers<[1], [0], [0], [1], [0, 0, 1, 1], [], []>} : vector<16x256xbf16>, vector<256x128xbf16>, vector<16x128xf32> -> vector<16x128xf32>
    %c0_22 = arith.constant 0 : index
    %c0_23 = arith.constant 0 : index
    %56 = vector.load %arg8[%c0_22, %c0_23] : memref<1x128xf32, #tpu.memory_space<vmem>>, vector<1x128xf32>
    %57 = vector.shape_cast %56 : vector<1x128xf32> to vector<128xf32>
    %58 = vector.shape_cast %57 : vector<128xf32> to vector<1x128xf32>
    %59 = vector.broadcast %58 : vector<1x128xf32> to vector<16x128xf32>
    %60 = arith.addf %55, %59 : vector<16x128xf32>
    %61 = arith.addf %2, %60 : vector<16x128xf32>
    %c0_24 = arith.constant 0 : index
    %c0_25 = arith.constant 0 : index
    %62 = vector.load %arg9[%c0_24, %c0_25] : memref<1x128xf32, #tpu.memory_space<vmem>>, vector<1x128xf32>
    %63 = vector.shape_cast %62 : vector<1x128xf32> to vector<128xf32>
    %c0_26 = arith.constant 0 : index
    %c0_27 = arith.constant 0 : index
    %64 = vector.load %arg10[%c0_26, %c0_27] : memref<1x128xf32, #tpu.memory_space<vmem>>, vector<1x128xf32>
    %65 = vector.shape_cast %64 : vector<1x128xf32> to vector<128xf32>
    %cst_28 = arith.constant dense<0.000000e+00> : vector<16xf32>
    %66 = vector.multi_reduction <add>, %61, %cst_28 [1] : vector<16x128xf32> to vector<16xf32>
    %67 = vector.shape_cast %66 : vector<16xf32> to vector<16x1xf32>
    %cst_29 = arith.constant 1.280000e+02 : f32
    %68 = vector.broadcast %cst_29 : f32 to vector<16x1xf32>
    %69 = arith.divf %67, %68 : vector<16x1xf32>
    %70 = vector.broadcast %69 : vector<16x1xf32> to vector<16x128xf32>
    %71 = arith.subf %61, %70 : vector<16x128xf32>
    %72 = arith.mulf %71, %71 : vector<16x128xf32>
    %cst_30 = arith.constant dense<0.000000e+00> : vector<16xf32>
    %73 = vector.multi_reduction <add>, %72, %cst_30 [1] : vector<16x128xf32> to vector<16xf32>
    %74 = vector.shape_cast %73 : vector<16xf32> to vector<16x1xf32>
    %cst_31 = arith.constant 1.280000e+02 : f32
    %75 = vector.broadcast %cst_31 : f32 to vector<16x1xf32>
    %76 = arith.divf %74, %75 : vector<16x1xf32>
    %77 = vector.broadcast %69 : vector<16x1xf32> to vector<16x128xf32>
    %78 = arith.subf %61, %77 : vector<16x128xf32>
    %cst_32 = arith.constant 9.99999997E-7 : f32
    %79 = vector.broadcast %cst_32 : f32 to vector<16x1xf32>
    %80 = arith.addf %76, %79 : vector<16x1xf32>
    %81 = math.rsqrt %80 : vector<16x1xf32>
    %82 = vector.broadcast %81 : vector<16x1xf32> to vector<16x128xf32>
    %83 = arith.mulf %78, %82 : vector<16x128xf32>
    %84 = vector.shape_cast %63 : vector<128xf32> to vector<1x128xf32>
    %85 = vector.broadcast %84 : vector<1x128xf32> to vector<16x128xf32>
    %86 = arith.mulf %83, %85 : vector<16x128xf32>
    %87 = vector.shape_cast %65 : vector<128xf32> to vector<1x128xf32>
    %88 = vector.broadcast %87 : vector<1x128xf32> to vector<16x128xf32>
    %89 = arith.addf %86, %88 : vector<16x128xf32>
    %c0_33 = arith.constant 0 : index
    %c0_34 = arith.constant 0 : index
    %c0_35 = arith.constant 0 : index
    %90 = vector.load %arg11[%c0_33, %c0_34, %c0_35] : memref<1x16x128xf32, #tpu.memory_space<vmem>>, vector<1x16x128xf32>
    %91 = vector.shape_cast %90 : vector<1x16x128xf32> to vector<16x128xf32>
    %92 = vector.shape_cast %89 : vector<16x128xf32> to vector<1x16x128xf32>
    tpu.vector_store %arg11[%c0_33, %c0_34, %c0_35], %92 {strides = array<i32>} : memref<1x16x128xf32, #tpu.memory_space<vmem>>, vector<1x16x128xf32>,
    return
  }
  func.func @transform_0(%arg0: i32, %arg1: i32) -> (i32, i32, i32) {
    %c0_i32 = arith.constant 0 : i32
    %c0_i32_0 = arith.constant 0 : i32
    return %arg0, %arg1, %c0_i32 : i32, i32, i32
  }
  func.func @transform_1(%arg0: i32, %arg1: i32) -> (i32, i32) {
    %c0_i32 = arith.constant 0 : i32
    %c0_i32_0 = arith.constant 0 : i32
    %c0_i32_1 = arith.constant 0 : i32
    return %c0_i32, %c0_i32_0 : i32, i32
  }
  func.func @transform_2(%arg0: i32, %arg1: i32) -> (i32, i32) {
    %c0_i32 = arith.constant 0 : i32
    %c0_i32_0 = arith.constant 0 : i32
    %c0_i32_1 = arith.constant 0 : i32
    return %c0_i32, %c0_i32_0 : i32, i32
  }
  func.func @transform_3(%arg0: i32, %arg1: i32) -> (i32, i32) {
    %c0_i32 = arith.constant 0 : i32
    %c0_i32_0 = arith.constant 0 : i32
    %c0_i32_1 = arith.constant 0 : i32
    return %c0_i32, %c0_i32_0 : i32, i32
  }
  func.func @transform_4(%arg0: i32, %arg1: i32) -> (i32, i32) {
    %c0_i32 = arith.constant 0 : i32
    %c0_i32_0 = arith.constant 0 : i32
    %c0_i32_1 = arith.constant 0 : i32
    return %c0_i32, %c0_i32_0 : i32, i32
  }
  func.func @transform_5(%arg0: i32, %arg1: i32) -> (i32, i32) {
    %c0_i32 = arith.constant 0 : i32
    %c0_i32_0 = arith.constant 0 : i32
    %c0_i32_1 = arith.constant 0 : i32
    return %c0_i32, %c0_i32_0 : i32, i32
  }
  func.func @transform_6(%arg0: i32, %arg1: i32) -> (i32, i32) {
    %c0_i32 = arith.constant 0 : i32
    %c0_i32_0 = arith.constant 0 : i32
    %c0_i32_1 = arith.constant 0 : i32
    return %c0_i32, %c0_i32_0 : i32, i32
  }
  func.func @transform_7(%arg0: i32, %arg1: i32) -> (i32, i32) {
    %c0_i32 = arith.constant 0 : i32
    %c0_i32_0 = arith.constant 0 : i32
    %c0_i32_1 = arith.constant 0 : i32
    return %c0_i32, %c0_i32_0 : i32, i32
  }
  func.func @transform_8(%arg0: i32, %arg1: i32) -> (i32, i32) {
    %c0_i32 = arith.constant 0 : i32
    %c0_i32_0 = arith.constant 0 : i32
    %c0_i32_1 = arith.constant 0 : i32
    return %c0_i32, %c0_i32_0 : i32, i32
  }
  func.func @transform_9(%arg0: i32, %arg1: i32) -> (i32, i32, i32) {
    %c0_i32 = arith.constant 0 : i32
    %c0_i32_0 = arith.constant 0 : i32
    return %arg0, %arg1, %c0_i32 : i32, i32, i32
  }
}

</mosaic_0001>

<llo_original>
// kernel: siglip_vision_forward.7
$region0: #{siglip_vision_forward.7}
  #allocation0 [shape = 'u32[]', space=smem, size = 0x4, offset = 0x4, fixed_abs, tag = 'smem constant byte address 0x4 - core index']
  #allocation1 [shape = 'u32[144,128]{1,0:T(1,128)}', space=vmem, size = 0x12000, scoped, tag = 'internal scratch']
  %s0 = inlined_call_operand.vmem [shape: bf16[2,16,48], index: 0, kind: input, shape index: {}]
  %s1 = inlined_call_operand.vmem [shape: bf16[48,128], index: 1, kind: input, shape index: {}]
  %s2 = inlined_call_operand.vmem [shape: f32[1,128], index: 2, kind: input, shape index: {}]
  %s3 = inlined_call_operand.vmem [shape: f32[16,128], index: 3, kind: input, shape index: {}]
  %s4 = inlined_call_operand.vmem [shape: bf16[2,16,128], index: 4, kind: output, shape index: {}]
  %s5 = sld [smem:[#allocation0]]
  $region49: #{siglip_vision_forward.7} parent=0
    _
  %s7 = ssub.s32 1, %s5
  %s8 = scalar_select 0, %s7, %s5
  loop: start=0, step=1, limit=4
  $region2: #{siglip_vision_forward.7} parent=0 // loop_pre_header
    _
  $region3: #{siglip_vision_forward.7} parent=0 // loop_header
    %s10 = sphi 0, %s14
    %p11 = scmp.ge.s32.totalorder %s10, 4
    %s17 = sphi 0, %s29
    %s18 = sphi 0, %s25
    %s19 = sphi 0, %s17
    %s20 = sphi 0, %s18
    %s21 = sphi 0, %s19
    %s22 = sphi 0, %s20
    %s34 = sphi 0, %s36
    %s37 = sphi 0, %s34
    %s38 = sphi 0, %s37
    %s54 = sphi 0, %s38
    %s58 = sphi 0, %s58
    %s60 = sphi 0, %s58
    %s61 = sphi 0, %s60
    %s75 = sphi 0, %s61
    %s79 = sphi 0, %s79
    %s81 = sphi 0, %s79
    %s82 = sphi 0, %s81
    %s96 = sphi 0, %s82
    %s102 = sphi 0, %s104
    %s105 = sphi 0, %s102
    %s106 = sphi 0, %s105
    %s122 = sphi 0, %s106
    %s130 = sphi 0, %s132
    %s133 = sphi 0, %s130
    %s134 = sphi 0, %s133
    %s150 = sphi 0, %s134
  $region4: #{siglip_vision_forward.7} parent=0 // loop_header_branch
    %13 = sbr.rel (%p11) target = $region8
  $region5: #{siglip_vision_forward.7} parent=0 // loop_body
    %s15 = ssub.s32 %s10, 1
    %s16 = ssub.s32 %s10, 2
    %s23 = sadd.s32 1, %s18
    %p24 = scmp.ge.s32.totalorder %s23, 1
    %s25 = scalar_select %p24, 0, %s23
    %s26 = sadd.s32 1, %s17
    %s27 = scalar_select %p24, %s26, %s17
    %p28 = scmp.ge.s32.totalorder %s27, 2
    %s29 = scalar_select %p28, 0, %s27
    %s30 = ssub.s32 %s17, %s29
    %s31 = ssub.s32 %s18, %s25
    %s32 = sor.u32 %s30, %s31
    %p33 = scmp.eq.s32.totalorder %s32, 0
    %s35 = sadd.s32 %s34, 1
    %s36 = scalar_select %p33, %s34, %s35
    %p39 = pneg %p33
    %p40 = scmp.eq.s32.totalorder %s10, 1
    %p41 = por %p39, %p40
    %p42 = scmp.ne.s32.totalorder %s34, %s37
    %p43 = scmp.eq.s32.totalorder %s10, 0
    %p44 = por %p42, %p43
    %p45 = scmp.ne.s32.totalorder %s34, %s37
    %p46 = scmp.eq.s32.totalorder %s15, 1
    %p47 = por %p45, %p46
    %p48 = scmp.ne.s32.totalorder %s37, %s38
    %p49 = scmp.eq.s32.totalorder %s15, 0
    %p50 = por %p48, %p49
    %p51 = scmp.ne.s32.totalorder %s37, %s38
    %p52 = scmp.eq.s32.totalorder %s16, 1
    %p53 = por %p51, %p52
    %p55 = scmp.ne.s32.totalorder %s38, %s54
    %p56 = scmp.eq.s32.totalorder %s16, 0
    %p57 = por %p55, %p56
    %s59 = sadd.s32 %s58, 1
    %p62 = scmp.eq.s32.totalorder %s10, 1
    %p63 = scmp.ne.s32.totalorder %s58, %s60
    %p64 = scmp.eq.s32.totalorder %s10, 0
    %p65 = por %p63, %p64
    %p66 = scmp.ne.s32.totalorder %s58, %s60
    %p67 = scmp.eq.s32.totalorder %s15, 1
    %p68 = por %p66, %p67
    %p69 = scmp.ne.s32.totalorder %s60, %s61
    %p70 = scmp.eq.s32.totalorder %s15, 0
    %p71 = por %p69, %p70
    %p72 = scmp.ne.s32.totalorder %s60, %s61
    %p73 = scmp.eq.s32.totalorder %s16, 1
    %p74 = por %p72, %p73
    %p76 = scmp.ne.s32.totalorder %s61, %s75
    %p77 = scmp.eq.s32.totalorder %s16, 0
    %p78 = por %p76, %p77
    %s80 = sadd.s32 %s79, 1
    %p83 = scmp.eq.s32.totalorder %s10, 1
    %p84 = scmp.ne.s32.totalorder %s79, %s81
    %p85 = scmp.eq.s32.totalorder %s10, 0
    %p86 = por %p84, %p85
    %p87 = scmp.ne.s32.totalorder %s79, %s81
    %p88 = scmp.eq.s32.totalorder %s15, 1
    %p89 = por %p87, %p88
    %p90 = scmp.ne.s32.totalorder %s81, %s82
    %p91 = scmp.eq.s32.totalorder %s15, 0
    %p92 = por %p90, %p91
    %p93 = scmp.ne.s32.totalorder %s81, %s82
    %p94 = scmp.eq.s32.totalorder %s16, 1
    %p95 = por %p93, %p94
    %p97 = scmp.ne.s32.totalorder %s82, %s96
    %p98 = scmp.eq.s32.totalorder %s16, 0
    %p99 = por %p97, %p98
    %s100 = ssub.s32 %s18, %s25
    %p101 = scmp.eq.s32.totalorder %s100, 0
    %s103 = sadd.s32 %s102, 1
    %s104 = scalar_select %p101, %s102, %s103
    %p107 = pneg %p101
    %p108 = scmp.eq.s32.totalorder %s10, 1
    %p109 = por %p107, %p108
    %p110 = scmp.ne.s32.totalorder %s102, %s105
    %p111 = scmp.eq.s32.totalorder %s10, 0
    %p112 = por %p110, %p111
    %p113 = scmp.ne.s32.totalorder %s102, %s105
    %p114 = scmp.eq.s32.totalorder %s15, 1
    %p115 = por %p113, %p114
    %p116 = scmp.ne.s32.totalorder %s105, %s106
    %p117 = scmp.eq.s32.totalorder %s15, 0
    %p118 = por %p116, %p117
    %p119 = scmp.ne.s32.totalorder %s105, %s106
    %p120 = scmp.eq.s32.totalorder %s16, 1
    %p121 = por %p119, %p120
    %p123 = scmp.ne.s32.totalorder %s106, %s122
    %p124 = scmp.eq.s32.totalorder %s16, 0
    %p125 = por %p123, %p124
    %s126 = ssub.s32 %s17, %s29
    %s127 = ssub.s32 %s18, %s25
    %s128 = sor.u32 %s126, %s127
    %p129 = scmp.eq.s32.totalorder %s128, 0
    %s131 = sadd.s32 %s130, 1
    %s132 = scalar_select %p129, %s130, %s131
    %p135 = pneg %p129
    %p136 = scmp.eq.s32.totalorder %s10, 1
    %p137 = por %p135, %p136
    %p138 = scmp.ne.s32.totalorder %s130, %s133
    %p139 = scmp.eq.s32.totalorder %s10, 0
    %p140 = por %p138, %p139
    %p141 = scmp.ne.s32.totalorder %s130, %s133
    %p142 = scmp.eq.s32.totalorder %s15, 1
    %p143 = por %p141, %p142
    %p144 = scmp.ne.s32.totalorder %s133, %s134
    %p145 = scmp.eq.s32.totalorder %s15, 0
    %p146 = por %p144, %p145
    %p147 = scmp.ne.s32.totalorder %s133, %s134
    %p148 = scmp.eq.s32.totalorder %s16, 1
    %p149 = por %p147, %p148
    %p151 = scmp.ne.s32.totalorder %s134, %s150
    %p152 = scmp.eq.s32.totalorder %s16, 0
    %p153 = por %p151, %p152
    %p154 = scmp.le.s32.totalorder 1, %s10
    %p155 = scmp.lt.s32.totalorder %s10, 3
    %p156 = pnand %p154, %p155
    %p157 = pneg %p156
    // Predicated region
    $region9: #{siglip_vision_forward.7} parent=5 // pred_check
      _
    $region10: #{siglip_vision_forward.7} parent=5 // pred_check_branch
      %159 = sbr.rel (%p156) target = $region12
    $region11: #{siglip_vision_forward.7} parent=5 // pred_region
      %s160 = ssub.s32 %s10, 1
      // Predicated region
      $region13: #{siglip_vision_forward.7} parent=11 // pred_check
        %p161 = pneg %p71
      $region14: #{siglip_vision_forward.7} parent=11 // pred_check_branch
        %163 = sbr.rel (%p161) target = $region16
      $region15: #{siglip_vision_forward.7} parent=11 // pred_region
        _
      $region16: #{siglip_vision_forward.7} parent=11 // pred_fallthru
        _
      // Predicated region
      $region17: #{siglip_vision_forward.7} parent=11 // pred_check
        %p164 = pneg %p92
      $region18: #{siglip_vision_forward.7} parent=11 // pred_check_branch
        %166 = sbr.rel (%p164) target = $region20
      $region19: #{siglip_vision_forward.7} parent=11 // pred_region
        _
      $region20: #{siglip_vision_forward.7} parent=11 // pred_fallthru
        _
      // Predicated region
      $region21: #{siglip_vision_forward.7} parent=11 // pred_check
        %p167 = pneg %p118
      $region22: #{siglip_vision_forward.7} parent=11 // pred_check_branch
        %169 = sbr.rel (%p167) target = $region24
      $region23: #{siglip_vision_forward.7} parent=11 // pred_region
        %s170 = smul.u32 2, %s20
        %p171 = scmp.lt.s32.totalorder %s170, 1
        %s172 = scalar_select %p171, %s170, 1
        %s173 = smul.addr %s172, 8
        %s174 = scalar_lea.vmem %s3, %s173
        %s175 = smul.u32 2, %s20
      $region24: #{siglip_vision_forward.7} parent=11 // pred_fallthru
        _
    $region12: #{siglip_vision_forward.7} parent=5 // pred_fallthru
      _
    %p176 = scmp.lt.s32.totalorder %s10, 2
    // Predicated region
    $region25: #{siglip_vision_forward.7} parent=5 // pred_check
      %p177 = pneg %p176
    $region26: #{siglip_vision_forward.7} parent=5 // pred_check_branch
      %179 = sbr.rel (%p177) target = $region28
    $region27: #{siglip_vision_forward.7} parent=5 // pred_region
      // Predicated region
      $region29: #{siglip_vision_forward.7} parent=27 // pred_check
        %p180 = pneg %p44
      $region30: #{siglip_vision_forward.7} parent=27 // pred_check_branch
        %182 = sbr.rel (%p180) target = $region32
      $region31: #{siglip_vision_forward.7} parent=27 // pred_region
        %s183 = smul.u32 2, %s18
        %p184 = scmp.lt.s32.totalorder %s17, 1
        %s185 = scalar_select %p184, %s17, 1
        %p186 = scmp.lt.s32.totalorder %s183, 1
        %s187 = scalar_select %p186, %s183, 1
        %s188 = smul.addr %s185, 2
        %s189 = sadd.s32 %s187, %s188
        %s190 = smul.addr %s189, 4
        %s191 = scalar_lea.vmem %s0, %s190
        %s192 = smul.u32 2, %s18
      $region32: #{siglip_vision_forward.7} parent=27 // pred_fallthru
        _
    $region28: #{siglip_vision_forward.7} parent=5 // pred_fallthru
      _
    %p193 = scmp.le.s32.totalorder 1, %s10
    %p194 = scmp.lt.s32.totalorder %s10, 3
    %p195 = pnand %p193, %p194
    %p196 = pneg %p195
    // Predicated region
    $region33: #{siglip_vision_forward.7} parent=5 // pred_check
      _
    $region34: #{siglip_vision_forward.7} parent=5 // pred_check_branch
      %198 = sbr.rel (%p195) target = $region36
    $region35: #{siglip_vision_forward.7} parent=5 // pred_region
      %s199 = ssub.s32 %s10, 1
      %s200 = smul.u32 2, %s20
      %p201 = scmp.lt.s32.totalorder %s19, 1
      %s202 = scalar_select %p201, %s19, 1
      %p203 = scmp.lt.s32.totalorder %s200, 1
      %s204 = scalar_select %p203, %s200, 1
      %s205 = smul.addr %s202, 2
      %s206 = sadd.s32 %s204, %s205
      %s207 = smul.addr %s206, 4
      %s208 = scalar_lea.vmem %s0, %s207
      %p209 = pneg %p50
      %p210 = pneg %p47
      %p211 = pneg %p71
      %p212 = pneg %p68
      %p213 = pneg %p92
      %p214 = pneg %p89
      %s215 = smul.u32 2, %s20
      %p216 = scmp.lt.s32.totalorder %s215, 1
      %s217 = scalar_select %p216, %s215, 1
      %s218 = smul.addr %s217, 8
      %s219 = scalar_lea.vmem %s3, %s218
      %p220 = pneg %p118
      %p221 = pneg %p115
      %p222 = pneg %p146
      %p223 = pneg %p143
      %s224 = smul.u32 2, %s20
      %p225 = scmp.lt.s32.totalorder %s19, 1
      %s226 = scalar_select %p225, %s19, 1
      %p227 = scmp.lt.s32.totalorder %s224, 1
      %s228 = scalar_select %p227, %s224, 1
      %s229 = smul.addr %s226, 2
      %s230 = sadd.s32 %s228, %s229
      %s231 = smul.addr %s230, 4
      %s232 = scalar_lea.vmem %s4, %s231
      %s233 = smul.u32 2, %s20
      %p234 = scmp.lt.s32.totalorder %s19, 1
      %s235 = scalar_select %p234, %s19, 1
      %p236 = scmp.lt.s32.totalorder %s233, 1
      %s237 = scalar_select %p236, %s233, 1
      %s238 = smul.addr %s235, 2
      %s239 = sadd.s32 %s237, %s238
      %s240 = smul.addr %s239, 4
      %s241 = scalar_lea.vmem %s0, %s240
      %s242 = smul.u32 2, %s20
      %s243 = smul.u32 2, %s20
      %p244 = scmp.lt.s32.totalorder %s243, 1
      %s245 = scalar_select %p244, %s243, 1
      %s246 = smul.addr %s245, 8
      %s247 = scalar_lea.vmem %s3, %s246
      %s248 = smul.u32 2, %s20
      %s249 = smul.u32 2, %s20
      %p250 = scmp.lt.s32.totalorder %s19, 1
      %s251 = scalar_select %p250, %s19, 1
      %p252 = scmp.lt.s32.totalorder %s249, 1
      %s253 = scalar_select %p252, %s249, 1
      %s254 = smul.addr %s251, 2
      %s255 = sadd.s32 %s253, %s254
      %s256 = smul.addr %s255, 4
      %s257 = scalar_lea.vmem %s4, %s256
      %s258 = smul.u32 2, %s20
      %v260 = vld [vmem:[%s241] sm:$0xf]
      %v261 = vld [vmem:[%s241 + $0x4] sm:$0xf]
      %v262 = vld [vmem:[%s1] sm:$0xf]
      %v263 = vld [vmem:[%s1 + $0x4] sm:$0xf]
      %v264 = vld [vmem:[%s1 + $0x8] sm:$0xf]
      %v265 = vld [vmem:[%s1 + $0xc] sm:$0xf]
      %v266 = vld [vmem:[%s1 + $0x10] sm:$0xf]
      %v267 = vld [vmem:[%s1 + $0x14] sm:$0xf]
      %v268 = vld [vmem:[%s2] sm:$0x1]
      %v270 = vlaneseq
      %v271 = vshrl.u32 %v270, 7
      %v272 = vsub.s32 0, %v271
      %v273 = vrot.slane %v268, %v272
      %v277 = vunpack.c.l.b16 %v260
      %v278 = vunpack.c.l.b16 %v261
      %v279 = vpack.c.b16 %v278, %v277
      %v286 = vunpack.c.l.b16 %v262
      %v287 = vunpack.c.l.b16 %v263
      %v288 = vunpack.c.l.b16 %v264
      %v289 = vunpack.c.l.b16 %v265
      %v290 = vunpack.c.l.b16 %v266
      %v291 = vunpack.c.l.b16 %v267
      %v292 = vpack.c.b16 %v287, %v286
      %v293 = vpack.c.b16 %v289, %v288
      %v294 = vpack.c.b16 %v291, %v290
      %vm298 = vcmask 392192
      %v300 = vsel %vm298, %v279, 0
      %302 = vmatprep.subr.bf16.mxu0 0
      %303 = vmatpush1.bf16.msra.mxu0 %v292
      %304 = vmatprep.subr.bf16.mxu0 0
      %305 = vmatpush1.bf16.msra.mxu0 %v293
      %306 = vmatprep.subr.bf16.mxu0 0
      %307 = vmatpush1.bf16.msra.mxu0 %v294
      %308 = vmatprep.subr.bf16.mxu0 0
      %309 = vmatpush1.bf16.msra.mxu0 0
      %310 = vmatprep.subr.bf16.mxu0 0
      %311 = vmatpush1.bf16.msra.mxu0 0
      %312 = vmatprep.subr.bf16.mxu0 0
      %313 = vmatpush1.bf16.msra.mxu0 0
      %314 = vmatprep.subr.bf16.mxu0 0
      %315 = vmatpush1.bf16.msra.mxu0 0
      %316 = vmatprep.subr.bf16.mxu0 0
      %317 = vmatpush1.bf16.msra.mxu0 0
      %318 = vmatprep.subr.bf16.mxu0 0
      %319 = vmatpush1.bf16.msra.mxu0 0
      %320 = vmatprep.subr.bf16.mxu0 0
      %321 = vmatpush1.bf16.msra.mxu0 0
      %322 = vmatprep.subr.bf16.mxu0 0
      %323 = vmatpush1.bf16.msra.mxu0 0
      %324 = vmatprep.subr.bf16.mxu0 0
      %325 = vmatpush1.bf16.msra.mxu0 0
      %326 = vmatprep.subr.bf16.mxu0 0
      %327 = vmatpush1.bf16.msra.mxu0 0
      %328 = vmatprep.subr.bf16.mxu0 0
      %329 = vmatpush1.bf16.msra.mxu0 0
      %330 = vmatprep.subr.bf16.mxu0 0
      %331 = vmatpush1.bf16.msra.mxu0 0
      %332 = vmatprep.subr.bf16.mxu0 0
      %333 = vmatpush1.bf16.msra.mxu0 0
      %334 = vmatprep.mubr.bf16.mxu0 0
      %335 = vmatmul.mubr.bf16.gmra.mrb[0].mxu0 %v300
      %v336 = vpop.f32.mrb[0].mxu0
      %v337 = vadd.f32 %v273, %v336
      %v338 = vpop.f32.mrb[0].mxu0
      %v339 = vpop.f32.mrb[0].mxu0
      %v340 = vadd.f32 %v273, %v339
      %v341 = vpop.f32.mrb[0].mxu0
      %342 = vdwg.mxu0
      %v343 = vld [vmem:[%s247] sm:$0xff]
      %v344 = vld [vmem:[%s247 + $0x8] sm:$0xff]
      %v345 = vadd.f32 %v337, %v343
      %v346 = vadd.f32 %v340, %v344
      %v347 = vpack.c.bf16 %v346, %v345
      %v349 = vunpack.c.l.b16 %v347
      %v350 = vunpack.c.h.b16 %v347
      %v351 = vpack.c.b16 %v349, %v349
      %v352 = vpack.c.b16 %v350, %v350
      %355 = vst [vmem:[%s257] sm:$0xf] %v351
      %356 = vst [vmem:[%s257 + $0x4] sm:$0xf] %v352
      %s357 = smul.u32 2, %s20
      %p358 = scmp.lt.s32.totalorder %s19, 1
      %s359 = scalar_select %p358, %s19, 1
      %p360 = scmp.lt.s32.totalorder %s357, 1
      %s361 = scalar_select %p360, %s357, 1
      %s362 = smul.addr %s359, 2
      %s363 = sadd.s32 %s361, %s362
      %s364 = smul.addr %s363, 4
      %s365 = scalar_lea.vmem %s4, %s364
      // Predicated region
      $region37: #{siglip_vision_forward.7} parent=35 // pred_check
        %p366 = pneg %p143
      $region38: #{siglip_vision_forward.7} parent=35 // pred_check_branch
        %368 = sbr.rel (%p366) target = $region40
      $region39: #{siglip_vision_forward.7} parent=35 // pred_region
        %s369 = smul.u32 2, %s20
      $region40: #{siglip_vision_forward.7} parent=35 // pred_fallthru
        _
    $region36: #{siglip_vision_forward.7} parent=5 // pred_fallthru
      _
    %p370 = scmp.le.s32.totalorder 2, %s10
    // Predicated region
    $region41: #{siglip_vision_forward.7} parent=5 // pred_check
      %p371 = pneg %p370
    $region42: #{siglip_vision_forward.7} parent=5 // pred_check_branch
      %373 = sbr.rel (%p371) target = $region44
    $region43: #{siglip_vision_forward.7} parent=5 // pred_region
      %s374 = ssub.s32 %s10, 2
      // Predicated region
      $region45: #{siglip_vision_forward.7} parent=43 // pred_check
        %p375 = pneg %p149
      $region46: #{siglip_vision_forward.7} parent=43 // pred_check_branch
        %377 = sbr.rel (%p375) target = $region48
      $region47: #{siglip_vision_forward.7} parent=43 // pred_region
        %s378 = smul.u32 2, %s22
        %p379 = scmp.lt.s32.totalorder %s21, 1
        %s380 = scalar_select %p379, %s21, 1
        %p381 = scmp.lt.s32.totalorder %s378, 1
        %s382 = scalar_select %p381, %s378, 1
        %s383 = smul.addr %s380, 2
        %s384 = sadd.s32 %s382, %s383
        %s385 = smul.addr %s384, 4
        %s386 = scalar_lea.vmem %s4, %s385
      $region48: #{siglip_vision_forward.7} parent=43 // pred_fallthru
        _
    $region44: #{siglip_vision_forward.7} parent=5 // pred_fallthru
      _
  $region6: #{siglip_vision_forward.7} parent=0 // loop_footer
    %s14 = sadd.s32 1, %s10
  $region7: #{siglip_vision_forward.7} parent=0 // loop_footer_branch
    %9 = sbr.rel target = $region3
  $region8: #{siglip_vision_forward.7} parent=0 // loop_exit
    _

// kernel: siglip_vision_forward.8
$region0: #{siglip_vision_forward.8}
  #allocation0 [shape = 'u32[]', space=smem, size = 0x4, offset = 0x4, fixed_abs, tag = 'smem constant byte address 0x4 - core index']
  #allocation1 [shape = 'u32[144,128]{1,0:T(1,128)}', space=vmem, size = 0x12000, scoped, tag = 'internal scratch']
  %s0 = inlined_call_operand.vmem [shape: bf16[2,16,128], index: 0, kind: input, shape index: {}]
  %s1 = inlined_call_operand.vmem [shape: f32[1,128], index: 1, kind: input, shape index: {}]
  %s2 = inlined_call_operand.vmem [shape: f32[1,128], index: 2, kind: input, shape index: {}]
  %s3 = inlined_call_operand.vmem [shape: bf16[128,384], index: 3, kind: input, shape index: {}]
  %s4 = inlined_call_operand.vmem [shape: f32[1,384], index: 4, kind: input, shape index: {}]
  %s5 = inlined_call_operand.vmem [shape: bf16[2,16,384], index: 5, kind: output, shape index: {}]
  %s6 = sld [smem:[#allocation0]]
  $region53: #{siglip_vision_forward.8} parent=0
    _
  %s8 = ssub.s32 1, %s6
  %s9 = scalar_select 0, %s8, %s6
  loop: start=0, step=1, limit=4
  $region2: #{siglip_vision_forward.8} parent=0 // loop_pre_header
    _
  $region3: #{siglip_vision_forward.8} parent=0 // loop_header
    %s11 = sphi 0, %s15
    %p12 = scmp.ge.s32.totalorder %s11, 4
    %s18 = sphi 0, %s30
    %s19 = sphi 0, %s26
    %s20 = sphi 0, %s18
    %s21 = sphi 0, %s19
    %s22 = sphi 0, %s20
    %s23 = sphi 0, %s21
    %s35 = sphi 0, %s37
    %s38 = sphi 0, %s35
    %s39 = sphi 0, %s38
    %s55 = sphi 0, %s39
    %s59 = sphi 0, %s59
    %s61 = sphi 0, %s59
    %s62 = sphi 0, %s61
    %s76 = sphi 0, %s62
    %s80 = sphi 0, %s80
    %s82 = sphi 0, %s80
    %s83 = sphi 0, %s82
    %s97 = sphi 0, %s83
    %s101 = sphi 0, %s101
    %s103 = sphi 0, %s101
    %s104 = sphi 0, %s103
    %s118 = sphi 0, %s104
    %s122 = sphi 0, %s122
    %s124 = sphi 0, %s122
    %s125 = sphi 0, %s124
    %s139 = sphi 0, %s125
    %s147 = sphi 0, %s149
    %s150 = sphi 0, %s147
    %s151 = sphi 0, %s150
    %s167 = sphi 0, %s151
  $region4: #{siglip_vision_forward.8} parent=0 // loop_header_branch
    %14 = sbr.rel (%p12) target = $region8
  $region5: #{siglip_vision_forward.8} parent=0 // loop_body
    %s16 = ssub.s32 %s11, 1
    %s17 = ssub.s32 %s11, 2
    %s24 = sadd.s32 1, %s19
    %p25 = scmp.ge.s32.totalorder %s24, 1
    %s26 = scalar_select %p25, 0, %s24
    %s27 = sadd.s32 1, %s18
    %s28 = scalar_select %p25, %s27, %s18
    %p29 = scmp.ge.s32.totalorder %s28, 2
    %s30 = scalar_select %p29, 0, %s28
    %s31 = ssub.s32 %s18, %s30
    %s32 = ssub.s32 %s19, %s26
    %s33 = sor.u32 %s31, %s32
    %p34 = scmp.eq.s32.totalorder %s33, 0
    %s36 = sadd.s32 %s35, 1
    %s37 = scalar_select %p34, %s35, %s36
    %p40 = pneg %p34
    %p41 = scmp.eq.s32.totalorder %s11, 1
    %p42 = por %p40, %p41
    %p43 = scmp.ne.s32.totalorder %s35, %s38
    %p44 = scmp.eq.s32.totalorder %s11, 0
    %p45 = por %p43, %p44
    %p46 = scmp.ne.s32.totalorder %s35, %s38
    %p47 = scmp.eq.s32.totalorder %s16, 1
    %p48 = por %p46, %p47
    %p49 = scmp.ne.s32.totalorder %s38, %s39
    %p50 = scmp.eq.s32.totalorder %s16, 0
    %p51 = por %p49, %p50
    %p52 = scmp.ne.s32.totalorder %s38, %s39
    %p53 = scmp.eq.s32.totalorder %s17, 1
    %p54 = por %p52, %p53
    %p56 = scmp.ne.s32.totalorder %s39, %s55
    %p57 = scmp.eq.s32.totalorder %s17, 0
    %p58 = por %p56, %p57
    %s60 = sadd.s32 %s59, 1
    %p63 = scmp.eq.s32.totalorder %s11, 1
    %p64 = scmp.ne.s32.totalorder %s59, %s61
    %p65 = scmp.eq.s32.totalorder %s11, 0
    %p66 = por %p64, %p65
    %p67 = scmp.ne.s32.totalorder %s59, %s61
    %p68 = scmp.eq.s32.totalorder %s16, 1
    %p69 = por %p67, %p68
    %p70 = scmp.ne.s32.totalorder %s61, %s62
    %p71 = scmp.eq.s32.totalorder %s16, 0
    %p72 = por %p70, %p71
    %p73 = scmp.ne.s32.totalorder %s61, %s62
    %p74 = scmp.eq.s32.totalorder %s17, 1
    %p75 = por %p73, %p74
    %p77 = scmp.ne.s32.totalorder %s62, %s76
    %p78 = scmp.eq.s32.totalorder %s17, 0
    %p79 = por %p77, %p78
    %s81 = sadd.s32 %s80, 1
    %p84 = scmp.eq.s32.totalorder %s11, 1
    %p85 = scmp.ne.s32.totalorder %s80, %s82
    %p86 = scmp.eq.s32.totalorder %s11, 0
    %p87 = por %p85, %p86
    %p88 = scmp.ne.s32.totalorder %s80, %s82
    %p89 = scmp.eq.s32.totalorder %s16, 1
    %p90 = por %p88, %p89
    %p91 = scmp.ne.s32.totalorder %s82, %s83
    %p92 = scmp.eq.s32.totalorder %s16, 0
    %p93 = por %p91, %p92
    %p94 = scmp.ne.s32.totalorder %s82, %s83
    %p95 = scmp.eq.s32.totalorder %s17, 1
    %p96 = por %p94, %p95
    %p98 = scmp.ne.s32.totalorder %s83, %s97
    %p99 = scmp.eq.s32.totalorder %s17, 0
    %p100 = por %p98, %p99
    %s102 = sadd.s32 %s101, 1
    %p105 = scmp.eq.s32.totalorder %s11, 1
    %p106 = scmp.ne.s32.totalorder %s101, %s103
    %p107 = scmp.eq.s32.totalorder %s11, 0
    %p108 = por %p106, %p107
    %p109 = scmp.ne.s32.totalorder %s101, %s103
    %p110 = scmp.eq.s32.totalorder %s16, 1
    %p111 = por %p109, %p110
    %p112 = scmp.ne.s32.totalorder %s103, %s104
    %p113 = scmp.eq.s32.totalorder %s16, 0
    %p114 = por %p112, %p113
    %p115 = scmp.ne.s32.totalorder %s103, %s104
    %p116 = scmp.eq.s32.totalorder %s17, 1
    %p117 = por %p115, %p116
    %p119 = scmp.ne.s32.totalorder %s104, %s118
    %p120 = scmp.eq.s32.totalorder %s17, 0
    %p121 = por %p119, %p120
    %s123 = sadd.s32 %s122, 1
    %p126 = scmp.eq.s32.totalorder %s11, 1
    %p127 = scmp.ne.s32.totalorder %s122, %s124
    %p128 = scmp.eq.s32.totalorder %s11, 0
    %p129 = por %p127, %p128
    %p130 = scmp.ne.s32.totalorder %s122, %s124
    %p131 = scmp.eq.s32.totalorder %s16, 1
    %p132 = por %p130, %p131
    %p133 = scmp.ne.s32.totalorder %s124, %s125
    %p134 = scmp.eq.s32.totalorder %s16, 0
    %p135 = por %p133, %p134
    %p136 = scmp.ne.s32.totalorder %s124, %s125
    %p137 = scmp.eq.s32.totalorder %s17, 1
    %p138 = por %p136, %p137
    %p140 = scmp.ne.s32.totalorder %s125, %s139
    %p141 = scmp.eq.s32.totalorder %s17, 0
    %p142 = por %p140, %p141
    %s143 = ssub.s32 %s18, %s30
    %s144 = ssub.s32 %s19, %s26
    %s145 = sor.u32 %s143, %s144
    %p146 = scmp.eq.s32.totalorder %s145, 0
    %s148 = sadd.s32 %s147, 1
    %s149 = scalar_select %p146, %s147, %s148
    %p152 = pneg %p146
    %p153 = scmp.eq.s32.totalorder %s11, 1
    %p154 = por %p152, %p153
    %p155 = scmp.ne.s32.totalorder %s147, %s150
    %p156 = scmp.eq.s32.totalorder %s11, 0
    %p157 = por %p155, %p156
    %p158 = scmp.ne.s32.totalorder %s147, %s150
    %p159 = scmp.eq.s32.totalorder %s16, 1
    %p160 = por %p158, %p159
    %p161 = scmp.ne.s32.totalorder %s150, %s151
    %p162 = scmp.eq.s32.totalorder %s16, 0
    %p163 = por %p161, %p162
    %p164 = scmp.ne.s32.totalorder %s150, %s151
    %p165 = scmp.eq.s32.totalorder %s17, 1
    %p166 = por %p164, %p165
    %p168 = scmp.ne.s32.totalorder %s151, %s167
    %p169 = scmp.eq.s32.totalorder %s17, 0
    %p170 = por %p168, %p169
    %p171 = scmp.le.s32.totalorder 1, %s11
    %p172 = scmp.lt.s32.totalorder %s11, 3
    %p173 = pnand %p171, %p172
    %p174 = pneg %p173
    // Predicated region
    $region9: #{siglip_vision_forward.8} parent=5 // pred_check
      _
    $region10: #{siglip_vision_forward.8} parent=5 // pred_check_branch
      %176 = sbr.rel (%p173) target = $region12
    $region11: #{siglip_vision_forward.8} parent=5 // pred_region
      %s177 = ssub.s32 %s11, 1
      // Predicated region
      $region13: #{siglip_vision_forward.8} parent=11 // pred_check
        %p178 = pneg %p72
      $region14: #{siglip_vision_forward.8} parent=11 // pred_check_branch
        %180 = sbr.rel (%p178) target = $region16
      $region15: #{siglip_vision_forward.8} parent=11 // pred_region
        _
      $region16: #{siglip_vision_forward.8} parent=11 // pred_fallthru
        _
      // Predicated region
      $region17: #{siglip_vision_forward.8} parent=11 // pred_check
        %p181 = pneg %p93
      $region18: #{siglip_vision_forward.8} parent=11 // pred_check_branch
        %183 = sbr.rel (%p181) target = $region20
      $region19: #{siglip_vision_forward.8} parent=11 // pred_region
        _
      $region20: #{siglip_vision_forward.8} parent=11 // pred_fallthru
        _
      // Predicated region
      $region21: #{siglip_vision_forward.8} parent=11 // pred_check
        %p184 = pneg %p114
      $region22: #{siglip_vision_forward.8} parent=11 // pred_check_branch
        %186 = sbr.rel (%p184) target = $region24
      $region23: #{siglip_vision_forward.8} parent=11 // pred_region
        _
      $region24: #{siglip_vision_forward.8} parent=11 // pred_fallthru
        _
      // Predicated region
      $region25: #{siglip_vision_forward.8} parent=11 // pred_check
        %p187 = pneg %p135
      $region26: #{siglip_vision_forward.8} parent=11 // pred_check_branch
        %189 = sbr.rel (%p187) target = $region28
      $region27: #{siglip_vision_forward.8} parent=11 // pred_region
        _
      $region28: #{siglip_vision_forward.8} parent=11 // pred_fallthru
        _
    $region12: #{siglip_vision_forward.8} parent=5 // pred_fallthru
      _
    %p190 = scmp.lt.s32.totalorder %s11, 2
    // Predicated region
    $region29: #{siglip_vision_forward.8} parent=5 // pred_check
      %p191 = pneg %p190
    $region30: #{siglip_vision_forward.8} parent=5 // pred_check_branch
      %193 = sbr.rel (%p191) target = $region32
    $region31: #{siglip_vision_forward.8} parent=5 // pred_region
      // Predicated region
      $region33: #{siglip_vision_forward.8} parent=31 // pred_check
        %p194 = pneg %p45
      $region34: #{siglip_vision_forward.8} parent=31 // pred_check_branch
        %196 = sbr.rel (%p194) target = $region36
      $region35: #{siglip_vision_forward.8} parent=31 // pred_region
        %s197 = smul.u32 2, %s19
        %p198 = scmp.lt.s32.totalorder %s18, 1
        %s199 = scalar_select %p198, %s18, 1
        %p200 = scmp.lt.s32.totalorder %s197, 1
        %s201 = scalar_select %p200, %s197, 1
        %s202 = smul.addr %s199, 2
        %s203 = sadd.s32 %s201, %s202
        %s204 = smul.addr %s203, 4
        %s205 = scalar_lea.vmem %s0, %s204
        %s206 = smul.u32 2, %s19
      $region36: #{siglip_vision_forward.8} parent=31 // pred_fallthru
        _
    $region32: #{siglip_vision_forward.8} parent=5 // pred_fallthru
      _
    %p207 = scmp.le.s32.totalorder 1, %s11
    %p208 = scmp.lt.s32.totalorder %s11, 3
    %p209 = pnand %p207, %p208
    %p210 = pneg %p209
    // Predicated region
    $region37: #{siglip_vision_forward.8} parent=5 // pred_check
      _
    $region38: #{siglip_vision_forward.8} parent=5 // pred_check_branch
      %212 = sbr.rel (%p209) target = $region40
    $region39: #{siglip_vision_forward.8} parent=5 // pred_region
      %s213 = ssub.s32 %s11, 1
      %s214 = smul.u32 2, %s21
      %p215 = scmp.lt.s32.totalorder %s20, 1
      %s216 = scalar_select %p215, %s20, 1
      %p217 = scmp.lt.s32.totalorder %s214, 1
      %s218 = scalar_select %p217, %s214, 1
      %s219 = smul.addr %s216, 2
      %s220 = sadd.s32 %s218, %s219
      %s221 = smul.addr %s220, 4
      %s222 = scalar_lea.vmem %s0, %s221
      %p223 = pneg %p51
      %p224 = pneg %p48
      %p225 = pneg %p72
      %p226 = pneg %p69
      %p227 = pneg %p93
      %p228 = pneg %p90
      %p229 = pneg %p114
      %p230 = pneg %p111
      %p231 = pneg %p135
      %p232 = pneg %p132
      %p233 = pneg %p163
      %p234 = pneg %p160
      %s235 = smul.u32 2, %s21
      %p236 = scmp.lt.s32.totalorder %s20, 1
      %s237 = scalar_select %p236, %s20, 1
      %p238 = scmp.lt.s32.totalorder %s235, 1
      %s239 = scalar_select %p238, %s235, 1
      %s240 = smul.addr %s239, 3
      %s241 = smul.addr %s237, 6
      %s242 = sadd.s32 %s240, %s241
      %s243 = smul.addr %s242, 4
      %s244 = scalar_lea.vmem %s5, %s243
      %s245 = smul.u32 2, %s21
      %p246 = scmp.lt.s32.totalorder %s20, 1
      %s247 = scalar_select %p246, %s20, 1
      %p248 = scmp.lt.s32.totalorder %s245, 1
      %s249 = scalar_select %p248, %s245, 1
      %s250 = smul.addr %s247, 2
      %s251 = sadd.s32 %s249, %s250
      %s252 = smul.addr %s251, 4
      %s253 = scalar_lea.vmem %s0, %s252
      %s254 = smul.u32 2, %s21
      %s255 = smul.u32 2, %s21
      %p256 = scmp.lt.s32.totalorder %s20, 1
      %s257 = scalar_select %p256, %s20, 1
      %p258 = scmp.lt.s32.totalorder %s255, 1
      %s259 = scalar_select %p258, %s255, 1
      %s260 = smul.addr %s259, 3
      %s261 = smul.addr %s257, 6
      %s262 = sadd.s32 %s260, %s261
      %s263 = smul.addr %s262, 4
      %s264 = scalar_lea.vmem %s5, %s263
      %s265 = smul.u32 2, %s21
      %v267 = vld [vmem:[%s253] sm:$0xf]
      %v268 = vld [vmem:[%s253 + $0x4] sm:$0xf]
      %v269 = vunpack.c.l.bf16 %v267
      %v270 = vunpack.c.l.bf16 %v268
      %v271 = vld [vmem:[%s1] sm:$0x1]
      %v272 = vld [vmem:[%s2] sm:$0x1]
      %273 = vadd.xlane.f32.xlu0 %v269
      %v274 = vpop.xlane.xlu0 %273
      %275 = vadd.xlane.f32.xlu0 %v270
      %v276 = vpop.xlane.xlu0 %275
      %v277 = vrcp.pop 128.0
      %v278 = vmul.f32 %v274, %v277
      %v279 = vmul.f32 %v276, %v277
      %v280 = vsub.f32 %v269, %v278
      %v281 = vsub.f32 %v270, %v279
      %v282 = vmul.f32 %v280, %v280
      %v283 = vmul.f32 %v281, %v281
      %284 = vadd.xlane.f32.xlu0 %v282
      %v285 = vpop.xlane.xlu0 %284
      %286 = vadd.xlane.f32.xlu0 %v283
      %v287 = vpop.xlane.xlu0 %286
      %v288 = vmul.f32 %v285, %v277
      %v289 = vmul.f32 %v287, %v277
      %v290 = vadd.f32 %v288, 1e-06
      %v291 = vadd.f32 %v289, 1e-06
      %v292 = vrsqrt.pop %v290
      %v293 = vrsqrt.pop %v291
      %v294 = vmul.f32 %v280, %v292
      %v295 = vmul.f32 %v281, %v293
      %v297 = vlaneseq
      %v298 = vshrl.u32 %v297, 7
      %v299 = vsub.s32 0, %v298
      %v300 = vrot.slane %v271, %v299
      %v302 = vmul.f32 %v294, %v300
      %v303 = vmul.f32 %v295, %v300
      %v305 = vlaneseq
      %v306 = vshrl.u32 %v305, 7
      %v307 = vsub.s32 0, %v306
      %v308 = vrot.slane %v272, %v307
      %v310 = vadd.f32 %v302, %v308
      %v311 = vadd.f32 %v303, %v308
      %v312 = vpack.c.bf16 %v311, %v310
      %v313 = vld [vmem:[%s3] sm:$0xff]
      %v314 = vld [vmem:[%s3 + $0x8] sm:$0xf]
      %v315 = vld [vmem:[%s3 + $0xc] sm:$0xff]
      %v316 = vld [vmem:[%s3 + $0x14] sm:$0xf]
      %v317 = vld [vmem:[%s3 + $0x18] sm:$0xff]
      %v318 = vld [vmem:[%s3 + $0x20] sm:$0xf]
      %v319 = vld [vmem:[%s3 + $0x24] sm:$0xff]
      %v320 = vld [vmem:[%s3 + $0x2c] sm:$0xf]
      %v321 = vld [vmem:[%s3 + $0x30] sm:$0xff]
      %v322 = vld [vmem:[%s3 + $0x38] sm:$0xf]
      %v323 = vld [vmem:[%s3 + $0x3c] sm:$0xff]
      %v324 = vld [vmem:[%s3 + $0x44] sm:$0xf]
      %v325 = vld [vmem:[%s3 + $0x48] sm:$0xff]
      %v326 = vld [vmem:[%s3 + $0x50] sm:$0xf]
      %v327 = vld [vmem:[%s3 + $0x54] sm:$0xff]
      %v328 = vld [vmem:[%s3 + $0x5c] sm:$0xf]
      %v329 = vld [vmem:[%s3 + $0x60] sm:$0xff]
      %v330 = vld [vmem:[%s3 + $0x68] sm:$0xf]
      %v331 = vld [vmem:[%s3 + $0x6c] sm:$0xff]
      %v332 = vld [vmem:[%s3 + $0x74] sm:$0xf]
      %v333 = vld [vmem:[%s3 + $0x78] sm:$0xff]
      %v334 = vld [vmem:[%s3 + $0x80] sm:$0xf]
      %v335 = vld [vmem:[%s3 + $0x84] sm:$0xff]
      %v336 = vld [vmem:[%s3 + $0x8c] sm:$0xf]
      %v337 = vld [vmem:[%s3 + $0x90] sm:$0xff]
      %v338 = vld [vmem:[%s3 + $0x98] sm:$0xf]
      %v339 = vld [vmem:[%s3 + $0x9c] sm:$0xff]
      %v340 = vld [vmem:[%s3 + $0xa4] sm:$0xf]
      %v341 = vld [vmem:[%s3 + $0xa8] sm:$0xff]
      %v342 = vld [vmem:[%s3 + $0xb0] sm:$0xf]
      %v343 = vld [vmem:[%s3 + $0xb4] sm:$0xff]
      %v344 = vld [vmem:[%s3 + $0xbc] sm:$0xf]
      %v345 = vld [vmem:[%s4] sm:$0x7]
      %v347 = vlaneseq
      %v348 = vshrl.u32 %v347, 7
      %v349 = vsub.s32 0, %v348
      %v350 = vrot.slane %v345, %v349
      %v351 = vlaneseq
      %v352 = vshrl.u32 %v351, 7
      %v353 = vsub.s32 1, %v352
      %v354 = vrot.slane %v345, %v353
      %v355 = vlaneseq
      %v356 = vshrl.u32 %v355, 7
      %v357 = vsub.s32 2, %v356
      %v358 = vrot.slane %v345, %v357
      %v394 = vunpack.c.l.b16 %v313
      %v395 = vunpack.c.h.b16 %v313
      %v396 = vunpack.c.l.b16 %v314
      %v397 = vunpack.c.l.b16 %v315
      %v398 = vunpack.c.h.b16 %v315
      %v399 = vunpack.c.l.b16 %v316
      %v400 = vunpack.c.l.b16 %v317
      %v401 = vunpack.c.h.b16 %v317
      %v402 = vunpack.c.l.b16 %v318
      %v403 = vunpack.c.l.b16 %v319
      %v404 = vunpack.c.h.b16 %v319
      %v405 = vunpack.c.l.b16 %v320
      %v406 = vunpack.c.l.b16 %v321
      %v407 = vunpack.c.h.b16 %v321
      %v408 = vunpack.c.l.b16 %v322
      %v409 = vunpack.c.l.b16 %v323
      %v410 = vunpack.c.h.b16 %v323
      %v411 = vunpack.c.l.b16 %v324
      %v412 = vunpack.c.l.b16 %v325
      %v413 = vunpack.c.h.b16 %v325
      %v414 = vunpack.c.l.b16 %v326
      %v415 = vunpack.c.l.b16 %v327
      %v416 = vunpack.c.h.b16 %v327
      %v417 = vunpack.c.l.b16 %v328
      %v418 = vunpack.c.l.b16 %v329
      %v419 = vunpack.c.h.b16 %v329
      %v420 = vunpack.c.l.b16 %v330
      %v421 = vunpack.c.l.b16 %v331
      %v422 = vunpack.c.h.b16 %v331
      %v423 = vunpack.c.l.b16 %v332
      %v424 = vunpack.c.l.b16 %v333
      %v425 = vunpack.c.h.b16 %v333
      %v426 = vunpack.c.l.b16 %v334
      %v427 = vunpack.c.l.b16 %v335
      %v428 = vunpack.c.h.b16 %v335
      %v429 = vunpack.c.l.b16 %v336
      %v430 = vunpack.c.l.b16 %v337
      %v431 = vunpack.c.h.b16 %v337
      %v432 = vunpack.c.l.b16 %v338
      %v433 = vunpack.c.l.b16 %v339
      %v434 = vunpack.c.h.b16 %v339
      %v435 = vunpack.c.l.b16 %v340
      %v436 = vunpack.c.l.b16 %v341
      %v437 = vunpack.c.h.b16 %v341
      %v438 = vunpack.c.l.b16 %v342
      %v439 = vunpack.c.l.b16 %v343
      %v440 = vunpack.c.h.b16 %v343
      %v441 = vunpack.c.l.b16 %v344
      %v442 = vpack.c.b16 %v397, %v394
      %v443 = vpack.c.b16 %v398, %v395
      %v444 = vpack.c.b16 %v399, %v396
      %v445 = vpack.c.b16 %v403, %v400
      %v446 = vpack.c.b16 %v404, %v401
      %v447 = vpack.c.b16 %v405, %v402
      %v448 = vpack.c.b16 %v409, %v406
      %v449 = vpack.c.b16 %v410, %v407
      %v450 = vpack.c.b16 %v411, %v408
      %v451 = vpack.c.b16 %v415, %v412
      %v452 = vpack.c.b16 %v416, %v413
      %v453 = vpack.c.b16 %v417, %v414
      %v454 = vpack.c.b16 %v421, %v418
      %v455 = vpack.c.b16 %v422, %v419
      %v456 = vpack.c.b16 %v423, %v420
      %v457 = vpack.c.b16 %v427, %v424
      %v458 = vpack.c.b16 %v428, %v425
      %v459 = vpack.c.b16 %v429, %v426
      %v460 = vpack.c.b16 %v433, %v430
      %v461 = vpack.c.b16 %v434, %v431
      %v462 = vpack.c.b16 %v435, %v432
      %v463 = vpack.c.b16 %v439, %v436
      %v464 = vpack.c.b16 %v440, %v437
      %v465 = vpack.c.b16 %v441, %v438
      %490 = vmatprep.subr.bf16.mxu0 %v443
      %491 = vmatpush1.bf16.msra.mxu0 %v442
      %492 = vmatprep.subr.bf16.mxu0 %v446
      %493 = vmatpush1.bf16.msra.mxu0 %v445
      %494 = vmatprep.subr.bf16.mxu0 %v449
      %495 = vmatpush1.bf16.msra.mxu0 %v448
      %496 = vmatprep.subr.bf16.mxu0 %v452
      %497 = vmatpush1.bf16.msra.mxu0 %v451
      %498 = vmatprep.subr.bf16.mxu0 %v455
      %499 = vmatpush1.bf16.msra.mxu0 %v454
      %500 = vmatprep.subr.bf16.mxu0 %v458
      %501 = vmatpush1.bf16.msra.mxu0 %v457
      %502 = vmatprep.subr.bf16.mxu0 %v461
      %503 = vmatpush1.bf16.msra.mxu0 %v460
      %504 = vmatprep.subr.bf16.mxu0 %v464
      %505 = vmatpush1.bf16.msra.mxu0 %v463
      %506 = vmatprep.subr.bf16.mxu0 0
      %507 = vmatpush1.bf16.msra.mxu0 0
      %508 = vmatprep.subr.bf16.mxu0 0
      %509 = vmatpush1.bf16.msra.mxu0 0
      %510 = vmatprep.subr.bf16.mxu0 0
      %511 = vmatpush1.bf16.msra.mxu0 0
      %512 = vmatprep.subr.bf16.mxu0 0
      %513 = vmatpush1.bf16.msra.mxu0 0
      %514 = vmatprep.subr.bf16.mxu0 0
      %515 = vmatpush1.bf16.msra.mxu0 0
      %516 = vmatprep.subr.bf16.mxu0 0
      %517 = vmatpush1.bf16.msra.mxu0 0
      %518 = vmatprep.subr.bf16.mxu0 0
      %519 = vmatpush1.bf16.msra.mxu0 0
      %520 = vmatprep.subr.bf16.mxu0 0
      %521 = vmatpush1.bf16.msra.mxu0 0
      %522 = vmatprep.mubr.bf16.mxu0 0
      %523 = vmatmul.mubr.bf16.gmra.mrb[0].mxu0 %v312
      %v524 = vpop.f32.mrb[0].mxu0
      %v525 = vadd.f32 %v350, %v524
      %v526 = vpop.f32.mrb[0].mxu0
      %v527 = vadd.f32 %v354, %v526
      %v528 = vpop.f32.mrb[0].mxu0
      %v529 = vadd.f32 %v350, %v528
      %v530 = vpop.f32.mrb[0].mxu0
      %v531 = vadd.f32 %v354, %v530
      %532 = vdwg.mxu0
      %533 = vmatprep.subr.bf16.mxu0 0
      %534 = vmatpush1.bf16.msra.mxu0 %v444
      %535 = vmatprep.subr.bf16.mxu0 0
      %536 = vmatpush1.bf16.msra.mxu0 %v447
      %537 = vmatprep.subr.bf16.mxu0 0
      %538 = vmatpush1.bf16.msra.mxu0 %v450
      %539 = vmatprep.subr.bf16.mxu0 0
      %540 = vmatpush1.bf16.msra.mxu0 %v453
      %541 = vmatprep.subr.bf16.mxu0 0
      %542 = vmatpush1.bf16.msra.mxu0 %v456
      %543 = vmatprep.subr.bf16.mxu0 0
      %544 = vmatpush1.bf16.msra.mxu0 %v459
      %545 = vmatprep.subr.bf16.mxu0 0
      %546 = vmatpush1.bf16.msra.mxu0 %v462
      %547 = vmatprep.subr.bf16.mxu0 0
      %548 = vmatpush1.bf16.msra.mxu0 %v465
      %549 = vmatprep.subr.bf16.mxu0 0
      %550 = vmatpush1.bf16.msra.mxu0 0
      %551 = vmatprep.subr.bf16.mxu0 0
      %552 = vmatpush1.bf16.msra.mxu0 0
      %553 = vmatprep.subr.bf16.mxu0 0
      %554 = vmatpush1.bf16.msra.mxu0 0
      %555 = vmatprep.subr.bf16.mxu0 0
      %556 = vmatpush1.bf16.msra.mxu0 0
      %557 = vmatprep.subr.bf16.mxu0 0
      %558 = vmatpush1.bf16.msra.mxu0 0
      %559 = vmatprep.subr.bf16.mxu0 0
      %560 = vmatpush1.bf16.msra.mxu0 0
      %561 = vmatprep.subr.bf16.mxu0 0
      %562 = vmatpush1.bf16.msra.mxu0 0
      %563 = vmatprep.subr.bf16.mxu0 0
      %564 = vmatpush1.bf16.msra.mxu0 0
      %565 = vmatprep.mubr.bf16.mxu0 0
      %566 = vmatmul.mubr.bf16.gmra.mrb[0].mxu0 %v312
      %v567 = vpop.f32.mrb[0].mxu0
      %v568 = vadd.f32 %v358, %v567
      %v569 = vpop.f32.mrb[0].mxu0
      %v570 = vpop.f32.mrb[0].mxu0
      %v571 = vadd.f32 %v358, %v570
      %v572 = vpop.f32.mrb[0].mxu0
      %573 = vdwg.mxu0
      %v574 = vpack.c.bf16 %v529, %v525
      %v575 = vpack.c.bf16 %v531, %v527
      %v576 = vpack.c.bf16 %v571, %v568
      %v580 = vunpack.c.l.b16 %v574
      %v581 = vunpack.c.l.b16 %v575
      %v582 = vunpack.c.l.b16 %v576
      %v583 = vunpack.c.h.b16 %v574
      %v584 = vunpack.c.h.b16 %v575
      %v585 = vunpack.c.h.b16 %v576
      %v586 = vpack.c.b16 %v581, %v580
      %v587 = vpack.c.b16 %v582, %v582
      %v588 = vpack.c.b16 %v584, %v583
      %v589 = vpack.c.b16 %v585, %v585
      %594 = vst [vmem:[%s264] sm:$0xff] %v586
      %595 = vst [vmem:[%s264 + $0x8] sm:$0xf] %v587
      %596 = vst [vmem:[%s264 + $0xc] sm:$0xff] %v588
      %597 = vst [vmem:[%s264 + $0x14] sm:$0xf] %v589
      %s598 = smul.u32 2, %s21
      %p599 = scmp.lt.s32.totalorder %s20, 1
      %s600 = scalar_select %p599, %s20, 1
      %p601 = scmp.lt.s32.totalorder %s598, 1
      %s602 = scalar_select %p601, %s598, 1
      %s603 = smul.addr %s602, 3
      %s604 = smul.addr %s600, 6
      %s605 = sadd.s32 %s603, %s604
      %s606 = smul.addr %s605, 4
      %s607 = scalar_lea.vmem %s5, %s606
      // Predicated region
      $region41: #{siglip_vision_forward.8} parent=39 // pred_check
        %p608 = pneg %p160
      $region42: #{siglip_vision_forward.8} parent=39 // pred_check_branch
        %610 = sbr.rel (%p608) target = $region44
      $region43: #{siglip_vision_forward.8} parent=39 // pred_region
        %s611 = smul.u32 2, %s21
      $region44: #{siglip_vision_forward.8} parent=39 // pred_fallthru
        _
    $region40: #{siglip_vision_forward.8} parent=5 // pred_fallthru
      _
    %p612 = scmp.le.s32.totalorder 2, %s11
    // Predicated region
    $region45: #{siglip_vision_forward.8} parent=5 // pred_check
      %p613 = pneg %p612
    $region46: #{siglip_vision_forward.8} parent=5 // pred_check_branch
      %615 = sbr.rel (%p613) target = $region48
    $region47: #{siglip_vision_forward.8} parent=5 // pred_region
      %s616 = ssub.s32 %s11, 2
      // Predicated region
      $region49: #{siglip_vision_forward.8} parent=47 // pred_check
        %p617 = pneg %p166
      $region50: #{siglip_vision_forward.8} parent=47 // pred_check_branch
        %619 = sbr.rel (%p617) target = $region52
      $region51: #{siglip_vision_forward.8} parent=47 // pred_region
        %s620 = smul.u32 2, %s23
        %p621 = scmp.lt.s32.totalorder %s22, 1
        %s622 = scalar_select %p621, %s22, 1
        %p623 = scmp.lt.s32.totalorder %s620, 1
        %s624 = scalar_select %p623, %s620, 1
        %s625 = smul.addr %s624, 3
        %s626 = smul.addr %s622, 6
        %s627 = sadd.s32 %s625, %s626
        %s628 = smul.addr %s627, 4
        %s629 = scalar_lea.vmem %s5, %s628
      $region52: #{siglip_vision_forward.8} parent=47 // pred_fallthru
        _
    $region48: #{siglip_vision_forward.8} parent=5 // pred_fallthru
      _
  $region6: #{siglip_vision_forward.8} parent=0 // loop_footer
    %s15 = sadd.s32 1, %s11
  $region7: #{siglip_vision_forward.8} parent=0 // loop_footer_branch
    %10 = sbr.rel target = $region3
  $region8: #{siglip_vision_forward.8} parent=0 // loop_exit
    _

// kernel: siglip_vision_forward.10
$region0: #{siglip_vision_forward.10}
  #allocation0 [shape = 'u32[]', space=smem, size = 0x4, offset = 0x4, fixed_abs, tag = 'smem constant byte address 0x4 - core index']
  #allocation1 [shape = 'u32[144,128]{1,0:T(1,128)}', space=vmem, size = 0x12000, scoped, tag = 'internal scratch']
  %s0 = inlined_call_operand.vmem [shape: bf16[2,16,128], index: 0, kind: input, shape index: {}, may-alias: {0,7}]
  %s1 = inlined_call_operand.vmem [shape: f32[1,128], index: 1, kind: input, shape index: {}]
  %s2 = inlined_call_operand.vmem [shape: f32[1,128], index: 2, kind: input, shape index: {}]
  %s3 = inlined_call_operand.vmem [shape: bf16[128,256], index: 3, kind: input, shape index: {}]
  %s4 = inlined_call_operand.vmem [shape: f32[1,256], index: 4, kind: input, shape index: {}]
  %s5 = inlined_call_operand.vmem [shape: bf16[256,128], index: 5, kind: input, shape index: {}]
  %s6 = inlined_call_operand.vmem [shape: f32[1,128], index: 6, kind: input, shape index: {}]
  %s7 = inlined_call_operand.vmem [shape: bf16[2,16,128], index: 7, kind: output, shape index: {}, may-alias: {0,7}]
  %s8 = sld [smem:[#allocation0]]
  $region61: #{siglip_vision_forward.10} parent=0
    _
  %s10 = ssub.s32 1, %s8
  %s11 = scalar_select 0, %s10, %s8
  loop: start=0, step=1, limit=4
  $region2: #{siglip_vision_forward.10} parent=0 // loop_pre_header
    _
  $region3: #{siglip_vision_forward.10} parent=0 // loop_header
    %s13 = sphi 0, %s17
    %p14 = scmp.ge.s32.totalorder %s13, 4
    %s20 = sphi 0, %s32
    %s21 = sphi 0, %s28
    %s22 = sphi 0, %s20
    %s23 = sphi 0, %s21
    %s24 = sphi 0, %s22
    %s25 = sphi 0, %s23
    %s37 = sphi 0, %s39
    %s40 = sphi 0, %s37
    %s41 = sphi 0, %s40
    %s57 = sphi 0, %s41
    %s61 = sphi 0, %s61
    %s63 = sphi 0, %s61
    %s64 = sphi 0, %s63
    %s78 = sphi 0, %s64
    %s82 = sphi 0, %s82
    %s84 = sphi 0, %s82
    %s85 = sphi 0, %s84
    %s99 = sphi 0, %s85
    %s103 = sphi 0, %s103
    %s105 = sphi 0, %s103
    %s106 = sphi 0, %s105
    %s120 = sphi 0, %s106
    %s124 = sphi 0, %s124
    %s126 = sphi 0, %s124
    %s127 = sphi 0, %s126
    %s141 = sphi 0, %s127
    %s145 = sphi 0, %s145
    %s147 = sphi 0, %s145
    %s148 = sphi 0, %s147
    %s162 = sphi 0, %s148
    %s166 = sphi 0, %s166
    %s168 = sphi 0, %s166
    %s169 = sphi 0, %s168
    %s183 = sphi 0, %s169
    %s191 = sphi 0, %s193
    %s194 = sphi 0, %s191
    %s195 = sphi 0, %s194
    %s211 = sphi 0, %s195
  $region4: #{siglip_vision_forward.10} parent=0 // loop_header_branch
    %16 = sbr.rel (%p14) target = $region8
  $region5: #{siglip_vision_forward.10} parent=0 // loop_body
    %s18 = ssub.s32 %s13, 1
    %s19 = ssub.s32 %s13, 2
    %s26 = sadd.s32 1, %s21
    %p27 = scmp.ge.s32.totalorder %s26, 1
    %s28 = scalar_select %p27, 0, %s26
    %s29 = sadd.s32 1, %s20
    %s30 = scalar_select %p27, %s29, %s20
    %p31 = scmp.ge.s32.totalorder %s30, 2
    %s32 = scalar_select %p31, 0, %s30
    %s33 = ssub.s32 %s20, %s32
    %s34 = ssub.s32 %s21, %s28
    %s35 = sor.u32 %s33, %s34
    %p36 = scmp.eq.s32.totalorder %s35, 0
    %s38 = sadd.s32 %s37, 1
    %s39 = scalar_select %p36, %s37, %s38
    %p42 = pneg %p36
    %p43 = scmp.eq.s32.totalorder %s13, 1
    %p44 = por %p42, %p43
    %p45 = scmp.ne.s32.totalorder %s37, %s40
    %p46 = scmp.eq.s32.totalorder %s13, 0
    %p47 = por %p45, %p46
    %p48 = scmp.ne.s32.totalorder %s37, %s40
    %p49 = scmp.eq.s32.totalorder %s18, 1
    %p50 = por %p48, %p49
    %p51 = scmp.ne.s32.totalorder %s40, %s41
    %p52 = scmp.eq.s32.totalorder %s18, 0
    %p53 = por %p51, %p52
    %p54 = scmp.ne.s32.totalorder %s40, %s41
    %p55 = scmp.eq.s32.totalorder %s19, 1
    %p56 = por %p54, %p55
    %p58 = scmp.ne.s32.totalorder %s41, %s57
    %p59 = scmp.eq.s32.totalorder %s19, 0
    %p60 = por %p58, %p59
    %s62 = sadd.s32 %s61, 1
    %p65 = scmp.eq.s32.totalorder %s13, 1
    %p66 = scmp.ne.s32.totalorder %s61, %s63
    %p67 = scmp.eq.s32.totalorder %s13, 0
    %p68 = por %p66, %p67
    %p69 = scmp.ne.s32.totalorder %s61, %s63
    %p70 = scmp.eq.s32.totalorder %s18, 1
    %p71 = por %p69, %p70
    %p72 = scmp.ne.s32.totalorder %s63, %s64
    %p73 = scmp.eq.s32.totalorder %s18, 0
    %p74 = por %p72, %p73
    %p75 = scmp.ne.s32.totalorder %s63, %s64
    %p76 = scmp.eq.s32.totalorder %s19, 1
    %p77 = por %p75, %p76
    %p79 = scmp.ne.s32.totalorder %s64, %s78
    %p80 = scmp.eq.s32.totalorder %s19, 0
    %p81 = por %p79, %p80
    %s83 = sadd.s32 %s82, 1
    %p86 = scmp.eq.s32.totalorder %s13, 1
    %p87 = scmp.ne.s32.totalorder %s82, %s84
    %p88 = scmp.eq.s32.totalorder %s13, 0
    %p89 = por %p87, %p88
    %p90 = scmp.ne.s32.totalorder %s82, %s84
    %p91 = scmp.eq.s32.totalorder %s18, 1
    %p92 = por %p90, %p91
    %p93 = scmp.ne.s32.totalorder %s84, %s85
    %p94 = scmp.eq.s32.totalorder %s18, 0
    %p95 = por %p93, %p94
    %p96 = scmp.ne.s32.totalorder %s84, %s85
    %p97 = scmp.eq.s32.totalorder %s19, 1
    %p98 = por %p96, %p97
    %p100 = scmp.ne.s32.totalorder %s85, %s99
    %p101 = scmp.eq.s32.totalorder %s19, 0
    %p102 = por %p100, %p101
    %s104 = sadd.s32 %s103, 1
    %p107 = scmp.eq.s32.totalorder %s13, 1
    %p108 = scmp.ne.s32.totalorder %s103, %s105
    %p109 = scmp.eq.s32.totalorder %s13, 0
    %p110 = por %p108, %p109
    %p111 = scmp.ne.s32.totalorder %s103, %s105
    %p112 = scmp.eq.s32.totalorder %s18, 1
    %p113 = por %p111, %p112
    %p114 = scmp.ne.s32.totalorder %s105, %s106
    %p115 = scmp.eq.s32.totalorder %s18, 0
    %p116 = por %p114, %p115
    %p117 = scmp.ne.s32.totalorder %s105, %s106
    %p118 = scmp.eq.s32.totalorder %s19, 1
    %p119 = por %p117, %p118
    %p121 = scmp.ne.s32.totalorder %s106, %s120
    %p122 = scmp.eq.s32.totalorder %s19, 0
    %p123 = por %p121, %p122
    %s125 = sadd.s32 %s124, 1
    %p128 = scmp.eq.s32.totalorder %s13, 1
    %p129 = scmp.ne.s32.totalorder %s124, %s126
    %p130 = scmp.eq.s32.totalorder %s13, 0
    %p131 = por %p129, %p130
    %p132 = scmp.ne.s32.totalorder %s124, %s126
    %p133 = scmp.eq.s32.totalorder %s18, 1
    %p134 = por %p132, %p133
    %p135 = scmp.ne.s32.totalorder %s126, %s127
    %p136 = scmp.eq.s32.totalorder %s18, 0
    %p137 = por %p135, %p136
    %p138 = scmp.ne.s32.totalorder %s126, %s127
    %p139 = scmp.eq.s32.totalorder %s19, 1
    %p140 = por %p138, %p139
    %p142 = scmp.ne.s32.totalorder %s127, %s141
    %p143 = scmp.eq.s32.totalorder %s19, 0
    %p144 = por %p142, %p143
    %s146 = sadd.s32 %s145, 1
    %p149 = scmp.eq.s32.totalorder %s13, 1
    %p150 = scmp.ne.s32.totalorder %s145, %s147
    %p151 = scmp.eq.s32.totalorder %s13, 0
    %p152 = por %p150, %p151
    %p153 = scmp.ne.s32.totalorder %s145, %s147
    %p154 = scmp.eq.s32.totalorder %s18, 1
    %p155 = por %p153, %p154
    %p156 = scmp.ne.s32.totalorder %s147, %s148
    %p157 = scmp.eq.s32.totalorder %s18, 0
    %p158 = por %p156, %p157
    %p159 = scmp.ne.s32.totalorder %s147, %s148
    %p160 = scmp.eq.s32.totalorder %s19, 1
    %p161 = por %p159, %p160
    %p163 = scmp.ne.s32.totalorder %s148, %s162
    %p164 = scmp.eq.s32.totalorder %s19, 0
    %p165 = por %p163, %p164
    %s167 = sadd.s32 %s166, 1
    %p170 = scmp.eq.s32.totalorder %s13, 1
    %p171 = scmp.ne.s32.totalorder %s166, %s168
    %p172 = scmp.eq.s32.totalorder %s13, 0
    %p173 = por %p171, %p172
    %p174 = scmp.ne.s32.totalorder %s166, %s168
    %p175 = scmp.eq.s32.totalorder %s18, 1
    %p176 = por %p174, %p175
    %p177 = scmp.ne.s32.totalorder %s168, %s169
    %p178 = scmp.eq.s32.totalorder %s18, 0
    %p179 = por %p177, %p178
    %p180 = scmp.ne.s32.totalorder %s168, %s169
    %p181 = scmp.eq.s32.totalorder %s19, 1
    %p182 = por %p180, %p181
    %p184 = scmp.ne.s32.totalorder %s169, %s183
    %p185 = scmp.eq.s32.totalorder %s19, 0
    %p186 = por %p184, %p185
    %s187 = ssub.s32 %s20, %s32
    %s188 = ssub.s32 %s21, %s28
    %s189 = sor.u32 %s187, %s188
    %p190 = scmp.eq.s32.totalorder %s189, 0
    %s192 = sadd.s32 %s191, 1
    %s193 = scalar_select %p190, %s191, %s192
    %p196 = pneg %p190
    %p197 = scmp.eq.s32.totalorder %s13, 1
    %p198 = por %p196, %p197
    %p199 = scmp.ne.s32.totalorder %s191, %s194
    %p200 = scmp.eq.s32.totalorder %s13, 0
    %p201 = por %p199, %p200
    %p202 = scmp.ne.s32.totalorder %s191, %s194
    %p203 = scmp.eq.s32.totalorder %s18, 1
    %p204 = por %p202, %p203
    %p205 = scmp.ne.s32.totalorder %s194, %s195
    %p206 = scmp.eq.s32.totalorder %s18, 0
    %p207 = por %p205, %p206
    %p208 = scmp.ne.s32.totalorder %s194, %s195
    %p209 = scmp.eq.s32.totalorder %s19, 1
    %p210 = por %p208, %p209
    %p212 = scmp.ne.s32.totalorder %s195, %s211
    %p213 = scmp.eq.s32.totalorder %s19, 0
    %p214 = por %p212, %p213
    %p215 = scmp.le.s32.totalorder 1, %s13
    %p216 = scmp.lt.s32.totalorder %s13, 3
    %p217 = pnand %p215, %p216
    %p218 = pneg %p217
    // Predicated region
    $region9: #{siglip_vision_forward.10} parent=5 // pred_check
      _
    $region10: #{siglip_vision_forward.10} parent=5 // pred_check_branch
      %220 = sbr.rel (%p217) target = $region12
    $region11: #{siglip_vision_forward.10} parent=5 // pred_region
      %s221 = ssub.s32 %s13, 1
      // Predicated region
      $region13: #{siglip_vision_forward.10} parent=11 // pred_check
        %p222 = pneg %p74
      $region14: #{siglip_vision_forward.10} parent=11 // pred_check_branch
        %224 = sbr.rel (%p222) target = $region16
      $region15: #{siglip_vision_forward.10} parent=11 // pred_region
        _
      $region16: #{siglip_vision_forward.10} parent=11 // pred_fallthru
        _
      // Predicated region
      $region17: #{siglip_vision_forward.10} parent=11 // pred_check
        %p225 = pneg %p95
      $region18: #{siglip_vision_forward.10} parent=11 // pred_check_branch
        %227 = sbr.rel (%p225) target = $region20
      $region19: #{siglip_vision_forward.10} parent=11 // pred_region
        _
      $region20: #{siglip_vision_forward.10} parent=11 // pred_fallthru
        _
      // Predicated region
      $region21: #{siglip_vision_forward.10} parent=11 // pred_check
        %p228 = pneg %p116
      $region22: #{siglip_vision_forward.10} parent=11 // pred_check_branch
        %230 = sbr.rel (%p228) target = $region24
      $region23: #{siglip_vision_forward.10} parent=11 // pred_region
        _
      $region24: #{siglip_vision_forward.10} parent=11 // pred_fallthru
        _
      // Predicated region
      $region25: #{siglip_vision_forward.10} parent=11 // pred_check
        %p231 = pneg %p137
      $region26: #{siglip_vision_forward.10} parent=11 // pred_check_branch
        %233 = sbr.rel (%p231) target = $region28
      $region27: #{siglip_vision_forward.10} parent=11 // pred_region
        _
      $region28: #{siglip_vision_forward.10} parent=11 // pred_fallthru
        _
      // Predicated region
      $region29: #{siglip_vision_forward.10} parent=11 // pred_check
        %p234 = pneg %p158
      $region30: #{siglip_vision_forward.10} parent=11 // pred_check_branch
        %236 = sbr.rel (%p234) target = $region32
      $region31: #{siglip_vision_forward.10} parent=11 // pred_region
        _
      $region32: #{siglip_vision_forward.10} parent=11 // pred_fallthru
        _
      // Predicated region
      $region33: #{siglip_vision_forward.10} parent=11 // pred_check
        %p237 = pneg %p179
      $region34: #{siglip_vision_forward.10} parent=11 // pred_check_branch
        %239 = sbr.rel (%p237) target = $region36
      $region35: #{siglip_vision_forward.10} parent=11 // pred_region
        _
      $region36: #{siglip_vision_forward.10} parent=11 // pred_fallthru
        _
    $region12: #{siglip_vision_forward.10} parent=5 // pred_fallthru
      _
    %p240 = scmp.lt.s32.totalorder %s13, 2
    // Predicated region
    $region37: #{siglip_vision_forward.10} parent=5 // pred_check
      %p241 = pneg %p240
    $region38: #{siglip_vision_forward.10} parent=5 // pred_check_branch
      %243 = sbr.rel (%p241) target = $region40
    $region39: #{siglip_vision_forward.10} parent=5 // pred_region
      // Predicated region
      $region41: #{siglip_vision_forward.10} parent=39 // pred_check
        %p244 = pneg %p47
      $region42: #{siglip_vision_forward.10} parent=39 // pred_check_branch
        %246 = sbr.rel (%p244) target = $region44
      $region43: #{siglip_vision_forward.10} parent=39 // pred_region
        %s247 = smul.u32 2, %s21
        %p248 = scmp.lt.s32.totalorder %s20, 1
        %s249 = scalar_select %p248, %s20, 1
        %p250 = scmp.lt.s32.totalorder %s247, 1
        %s251 = scalar_select %p250, %s247, 1
        %s252 = smul.addr %s249, 2
        %s253 = sadd.s32 %s251, %s252
        %s254 = smul.addr %s253, 4
        %s255 = scalar_lea.vmem %s0, %s254
        %s256 = smul.u32 2, %s21
      $region44: #{siglip_vision_forward.10} parent=39 // pred_fallthru
        _
    $region40: #{siglip_vision_forward.10} parent=5 // pred_fallthru
      _
    %p257 = scmp.le.s32.totalorder 1, %s13
    %p258 = scmp.lt.s32.totalorder %s13, 3
    %p259 = pnand %p257, %p258
    %p260 = pneg %p259
    // Predicated region
    $region45: #{siglip_vision_forward.10} parent=5 // pred_check
      _
    $region46: #{siglip_vision_forward.10} parent=5 // pred_check_branch
      %262 = sbr.rel (%p259) target = $region48
    $region47: #{siglip_vision_forward.10} parent=5 // pred_region
      %s263 = ssub.s32 %s13, 1
      %s264 = smul.u32 2, %s23
      %p265 = scmp.lt.s32.totalorder %s22, 1
      %s266 = scalar_select %p265, %s22, 1
      %p267 = scmp.lt.s32.totalorder %s264, 1
      %s268 = scalar_select %p267, %s264, 1
      %s269 = smul.addr %s266, 2
      %s270 = sadd.s32 %s268, %s269
      %s271 = smul.addr %s270, 4
      %s272 = scalar_lea.vmem %s0, %s271
      %p273 = pneg %p53
      %p274 = pneg %p50
      %p275 = pneg %p74
      %p276 = pneg %p71
      %p277 = pneg %p95
      %p278 = pneg %p92
      %p279 = pneg %p116
      %p280 = pneg %p113
      %p281 = pneg %p137
      %p282 = pneg %p134
      %p283 = pneg %p158
      %p284 = pneg %p155
      %p285 = pneg %p179
      %p286 = pneg %p176
      %p287 = pneg %p207
      %p288 = pneg %p204
      %s289 = smul.u32 2, %s23
      %p290 = scmp.lt.s32.totalorder %s22, 1
      %s291 = scalar_select %p290, %s22, 1
      %p292 = scmp.lt.s32.totalorder %s289, 1
      %s293 = scalar_select %p292, %s289, 1
      %s294 = smul.addr %s291, 2
      %s295 = sadd.s32 %s293, %s294
      %s296 = smul.addr %s295, 4
      %s297 = scalar_lea.vmem %s7, %s296
      %s298 = smul.u32 2, %s23
      %p299 = scmp.lt.s32.totalorder %s22, 1
      %s300 = scalar_select %p299, %s22, 1
      %p301 = scmp.lt.s32.totalorder %s298, 1
      %s302 = scalar_select %p301, %s298, 1
      %s303 = smul.addr %s300, 2
      %s304 = sadd.s32 %s302, %s303
      %s305 = smul.addr %s304, 4
      %s306 = scalar_lea.vmem %s0, %s305
      %s307 = smul.u32 2, %s23
      %s308 = smul.u32 2, %s23
      %p309 = scmp.lt.s32.totalorder %s22, 1
      %s310 = scalar_select %p309, %s22, 1
      %p311 = scmp.lt.s32.totalorder %s308, 1
      %s312 = scalar_select %p311, %s308, 1
      %s313 = smul.addr %s310, 2
      %s314 = sadd.s32 %s312, %s313
      %s315 = smul.addr %s314, 4
      %s316 = scalar_lea.vmem %s7, %s315
      %s317 = smul.u32 2, %s23
      %v319 = vld [vmem:[%s306] sm:$0xf]
      %v320 = vld [vmem:[%s306 + $0x4] sm:$0xf]
      %v321 = vunpack.c.l.bf16 %v319
      %v322 = vunpack.c.l.bf16 %v320
      %v323 = vld [vmem:[%s1] sm:$0x1]
      %v324 = vld [vmem:[%s2] sm:$0x1]
      %325 = vadd.xlane.f32.xlu0 %v321
      %v326 = vpop.xlane.xlu0 %325
      %327 = vadd.xlane.f32.xlu0 %v322
      %v328 = vpop.xlane.xlu0 %327
      %v329 = vrcp.pop 128.0
      %v330 = vmul.f32 %v326, %v329
      %v331 = vmul.f32 %v328, %v329
      %v332 = vsub.f32 %v321, %v330
      %v333 = vsub.f32 %v322, %v331
      %v334 = vmul.f32 %v332, %v332
      %v335 = vmul.f32 %v333, %v333
      %336 = vadd.xlane.f32.xlu0 %v334
      %v337 = vpop.xlane.xlu0 %336
      %338 = vadd.xlane.f32.xlu0 %v335
      %v339 = vpop.xlane.xlu0 %338
      %v340 = vmul.f32 %v337, %v329
      %v341 = vmul.f32 %v339, %v329
      %v342 = vadd.f32 %v340, 1e-06
      %v343 = vadd.f32 %v341, 1e-06
      %v344 = vrsqrt.pop %v342
      %v345 = vrsqrt.pop %v343
      %v346 = vmul.f32 %v332, %v344
      %v347 = vmul.f32 %v333, %v345
      %v349 = vlaneseq
      %v350 = vshrl.u32 %v349, 7
      %v351 = vsub.s32 0, %v350
      %v352 = vrot.slane %v323, %v351
      %v354 = vmul.f32 %v346, %v352
      %v355 = vmul.f32 %v347, %v352
      %v357 = vlaneseq
      %v358 = vshrl.u32 %v357, 7
      %v359 = vsub.s32 0, %v358
      %v360 = vrot.slane %v324, %v359
      %v362 = vadd.f32 %v354, %v360
      %v363 = vadd.f32 %v355, %v360
      %v364 = vpack.c.bf16 %v363, %v362
      %v365 = vld [vmem:[%s3] sm:$0xff]
      %v366 = vld [vmem:[%s3 + $0x8] sm:$0xff]
      %v367 = vld [vmem:[%s3 + $0x10] sm:$0xff]
      %v368 = vld [vmem:[%s3 + $0x18] sm:$0xff]
      %v369 = vld [vmem:[%s3 + $0x20] sm:$0xff]
      %v370 = vld [vmem:[%s3 + $0x28] sm:$0xff]
      %v371 = vld [vmem:[%s3 + $0x30] sm:$0xff]
      %v372 = vld [vmem:[%s3 + $0x38] sm:$0xff]
      %v373 = vld [vmem:[%s3 + $0x40] sm:$0xff]
      %v374 = vld [vmem:[%s3 + $0x48] sm:$0xff]
      %v375 = vld [vmem:[%s3 + $0x50] sm:$0xff]
      %v376 = vld [vmem:[%s3 + $0x58] sm:$0xff]
      %v377 = vld [vmem:[%s3 + $0x60] sm:$0xff]
      %v378 = vld [vmem:[%s3 + $0x68] sm:$0xff]
      %v379 = vld [vmem:[%s3 + $0x70] sm:$0xff]
      %v380 = vld [vmem:[%s3 + $0x78] sm:$0xff]
      %v381 = vld [vmem:[%s4] sm:$0x3]
      %v383 = vlaneseq
      %v384 = vshrl.u32 %v383, 7
      %v385 = vsub.s32 0, %v384
      %v386 = vrot.slane %v381, %v385
      %v387 = vlaneseq
      %v388 = vshrl.u32 %v387, 7
      %v389 = vsub.s32 1, %v388
      %v390 = vrot.slane %v381, %v389
      %v409 = vunpack.c.l.b16 %v365
      %v410 = vunpack.c.h.b16 %v365
      %v411 = vunpack.c.l.b16 %v366
      %v412 = vunpack.c.h.b16 %v366
      %v413 = vunpack.c.l.b16 %v367
      %v414 = vunpack.c.h.b16 %v367
      %v415 = vunpack.c.l.b16 %v368
      %v416 = vunpack.c.h.b16 %v368
      %v417 = vunpack.c.l.b16 %v369
      %v418 = vunpack.c.h.b16 %v369
      %v419 = vunpack.c.l.b16 %v370
      %v420 = vunpack.c.h.b16 %v370
      %v421 = vunpack.c.l.b16 %v371
      %v422 = vunpack.c.h.b16 %v371
      %v423 = vunpack.c.l.b16 %v372
      %v424 = vunpack.c.h.b16 %v372
      %v425 = vunpack.c.l.b16 %v373
      %v426 = vunpack.c.h.b16 %v373
      %v427 = vunpack.c.l.b16 %v374
      %v428 = vunpack.c.h.b16 %v374
      %v429 = vunpack.c.l.b16 %v375
      %v430 = vunpack.c.h.b16 %v375
      %v431 = vunpack.c.l.b16 %v376
      %v432 = vunpack.c.h.b16 %v376
      %v433 = vunpack.c.l.b16 %v377
      %v434 = vunpack.c.h.b16 %v377
      %v435 = vunpack.c.l.b16 %v378
      %v436 = vunpack.c.h.b16 %v378
      %v437 = vunpack.c.l.b16 %v379
      %v438 = vunpack.c.h.b16 %v379
      %v439 = vunpack.c.l.b16 %v380
      %v440 = vunpack.c.h.b16 %v380
      %v441 = vpack.c.b16 %v411, %v409
      %v442 = vpack.c.b16 %v412, %v410
      %v443 = vpack.c.b16 %v415, %v413
      %v444 = vpack.c.b16 %v416, %v414
      %v445 = vpack.c.b16 %v419, %v417
      %v446 = vpack.c.b16 %v420, %v418
      %v447 = vpack.c.b16 %v423, %v421
      %v448 = vpack.c.b16 %v424, %v422
      %v449 = vpack.c.b16 %v427, %v425
      %v450 = vpack.c.b16 %v428, %v426
      %v451 = vpack.c.b16 %v431, %v429
      %v452 = vpack.c.b16 %v432, %v430
      %v453 = vpack.c.b16 %v435, %v433
      %v454 = vpack.c.b16 %v436, %v434
      %v455 = vpack.c.b16 %v439, %v437
      %v456 = vpack.c.b16 %v440, %v438
      %473 = vmatprep.subr.bf16.mxu0 %v442
      %474 = vmatpush1.bf16.msra.mxu0 %v441
      %475 = vmatprep.subr.bf16.mxu0 %v444
      %476 = vmatpush1.bf16.msra.mxu0 %v443
      %477 = vmatprep.subr.bf16.mxu0 %v446
      %478 = vmatpush1.bf16.msra.mxu0 %v445
      %479 = vmatprep.subr.bf16.mxu0 %v448
      %480 = vmatpush1.bf16.msra.mxu0 %v447
      %481 = vmatprep.subr.bf16.mxu0 %v450
      %482 = vmatpush1.bf16.msra.mxu0 %v449
      %483 = vmatprep.subr.bf16.mxu0 %v452
      %484 = vmatpush1.bf16.msra.mxu0 %v451
      %485 = vmatprep.subr.bf16.mxu0 %v454
      %486 = vmatpush1.bf16.msra.mxu0 %v453
      %487 = vmatprep.subr.bf16.mxu0 %v456
      %488 = vmatpush1.bf16.msra.mxu0 %v455
      %489 = vmatprep.subr.bf16.mxu0 0
      %490 = vmatpush1.bf16.msra.mxu0 0
      %491 = vmatprep.subr.bf16.mxu0 0
      %492 = vmatpush1.bf16.msra.mxu0 0
      %493 = vmatprep.subr.bf16.mxu0 0
      %494 = vmatpush1.bf16.msra.mxu0 0
      %495 = vmatprep.subr.bf16.mxu0 0
      %496 = vmatpush1.bf16.msra.mxu0 0
      %497 = vmatprep.subr.bf16.mxu0 0
      %498 = vmatpush1.bf16.msra.mxu0 0
      %499 = vmatprep.subr.bf16.mxu0 0
      %500 = vmatpush1.bf16.msra.mxu0 0
      %501 = vmatprep.subr.bf16.mxu0 0
      %502 = vmatpush1.bf16.msra.mxu0 0
      %503 = vmatprep.subr.bf16.mxu0 0
      %504 = vmatpush1.bf16.msra.mxu0 0
      %505 = vmatprep.mubr.bf16.mxu0 0
      %506 = vmatmul.mubr.bf16.gmra.mrb[0].mxu0 %v364
      %v507 = vpop.f32.mrb[0].mxu0
      %v508 = vadd.f32 %v386, %v507
      %v509 = vpop.f32.mrb[0].mxu0
      %v510 = vadd.f32 %v390, %v509
      %v511 = vpop.f32.mrb[0].mxu0
      %v512 = vadd.f32 %v386, %v511
      %v513 = vpop.f32.mrb[0].mxu0
      %v514 = vadd.f32 %v390, %v513
      %515 = vdwg.mxu0
      %v516 = vmul.f32 %v508, 0.5
      %v517 = vmul.f32 %v510, 0.5
      %v518 = vmul.f32 %v512, 0.5
      %v519 = vmul.f32 %v514, 0.5
      %v520 = vmul.f32 %v508, 0.044715
      %v521 = vmul.f32 %v510, 0.044715
      %v522 = vmul.f32 %v512, 0.044715
      %v523 = vmul.f32 %v514, 0.044715
      %v524 = vmul.f32 %v520, %v508
      %v525 = vmul.f32 %v521, %v510
      %v526 = vmul.f32 %v522, %v512
      %v527 = vmul.f32 %v523, %v514
      %v528 = vmul.f32 %v524, %v508
      %v529 = vmul.f32 %v525, %v510
      %v530 = vmul.f32 %v526, %v512
      %v531 = vmul.f32 %v527, %v514
      %v532 = vadd.f32 %v508, %v528
      %v533 = vadd.f32 %v510, %v529
      %v534 = vadd.f32 %v512, %v530
      %v535 = vadd.f32 %v514, %v531
      %v536 = vmul.f32 %v532, 0.7978845
      %v537 = vmul.f32 %v533, 0.7978845
      %v538 = vmul.f32 %v534, 0.7978845
      %v539 = vmul.f32 %v535, 0.7978845
      %v540 = vtanh.pop %v536
      %v541 = vtanh.pop %v537
      %v542 = vtanh.pop %v538
      %v543 = vtanh.pop %v539
      %v544 = vadd.f32 %v540, 1.0
      %v545 = vadd.f32 %v541, 1.0
      %v546 = vadd.f32 %v542, 1.0
      %v547 = vadd.f32 %v543, 1.0
      %v548 = vmul.f32 %v516, %v544
      %v549 = vmul.f32 %v517, %v545
      %v550 = vmul.f32 %v518, %v546
      %v551 = vmul.f32 %v519, %v547
      %v552 = vpack.c.bf16 %v550, %v548
      %v553 = vpack.c.bf16 %v551, %v549
      %v554 = vld [vmem:[%s5] sm:$0xf]
      %v555 = vld [vmem:[%s5 + $0x4] sm:$0xf]
      %v556 = vld [vmem:[%s5 + $0x8] sm:$0xf]
      %v557 = vld [vmem:[%s5 + $0xc] sm:$0xf]
      %v558 = vld [vmem:[%s5 + $0x10] sm:$0xf]
      %v559 = vld [vmem:[%s5 + $0x14] sm:$0xf]
      %v560 = vld [vmem:[%s5 + $0x18] sm:$0xf]
      %v561 = vld [vmem:[%s5 + $0x1c] sm:$0xf]
      %v562 = vld [vmem:[%s5 + $0x20] sm:$0xf]
      %v563 = vld [vmem:[%s5 + $0x24] sm:$0xf]
      %v564 = vld [vmem:[%s5 + $0x28] sm:$0xf]
      %v565 = vld [vmem:[%s5 + $0x2c] sm:$0xf]
      %v566 = vld [vmem:[%s5 + $0x30] sm:$0xf]
      %v567 = vld [vmem:[%s5 + $0x34] sm:$0xf]
      %v568 = vld [vmem:[%s5 + $0x38] sm:$0xf]
      %v569 = vld [vmem:[%s5 + $0x3c] sm:$0xf]
      %v570 = vld [vmem:[%s5 + $0x40] sm:$0xf]
      %v571 = vld [vmem:[%s5 + $0x44] sm:$0xf]
      %v572 = vld [vmem:[%s5 + $0x48] sm:$0xf]
      %v573 = vld [vmem:[%s5 + $0x4c] sm:$0xf]
      %v574 = vld [vmem:[%s5 + $0x50] sm:$0xf]
      %v575 = vld [vmem:[%s5 + $0x54] sm:$0xf]
      %v576 = vld [vmem:[%s5 + $0x58] sm:$0xf]
      %v577 = vld [vmem:[%s5 + $0x5c] sm:$0xf]
      %v578 = vld [vmem:[%s5 + $0x60] sm:$0xf]
      %v579 = vld [vmem:[%s5 + $0x64] sm:$0xf]
      %v580 = vld [vmem:[%s5 + $0x68] sm:$0xf]
      %v581 = vld [vmem:[%s5 + $0x6c] sm:$0xf]
      %v582 = vld [vmem:[%s5 + $0x70] sm:$0xf]
      %v583 = vld [vmem:[%s5 + $0x74] sm:$0xf]
      %v584 = vld [vmem:[%s5 + $0x78] sm:$0xf]
      %v585 = vld [vmem:[%s5 + $0x7c] sm:$0xf]
      %v586 = vld [vmem:[%s6] sm:$0x1]
      %v588 = vlaneseq
      %v589 = vshrl.u32 %v588, 7
      %v590 = vsub.s32 0, %v589
      %v591 = vrot.slane %v586, %v590
      %v625 = vunpack.c.l.b16 %v554
      %v626 = vunpack.c.l.b16 %v555
      %v627 = vunpack.c.l.b16 %v556
      %v628 = vunpack.c.l.b16 %v557
      %v629 = vunpack.c.l.b16 %v558
      %v630 = vunpack.c.l.b16 %v559
      %v631 = vunpack.c.l.b16 %v560
      %v632 = vunpack.c.l.b16 %v561
      %v633 = vunpack.c.l.b16 %v562
      %v634 = vunpack.c.l.b16 %v563
      %v635 = vunpack.c.l.b16 %v564
      %v636 = vunpack.c.l.b16 %v565
      %v637 = vunpack.c.l.b16 %v566
      %v638 = vunpack.c.l.b16 %v567
      %v639 = vunpack.c.l.b16 %v568
      %v640 = vunpack.c.l.b16 %v569
      %v641 = vunpack.c.l.b16 %v570
      %v642 = vunpack.c.l.b16 %v571
      %v643 = vunpack.c.l.b16 %v572
      %v644 = vunpack.c.l.b16 %v573
      %v645 = vunpack.c.l.b16 %v574
      %v646 = vunpack.c.l.b16 %v575
      %v647 = vunpack.c.l.b16 %v576
      %v648 = vunpack.c.l.b16 %v577
      %v649 = vunpack.c.l.b16 %v578
      %v650 = vunpack.c.l.b16 %v579
      %v651 = vunpack.c.l.b16 %v580
      %v652 = vunpack.c.l.b16 %v581
      %v653 = vunpack.c.l.b16 %v582
      %v654 = vunpack.c.l.b16 %v583
      %v655 = vunpack.c.l.b16 %v584
      %v656 = vunpack.c.l.b16 %v585
      %v657 = vpack.c.b16 %v626, %v625
      %v658 = vpack.c.b16 %v628, %v627
      %v659 = vpack.c.b16 %v630, %v629
      %v660 = vpack.c.b16 %v632, %v631
      %v661 = vpack.c.b16 %v634, %v633
      %v662 = vpack.c.b16 %v636, %v635
      %v663 = vpack.c.b16 %v638, %v637
      %v664 = vpack.c.b16 %v640, %v639
      %v665 = vpack.c.b16 %v642, %v641
      %v666 = vpack.c.b16 %v644, %v643
      %v667 = vpack.c.b16 %v646, %v645
      %v668 = vpack.c.b16 %v648, %v647
      %v669 = vpack.c.b16 %v650, %v649
      %v670 = vpack.c.b16 %v652, %v651
      %v671 = vpack.c.b16 %v654, %v653
      %v672 = vpack.c.b16 %v656, %v655
      %689 = vmatprep.subr.bf16.mxu0 0
      %690 = vmatpush1.bf16.msra.mxu0 %v657
      %691 = vmatprep.subr.bf16.mxu0 0
      %692 = vmatpush1.bf16.msra.mxu0 %v658
      %693 = vmatprep.subr.bf16.mxu0 0
      %694 = vmatpush1.bf16.msra.mxu0 %v659
      %695 = vmatprep.subr.bf16.mxu0 0
      %696 = vmatpush1.bf16.msra.mxu0 %v660
      %697 = vmatprep.subr.bf16.mxu0 0
      %698 = vmatpush1.bf16.msra.mxu0 %v661
      %699 = vmatprep.subr.bf16.mxu0 0
      %700 = vmatpush1.bf16.msra.mxu0 %v662
      %701 = vmatprep.subr.bf16.mxu0 0
      %702 = vmatpush1.bf16.msra.mxu0 %v663
      %703 = vmatprep.subr.bf16.mxu0 0
      %704 = vmatpush1.bf16.msra.mxu0 %v664
      %705 = vmatprep.subr.bf16.mxu0 0
      %706 = vmatpush1.bf16.msra.mxu0 %v665
      %707 = vmatprep.subr.bf16.mxu0 0
      %708 = vmatpush1.bf16.msra.mxu0 %v666
      %709 = vmatprep.subr.bf16.mxu0 0
      %710 = vmatpush1.bf16.msra.mxu0 %v667
      %711 = vmatprep.subr.bf16.mxu0 0
      %712 = vmatpush1.bf16.msra.mxu0 %v668
      %713 = vmatprep.subr.bf16.mxu0 0
      %714 = vmatpush1.bf16.msra.mxu0 %v669
      %715 = vmatprep.subr.bf16.mxu0 0
      %716 = vmatpush1.bf16.msra.mxu0 %v670
      %717 = vmatprep.subr.bf16.mxu0 0
      %718 = vmatpush1.bf16.msra.mxu0 %v671
      %719 = vmatprep.subr.bf16.mxu0 0
      %720 = vmatpush1.bf16.msra.mxu0 %v672
      %721 = vmatprep.mubr.bf16.mxu0 %v553
      %722 = vmatmul.mubr.bf16.gmra.mrb[0].mxu0 %v552
      %v723 = vpop.f32.mrb[0].mxu0
      %v724 = vadd.f32 %v591, %v723
      %v725 = vpop.f32.mrb[0].mxu0
      %v726 = vpop.f32.mrb[0].mxu0
      %v727 = vadd.f32 %v591, %v726
      %v728 = vpop.f32.mrb[0].mxu0
      %729 = vdwg.mxu0
      %v730 = vadd.f32 %v321, %v724
      %v731 = vadd.f32 %v322, %v727
      %v732 = vpack.c.bf16 %v731, %v730
      %v734 = vunpack.c.l.b16 %v732
      %v735 = vunpack.c.h.b16 %v732
      %v736 = vpack.c.b16 %v734, %v734
      %v737 = vpack.c.b16 %v735, %v735
      %740 = vst [vmem:[%s316] sm:$0xf] %v736
      %741 = vst [vmem:[%s316 + $0x4] sm:$0xf] %v737
      %s742 = smul.u32 2, %s23
      %p743 = scmp.lt.s32.totalorder %s22, 1
      %s744 = scalar_select %p743, %s22, 1
      %p745 = scmp.lt.s32.totalorder %s742, 1
      %s746 = scalar_select %p745, %s742, 1
      %s747 = smul.addr %s744, 2
      %s748 = sadd.s32 %s746, %s747
      %s749 = smul.addr %s748, 4
      %s750 = scalar_lea.vmem %s7, %s749
      // Predicated region
      $region49: #{siglip_vision_forward.10} parent=47 // pred_check
        %p751 = pneg %p204
      $region50: #{siglip_vision_forward.10} parent=47 // pred_check_branch
        %753 = sbr.rel (%p751) target = $region52
      $region51: #{siglip_vision_forward.10} parent=47 // pred_region
        %s754 = smul.u32 2, %s23
      $region52: #{siglip_vision_forward.10} parent=47 // pred_fallthru
        _
    $region48: #{siglip_vision_forward.10} parent=5 // pred_fallthru
      _
    %p755 = scmp.le.s32.totalorder 2, %s13
    // Predicated region
    $region53: #{siglip_vision_forward.10} parent=5 // pred_check
      %p756 = pneg %p755
    $region54: #{siglip_vision_forward.10} parent=5 // pred_check_branch
      %758 = sbr.rel (%p756) target = $region56
    $region55: #{siglip_vision_forward.10} parent=5 // pred_region
      %s759 = ssub.s32 %s13, 2
      // Predicated region
      $region57: #{siglip_vision_forward.10} parent=55 // pred_check
        %p760 = pneg %p210
      $region58: #{siglip_vision_forward.10} parent=55 // pred_check_branch
        %762 = sbr.rel (%p760) target = $region60
      $region59: #{siglip_vision_forward.10} parent=55 // pred_region
        %s763 = smul.u32 2, %s25
        %p764 = scmp.lt.s32.totalorder %s24, 1
        %s765 = scalar_select %p764, %s24, 1
        %p766 = scmp.lt.s32.totalorder %s763, 1
        %s767 = scalar_select %p766, %s763, 1
        %s768 = smul.addr %s765, 2
        %s769 = sadd.s32 %s767, %s768
        %s770 = smul.addr %s769, 4
        %s771 = scalar_lea.vmem %s7, %s770
      $region60: #{siglip_vision_forward.10} parent=55 // pred_fallthru
        _
    $region56: #{siglip_vision_forward.10} parent=5 // pred_fallthru
      _
  $region6: #{siglip_vision_forward.10} parent=0 // loop_footer
    %s17 = sadd.s32 1, %s13
  $region7: #{siglip_vision_forward.10} parent=0 // loop_footer_branch
    %12 = sbr.rel target = $region3
  $region8: #{siglip_vision_forward.10} parent=0 // loop_exit
    _

// kernel: siglip_vision_forward.9
$region0: #{siglip_vision_forward.9}
  #allocation0 [shape = 'u32[]', space=smem, size = 0x4, offset = 0x4, fixed_abs, tag = 'smem constant byte address 0x4 - core index']
  #allocation1 [shape = 'u32[144,128]{1,0:T(1,128)}', space=vmem, size = 0x12000, scoped, tag = 'internal scratch']
  #allocation2 [shape = 'f32[16,128]{1,0:T(8,128)}', space=vmem, size = 0x2000, scoped, tag = 'scratch operand']
  #allocation3 [shape = 'f32[16,4]{1,0:T(8,128)}', space=vmem, size = 0x2000, scoped, tag = 'scratch operand']
  #allocation4 [shape = 'f32[16,4]{1,0:T(8,128)}', space=vmem, size = 0x2000, scoped, tag = 'scratch operand']
  %s0 = inlined_call_operand.vmem [shape: bf16[2,16,384], index: 0, kind: input, shape index: {}, may-alias: {0,1,2}]
  %s1 = inlined_call_operand.vmem [shape: bf16[2,16,384], index: 1, kind: input, shape index: {}, may-alias: {0,1,2}]
  %s2 = inlined_call_operand.vmem [shape: bf16[2,16,384], index: 2, kind: input, shape index: {}, may-alias: {0,1,2}]
  %s3 = inlined_call_operand.vmem [shape: bf16[2,16,128], index: 3, kind: input, shape index: {}, may-alias: {3,6}]
  %s4 = inlined_call_operand.vmem [shape: bf16[128,128], index: 4, kind: input, shape index: {}]
  %s5 = inlined_call_operand.vmem [shape: f32[1,128], index: 5, kind: input, shape index: {}]
  %s6 = inlined_call_operand.vmem [shape: bf16[2,16,128], index: 6, kind: output, shape index: {}, may-alias: {3,6}]
  %s7 = sld [smem:[#allocation0]]
  $region188: #{siglip_vision_forward.9} parent=0
    _
  %s9 = ssub.s32 1, %s7
  %s10 = scalar_select 0, %s9, %s7
  $region1: #{siglip_vision_forward.9} parent=0
    #allocation5 [shape = 'u8[8192]{0}', space=vmem, size = 0x2000, scoped, tag = 'input window, operand 0']
    #allocation6 [shape = 'u8[8192]{0}', space=vmem, size = 0x2000, scoped, tag = 'input window, operand 1']
    #allocation7 [shape = 'u8[8192]{0}', space=vmem, size = 0x2000, scoped, tag = 'input window, operand 2']
    loop: start=0, step=1, limit=4
    $region2: #{siglip_vision_forward.9} parent=1 // loop_pre_header
      _
    $region3: #{siglip_vision_forward.9} parent=1 // loop_header
      %s12 = sphi 0, %s16
      %p13 = scmp.ge.s32.totalorder %s12, 4
      %s19 = sphi 0, %s38
      %s20 = sphi 0, %s34
      %s21 = sphi 0, %s30
      %s22 = sphi 0, %s19
      %s23 = sphi 0, %s20
      %s24 = sphi 0, %s21
      %s25 = sphi 0, %s22
      %s26 = sphi 0, %s23
      %s27 = sphi 0, %s24
      %s43 = sphi 0, %s45
      %s46 = sphi 0, %s43
      %s47 = sphi 0, %s46
      %s63 = sphi 0, %s47
      %s71 = sphi 0, %s73
      %s74 = sphi 0, %s71
      %s75 = sphi 0, %s74
      %s91 = sphi 0, %s75
      %s99 = sphi 0, %s101
      %s102 = sphi 0, %s99
      %s103 = sphi 0, %s102
      %s119 = sphi 0, %s103
      %s127 = sphi 0, %s129
      %s130 = sphi 0, %s127
      %s131 = sphi 0, %s130
      %s147 = sphi 0, %s131
      %s151 = sphi 0, %s151
      %s153 = sphi 0, %s151
      %s154 = sphi 0, %s153
      %s168 = sphi 0, %s154
      %s172 = sphi 0, %s172
      %s174 = sphi 0, %s172
      %s175 = sphi 0, %s174
      %s189 = sphi 0, %s175
      %s197 = sphi 0, %s199
      %s200 = sphi 0, %s197
      %s201 = sphi 0, %s200
      %s217 = sphi 0, %s201
    $region4: #{siglip_vision_forward.9} parent=1 // loop_header_branch
      %15 = sbr.rel (%p13) target = $region8
    $region5: #{siglip_vision_forward.9} parent=1 // loop_body
      %s17 = ssub.s32 %s12, 1
      %s18 = ssub.s32 %s12, 2
      %s28 = sadd.s32 1, %s21
      %p29 = scmp.ge.s32.totalorder %s28, 1
      %s30 = scalar_select %p29, 0, %s28
      %s31 = sadd.s32 1, %s20
      %s32 = scalar_select %p29, %s31, %s20
      %p33 = scmp.ge.s32.totalorder %s32, 1
      %s34 = scalar_select %p33, 0, %s32
      %s35 = sadd.s32 1, %s19
      %s36 = scalar_select %p33, %s35, %s19
      %p37 = scmp.ge.s32.totalorder %s36, 2
      %s38 = scalar_select %p37, 0, %s36
      %s39 = ssub.s32 %s19, %s38
      %s40 = ssub.s32 %s20, %s34
      %s41 = sor.u32 %s39, %s40
      %p42 = scmp.eq.s32.totalorder %s41, 0
      %s44 = sadd.s32 %s43, 1
      %s45 = scalar_select %p42, %s43, %s44
      %p48 = pneg %p42
      %p49 = scmp.eq.s32.totalorder %s12, 1
      %p50 = por %p48, %p49
      %p51 = scmp.ne.s32.totalorder %s43, %s46
      %p52 = scmp.eq.s32.totalorder %s12, 0
      %p53 = por %p51, %p52
      %p54 = scmp.ne.s32.totalorder %s43, %s46
      %p55 = scmp.eq.s32.totalorder %s17, 1
      %p56 = por %p54, %p55
      %p57 = scmp.ne.s32.totalorder %s46, %s47
      %p58 = scmp.eq.s32.totalorder %s17, 0
      %p59 = por %p57, %p58
      %p60 = scmp.ne.s32.totalorder %s46, %s47
      %p61 = scmp.eq.s32.totalorder %s18, 1
      %p62 = por %p60, %p61
      %p64 = scmp.ne.s32.totalorder %s47, %s63
      %p65 = scmp.eq.s32.totalorder %s18, 0
      %p66 = por %p64, %p65
      %s67 = ssub.s32 %s19, %s38
      %s68 = ssub.s32 %s21, %s30
      %s69 = sor.u32 %s67, %s68
      %p70 = scmp.eq.s32.totalorder %s69, 0
      %s72 = sadd.s32 %s71, 1
      %s73 = scalar_select %p70, %s71, %s72
      %p76 = pneg %p70
      %p77 = scmp.eq.s32.totalorder %s12, 1
      %p78 = por %p76, %p77
      %p79 = scmp.ne.s32.totalorder %s71, %s74
      %p80 = scmp.eq.s32.totalorder %s12, 0
      %p81 = por %p79, %p80
      %p82 = scmp.ne.s32.totalorder %s71, %s74
      %p83 = scmp.eq.s32.totalorder %s17, 1
      %p84 = por %p82, %p83
      %p85 = scmp.ne.s32.totalorder %s74, %s75
      %p86 = scmp.eq.s32.totalorder %s17, 0
      %p87 = por %p85, %p86
      %p88 = scmp.ne.s32.totalorder %s74, %s75
      %p89 = scmp.eq.s32.totalorder %s18, 1
      %p90 = por %p88, %p89
      %p92 = scmp.ne.s32.totalorder %s75, %s91
      %p93 = scmp.eq.s32.totalorder %s18, 0
      %p94 = por %p92, %p93
      %s95 = ssub.s32 %s19, %s38
      %s96 = ssub.s32 %s21, %s30
      %s97 = sor.u32 %s95, %s96
      %p98 = scmp.eq.s32.totalorder %s97, 0
      %s100 = sadd.s32 %s99, 1
      %s101 = scalar_select %p98, %s99, %s100
      %p104 = pneg %p98
      %p105 = scmp.eq.s32.totalorder %s12, 1
      %p106 = por %p104, %p105
      %p107 = scmp.ne.s32.totalorder %s99, %s102
      %p108 = scmp.eq.s32.totalorder %s12, 0
      %p109 = por %p107, %p108
      %p110 = scmp.ne.s32.totalorder %s99, %s102
      %p111 = scmp.eq.s32.totalorder %s17, 1
      %p112 = por %p110, %p111
      %p113 = scmp.ne.s32.totalorder %s102, %s103
      %p114 = scmp.eq.s32.totalorder %s17, 0
      %p115 = por %p113, %p114
      %p116 = scmp.ne.s32.totalorder %s102, %s103
      %p117 = scmp.eq.s32.totalorder %s18, 1
      %p118 = por %p116, %p117
      %p120 = scmp.ne.s32.totalorder %s103, %s119
      %p121 = scmp.eq.s32.totalorder %s18, 0
      %p122 = por %p120, %p121
      %s123 = ssub.s32 %s19, %s38
      %s124 = ssub.s32 %s20, %s34
      %s125 = sor.u32 %s123, %s124
      %p126 = scmp.eq.s32.totalorder %s125, 0
      %s128 = sadd.s32 %s127, 1
      %s129 = scalar_select %p126, %s127, %s128
      %p132 = pneg %p126
      %p133 = scmp.eq.s32.totalorder %s12, 1
      %p134 = por %p132, %p133
      %p135 = scmp.ne.s32.totalorder %s127, %s130
      %p136 = scmp.eq.s32.totalorder %s12, 0
      %p137 = por %p135, %p136
      %p138 = scmp.ne.s32.totalorder %s127, %s130
      %p139 = scmp.eq.s32.totalorder %s17, 1
      %p140 = por %p138, %p139
      %p141 = scmp.ne.s32.totalorder %s130, %s131
      %p142 = scmp.eq.s32.totalorder %s17, 0
      %p143 = por %p141, %p142
      %p144 = scmp.ne.s32.totalorder %s130, %s131
      %p145 = scmp.eq.s32.totalorder %s18, 1
      %p146 = por %p144, %p145
      %p148 = scmp.ne.s32.totalorder %s131, %s147
      %p149 = scmp.eq.s32.totalorder %s18, 0
      %p150 = por %p148, %p149
      %s152 = sadd.s32 %s151, 1
      %p155 = scmp.eq.s32.totalorder %s12, 1
      %p156 = scmp.ne.s32.totalorder %s151, %s153
      %p157 = scmp.eq.s32.totalorder %s12, 0
      %p158 = por %p156, %p157
      %p159 = scmp.ne.s32.totalorder %s151, %s153
      %p160 = scmp.eq.s32.totalorder %s17, 1
      %p161 = por %p159, %p160
      %p162 = scmp.ne.s32.totalorder %s153, %s154
      %p163 = scmp.eq.s32.totalorder %s17, 0
      %p164 = por %p162, %p163
      %p165 = scmp.ne.s32.totalorder %s153, %s154
      %p166 = scmp.eq.s32.totalorder %s18, 1
      %p167 = por %p165, %p166
      %p169 = scmp.ne.s32.totalorder %s154, %s168
      %p170 = scmp.eq.s32.totalorder %s18, 0
      %p171 = por %p169, %p170
      %s173 = sadd.s32 %s172, 1
      %p176 = scmp.eq.s32.totalorder %s12, 1
      %p177 = scmp.ne.s32.totalorder %s172, %s174
      %p178 = scmp.eq.s32.totalorder %s12, 0
      %p179 = por %p177, %p178
      %p180 = scmp.ne.s32.totalorder %s172, %s174
      %p181 = scmp.eq.s32.totalorder %s17, 1
      %p182 = por %p180, %p181
      %p183 = scmp.ne.s32.totalorder %s174, %s175
      %p184 = scmp.eq.s32.totalorder %s17, 0
      %p185 = por %p183, %p184
      %p186 = scmp.ne.s32.totalorder %s174, %s175
      %p187 = scmp.eq.s32.totalorder %s18, 1
      %p188 = por %p186, %p187
      %p190 = scmp.ne.s32.totalorder %s175, %s189
      %p191 = scmp.eq.s32.totalorder %s18, 0
      %p192 = por %p190, %p191
      %s193 = ssub.s32 %s19, %s38
      %s194 = ssub.s32 %s20, %s34
      %s195 = sor.u32 %s193, %s194
      %p196 = scmp.eq.s32.totalorder %s195, 0
      %s198 = sadd.s32 %s197, 1
      %s199 = scalar_select %p196, %s197, %s198
      %p202 = pneg %p196
      %p203 = scmp.eq.s32.totalorder %s12, 1
      %p204 = por %p202, %p203
      %p205 = scmp.ne.s32.totalorder %s197, %s200
      %p206 = scmp.eq.s32.totalorder %s12, 0
      %p207 = por %p205, %p206
      %p208 = scmp.ne.s32.totalorder %s197, %s200
      %p209 = scmp.eq.s32.totalorder %s17, 1
      %p210 = por %p208, %p209
      %p211 = scmp.ne.s32.totalorder %s200, %s201
      %p212 = scmp.eq.s32.totalorder %s17, 0
      %p213 = por %p211, %p212
      %p214 = scmp.ne.s32.totalorder %s200, %s201
      %p215 = scmp.eq.s32.totalorder %s18, 1
      %p216 = por %p214, %p215
      %p218 = scmp.ne.s32.totalorder %s201, %s217
      %p219 = scmp.eq.s32.totalorder %s18, 0
      %p220 = por %p218, %p219
      %p221 = scmp.le.s32.totalorder 1, %s12
      %p222 = scmp.lt.s32.totalorder %s12, 3
      %p223 = pnand %p221, %p222
      %p224 = pneg %p223
      // Predicated region
      $region9: #{siglip_vision_forward.9} parent=5 // pred_check
        _
      $region10: #{siglip_vision_forward.9} parent=5 // pred_check_branch
        %226 = sbr.rel (%p223) target = $region12
      $region11: #{siglip_vision_forward.9} parent=5 // pred_region
        %s227 = ssub.s32 %s12, 1
        // Predicated region
        $region13: #{siglip_vision_forward.9} parent=11 // pred_check
          %p228 = pneg %p164
        $region14: #{siglip_vision_forward.9} parent=11 // pred_check_branch
          %230 = sbr.rel (%p228) target = $region16
        $region15: #{siglip_vision_forward.9} parent=11 // pred_region
          _
        $region16: #{siglip_vision_forward.9} parent=11 // pred_fallthru
          _
        // Predicated region
        $region17: #{siglip_vision_forward.9} parent=11 // pred_check
          %p231 = pneg %p185
        $region18: #{siglip_vision_forward.9} parent=11 // pred_check_branch
          %233 = sbr.rel (%p231) target = $region20
        $region19: #{siglip_vision_forward.9} parent=11 // pred_region
          _
        $region20: #{siglip_vision_forward.9} parent=11 // pred_fallthru
          _
      $region12: #{siglip_vision_forward.9} parent=5 // pred_fallthru
        _
      %p234 = scmp.lt.s32.totalorder %s12, 2
      // Predicated region
      $region21: #{siglip_vision_forward.9} parent=5 // pred_check
        %p235 = pneg %p234
      $region22: #{siglip_vision_forward.9} parent=5 // pred_check_branch
        %237 = sbr.rel (%p235) target = $region24
      $region23: #{siglip_vision_forward.9} parent=5 // pred_region
        // Predicated region
        $region25: #{siglip_vision_forward.9} parent=23 // pred_check
          %p238 = pneg %p53
        $region26: #{siglip_vision_forward.9} parent=23 // pred_check_branch
          %240 = sbr.rel (%p238) target = $region28
        $region27: #{siglip_vision_forward.9} parent=23 // pred_region
          %s241 = sand.u32 %s43, 1
          %s242 = sand.u32 %s43, 1
          %s243 = smul.addr %s242, 8
          %s244 = scalar_lea.vmem [#allocation5], %s243
          %s245 = smul.u32 2, %s20
          %s246 = smul.addr %s245, 3
          %s247 = smul.addr %s19, 6
          %s248 = sadd.s32 %s246, %s247
          %s249 = smul.addr %s248, 4
          %s250 = scalar_lea.vmem %s0, %s249
          // Predicated region
          $region29: #{siglip_vision_forward.9} parent=27 // pred_check
            _
          $region30: #{siglip_vision_forward.9} parent=27 // pred_check_branch
            %252 = sbr.rel (0) target = $region32
          $region31: #{siglip_vision_forward.9} parent=27 // pred_region
            // Predicated region
            $region33: #{siglip_vision_forward.9} parent=31 // pred_check
              _
            $region34: #{siglip_vision_forward.9} parent=31 // pred_check_branch
              %254 = sbr.rel target = $region36
            $region35: #{siglip_vision_forward.9} parent=31 // pred_region
              // Predicated region
              $region48: #{siglip_vision_forward.9} parent=35 // pred_check
                _
              $region49: #{siglip_vision_forward.9} parent=35 // pred_check_branch
                %271 = sbr.rel (0) target = $region51
              $region50: #{siglip_vision_forward.9} parent=35 // pred_region
                loop: start=0, step=1, limit=1
                $region52: #{siglip_vision_forward.9} parent=50 // loop_pre_header
                  _
                $region53: #{siglip_vision_forward.9} parent=50 // loop_header
                  %s273 = sphi 0, %s277
                  %p274 = scmp.ge.s32.totalorder %s273, 1
                  %s278 = sphi %s250, %s250
                  %s279 = sphi %s244, %s244
                $region54: #{siglip_vision_forward.9} parent=50 // loop_header_branch
                  %276 = sbr.rel (%p274) target = $region58
                $region55: #{siglip_vision_forward.9} parent=50 // loop_body
                  _
                $region56: #{siglip_vision_forward.9} parent=50 // loop_footer
                  %s277 = sadd.s32 1, %s273
                $region57: #{siglip_vision_forward.9} parent=50 // loop_footer_branch
                  %272 = sbr.rel target = $region53
                $region58: #{siglip_vision_forward.9} parent=50 // loop_exit
                  _
                loop: start=0, step=1, limit=1
                $region59: #{siglip_vision_forward.9} parent=50 // loop_pre_header
                  _
                $region60: #{siglip_vision_forward.9} parent=50 // loop_header
                  %s282 = sphi 0, %s286
                  %p283 = scmp.ge.s32.totalorder %s282, 1
                  %s287 = sphi %s250, %s250
                  %s288 = sphi %s244, %s244
                $region61: #{siglip_vision_forward.9} parent=50 // loop_header_branch
                  %285 = sbr.rel (%p283) target = $region65
                $region62: #{siglip_vision_forward.9} parent=50 // loop_body
                  %v289 = vld [vmem:[%s287] sm:$0xf]
                  %290 = vst [vmem:[%s288] sm:$0xf] %v289
                  %v291 = vld [vmem:[%s287 + $0xc] sm:$0xf]
                  %292 = vst [vmem:[%s288 + $0x4] sm:$0xf] %v291
                $region63: #{siglip_vision_forward.9} parent=50 // loop_footer
                  %s286 = sadd.s32 1, %s282
                $region64: #{siglip_vision_forward.9} parent=50 // loop_footer_branch
                  %281 = sbr.rel target = $region60
                $region65: #{siglip_vision_forward.9} parent=50 // loop_exit
                  _
              $region51: #{siglip_vision_forward.9} parent=35 // pred_fallthru
                _
            $region36: #{siglip_vision_forward.9} parent=31 // pred_fallthru
              _
            // Predicated region
            $region37: #{siglip_vision_forward.9} parent=31 // pred_check
              _
            $region38: #{siglip_vision_forward.9} parent=31 // pred_check_branch
              %256 = sbr.rel (0) target = $region40
            $region39: #{siglip_vision_forward.9} parent=31 // pred_region
              loop: start=0, step=1, limit=1
              $region41: #{siglip_vision_forward.9} parent=39 // loop_pre_header
                _
              $region42: #{siglip_vision_forward.9} parent=39 // loop_header
                %s259 = sphi 0, %s263
                %p260 = scmp.ge.s32.totalorder %s259, 1
                %s264 = sphi %s250, %s250
                %s265 = sphi %s244, %s244
              $region43: #{siglip_vision_forward.9} parent=39 // loop_header_branch
                %262 = sbr.rel (%p260) target = $region47
              $region44: #{siglip_vision_forward.9} parent=39 // loop_body
                %v266 = vld [vmem:[%s264] sm:$0xf]
                %267 = vst [vmem:[%s265] sm:$0xf] %v266
                %v268 = vld [vmem:[%s264 + $0xc] sm:$0xf]
                %269 = vst [vmem:[%s265 + $0x4] sm:$0xf] %v268
              $region45: #{siglip_vision_forward.9} parent=39 // loop_footer
                %s263 = sadd.s32 1, %s259
              $region46: #{siglip_vision_forward.9} parent=39 // loop_footer_branch
                %258 = sbr.rel target = $region42
              $region47: #{siglip_vision_forward.9} parent=39 // loop_exit
                _
            $region40: #{siglip_vision_forward.9} parent=31 // pred_fallthru
              _
          $region32: #{siglip_vision_forward.9} parent=27 // pred_fallthru
            _
          %293 = vnop
        $region28: #{siglip_vision_forward.9} parent=23 // pred_fallthru
          _
        // Predicated region
        $region66: #{siglip_vision_forward.9} parent=23 // pred_check
          %p294 = pneg %p81
        $region67: #{siglip_vision_forward.9} parent=23 // pred_check_branch
          %296 = sbr.rel (%p294) target = $region69
        $region68: #{siglip_vision_forward.9} parent=23 // pred_region
          %s297 = sand.u32 %s71, 1
          %s298 = sand.u32 %s71, 1
          %s299 = smul.addr %s298, 8
          %s300 = scalar_lea.vmem [#allocation6], %s299
          %s301 = smul.u32 2, %s21
          %s302 = smul.addr %s301, 3
          %s303 = sadd.s32 1, %s302
          %s304 = smul.addr %s19, 6
          %s305 = sadd.s32 %s303, %s304
          %s306 = smul.addr %s305, 4
          %s307 = scalar_lea.vmem %s1, %s306
          // Predicated region
          $region70: #{siglip_vision_forward.9} parent=68 // pred_check
            _
          $region71: #{siglip_vision_forward.9} parent=68 // pred_check_branch
            %309 = sbr.rel (0) target = $region73
          $region72: #{siglip_vision_forward.9} parent=68 // pred_region
            // Predicated region
            $region74: #{siglip_vision_forward.9} parent=72 // pred_check
              _
            $region75: #{siglip_vision_forward.9} parent=72 // pred_check_branch
              %311 = sbr.rel target = $region77
            $region76: #{siglip_vision_forward.9} parent=72 // pred_region
              // Predicated region
              $region89: #{siglip_vision_forward.9} parent=76 // pred_check
                _
              $region90: #{siglip_vision_forward.9} parent=76 // pred_check_branch
                %328 = sbr.rel (0) target = $region92
              $region91: #{siglip_vision_forward.9} parent=76 // pred_region
                loop: start=0, step=1, limit=1
                $region93: #{siglip_vision_forward.9} parent=91 // loop_pre_header
                  _
                $region94: #{siglip_vision_forward.9} parent=91 // loop_header
                  %s330 = sphi 0, %s334
                  %p331 = scmp.ge.s32.totalorder %s330, 1
                  %s335 = sphi %s307, %s307
                  %s336 = sphi %s300, %s300
                $region95: #{siglip_vision_forward.9} parent=91 // loop_header_branch
                  %333 = sbr.rel (%p331) target = $region99
                $region96: #{siglip_vision_forward.9} parent=91 // loop_body
                  _
                $region97: #{siglip_vision_forward.9} parent=91 // loop_footer
                  %s334 = sadd.s32 1, %s330
                $region98: #{siglip_vision_forward.9} parent=91 // loop_footer_branch
                  %329 = sbr.rel target = $region94
                $region99: #{siglip_vision_forward.9} parent=91 // loop_exit
                  _
                loop: start=0, step=1, limit=1
                $region100: #{siglip_vision_forward.9} parent=91 // loop_pre_header
                  _
                $region101: #{siglip_vision_forward.9} parent=91 // loop_header
                  %s339 = sphi 0, %s343
                  %p340 = scmp.ge.s32.totalorder %s339, 1
                  %s344 = sphi %s307, %s307
                  %s345 = sphi %s300, %s300
                $region102: #{siglip_vision_forward.9} parent=91 // loop_header_branch
                  %342 = sbr.rel (%p340) target = $region106
                $region103: #{siglip_vision_forward.9} parent=91 // loop_body
                  %v346 = vld [vmem:[%s344] sm:$0xf]
                  %347 = vst [vmem:[%s345] sm:$0xf] %v346
                  %v348 = vld [vmem:[%s344 + $0xc] sm:$0xf]
                  %349 = vst [vmem:[%s345 + $0x4] sm:$0xf] %v348
                $region104: #{siglip_vision_forward.9} parent=91 // loop_footer
                  %s343 = sadd.s32 1, %s339
                $region105: #{siglip_vision_forward.9} parent=91 // loop_footer_branch
                  %338 = sbr.rel target = $region101
                $region106: #{siglip_vision_forward.9} parent=91 // loop_exit
                  _
              $region92: #{siglip_vision_forward.9} parent=76 // pred_fallthru
                _
            $region77: #{siglip_vision_forward.9} parent=72 // pred_fallthru
              _
            // Predicated region
            $region78: #{siglip_vision_forward.9} parent=72 // pred_check
              _
            $region79: #{siglip_vision_forward.9} parent=72 // pred_check_branch
              %313 = sbr.rel (0) target = $region81
            $region80: #{siglip_vision_forward.9} parent=72 // pred_region
              loop: start=0, step=1, limit=1
              $region82: #{siglip_vision_forward.9} parent=80 // loop_pre_header
                _
              $region83: #{siglip_vision_forward.9} parent=80 // loop_header
                %s316 = sphi 0, %s320
                %p317 = scmp.ge.s32.totalorder %s316, 1
                %s321 = sphi %s307, %s307
                %s322 = sphi %s300, %s300
              $region84: #{siglip_vision_forward.9} parent=80 // loop_header_branch
                %319 = sbr.rel (%p317) target = $region88
              $region85: #{siglip_vision_forward.9} parent=80 // loop_body
                %v323 = vld [vmem:[%s321] sm:$0xf]
                %324 = vst [vmem:[%s322] sm:$0xf] %v323
                %v325 = vld [vmem:[%s321 + $0xc] sm:$0xf]
                %326 = vst [vmem:[%s322 + $0x4] sm:$0xf] %v325
              $region86: #{siglip_vision_forward.9} parent=80 // loop_footer
                %s320 = sadd.s32 1, %s316
              $region87: #{siglip_vision_forward.9} parent=80 // loop_footer_branch
                %315 = sbr.rel target = $region83
              $region88: #{siglip_vision_forward.9} parent=80 // loop_exit
                _
            $region81: #{siglip_vision_forward.9} parent=72 // pred_fallthru
              _
          $region73: #{siglip_vision_forward.9} parent=68 // pred_fallthru
            _
          %350 = vnop
        $region69: #{siglip_vision_forward.9} parent=23 // pred_fallthru
          _
        // Predicated region
        $region107: #{siglip_vision_forward.9} parent=23 // pred_check
          %p351 = pneg %p109
        $region108: #{siglip_vision_forward.9} parent=23 // pred_check_branch
          %353 = sbr.rel (%p351) target = $region110
        $region109: #{siglip_vision_forward.9} parent=23 // pred_region
          %s354 = sand.u32 %s99, 1
          %s355 = sand.u32 %s99, 1
          %s356 = smul.addr %s355, 8
          %s357 = scalar_lea.vmem [#allocation7], %s356
          %s358 = smul.u32 2, %s21
          %s359 = smul.addr %s358, 3
          %s360 = sadd.s32 2, %s359
          %s361 = smul.addr %s19, 6
          %s362 = sadd.s32 %s360, %s361
          %s363 = smul.addr %s362, 4
          %s364 = scalar_lea.vmem %s2, %s363
          // Predicated region
          $region111: #{siglip_vision_forward.9} parent=109 // pred_check
            _
          $region112: #{siglip_vision_forward.9} parent=109 // pred_check_branch
            %366 = sbr.rel (0) target = $region114
          $region113: #{siglip_vision_forward.9} parent=109 // pred_region
            // Predicated region
            $region115: #{siglip_vision_forward.9} parent=113 // pred_check
              _
            $region116: #{siglip_vision_forward.9} parent=113 // pred_check_branch
              %368 = sbr.rel target = $region118
            $region117: #{siglip_vision_forward.9} parent=113 // pred_region
              // Predicated region
              $region130: #{siglip_vision_forward.9} parent=117 // pred_check
                _
              $region131: #{siglip_vision_forward.9} parent=117 // pred_check_branch
                %385 = sbr.rel (0) target = $region133
              $region132: #{siglip_vision_forward.9} parent=117 // pred_region
                loop: start=0, step=1, limit=1
                $region134: #{siglip_vision_forward.9} parent=132 // loop_pre_header
                  _
                $region135: #{siglip_vision_forward.9} parent=132 // loop_header
                  %s387 = sphi 0, %s391
                  %p388 = scmp.ge.s32.totalorder %s387, 1
                  %s392 = sphi %s364, %s364
                  %s393 = sphi %s357, %s357
                $region136: #{siglip_vision_forward.9} parent=132 // loop_header_branch
                  %390 = sbr.rel (%p388) target = $region140
                $region137: #{siglip_vision_forward.9} parent=132 // loop_body
                  _
                $region138: #{siglip_vision_forward.9} parent=132 // loop_footer
                  %s391 = sadd.s32 1, %s387
                $region139: #{siglip_vision_forward.9} parent=132 // loop_footer_branch
                  %386 = sbr.rel target = $region135
                $region140: #{siglip_vision_forward.9} parent=132 // loop_exit
                  _
                loop: start=0, step=1, limit=1
                $region141: #{siglip_vision_forward.9} parent=132 // loop_pre_header
                  _
                $region142: #{siglip_vision_forward.9} parent=132 // loop_header
                  %s396 = sphi 0, %s400
                  %p397 = scmp.ge.s32.totalorder %s396, 1
                  %s401 = sphi %s364, %s364
                  %s402 = sphi %s357, %s357
                $region143: #{siglip_vision_forward.9} parent=132 // loop_header_branch
                  %399 = sbr.rel (%p397) target = $region147
                $region144: #{siglip_vision_forward.9} parent=132 // loop_body
                  %v403 = vld [vmem:[%s401] sm:$0xf]
                  %404 = vst [vmem:[%s402] sm:$0xf] %v403
                  %v405 = vld [vmem:[%s401 + $0xc] sm:$0xf]
                  %406 = vst [vmem:[%s402 + $0x4] sm:$0xf] %v405
                $region145: #{siglip_vision_forward.9} parent=132 // loop_footer
                  %s400 = sadd.s32 1, %s396
                $region146: #{siglip_vision_forward.9} parent=132 // loop_footer_branch
                  %395 = sbr.rel target = $region142
                $region147: #{siglip_vision_forward.9} parent=132 // loop_exit
                  _
              $region133: #{siglip_vision_forward.9} parent=117 // pred_fallthru
                _
            $region118: #{siglip_vision_forward.9} parent=113 // pred_fallthru
              _
            // Predicated region
            $region119: #{siglip_vision_forward.9} parent=113 // pred_check
              _
            $region120: #{siglip_vision_forward.9} parent=113 // pred_check_branch
              %370 = sbr.rel (0) target = $region122
            $region121: #{siglip_vision_forward.9} parent=113 // pred_region
              loop: start=0, step=1, limit=1
              $region123: #{siglip_vision_forward.9} parent=121 // loop_pre_header
                _
              $region124: #{siglip_vision_forward.9} parent=121 // loop_header
                %s373 = sphi 0, %s377
                %p374 = scmp.ge.s32.totalorder %s373, 1
                %s378 = sphi %s364, %s364
                %s379 = sphi %s357, %s357
              $region125: #{siglip_vision_forward.9} parent=121 // loop_header_branch
                %376 = sbr.rel (%p374) target = $region129
              $region126: #{siglip_vision_forward.9} parent=121 // loop_body
                %v380 = vld [vmem:[%s378] sm:$0xf]
                %381 = vst [vmem:[%s379] sm:$0xf] %v380
                %v382 = vld [vmem:[%s378 + $0xc] sm:$0xf]
                %383 = vst [vmem:[%s379 + $0x4] sm:$0xf] %v382
              $region127: #{siglip_vision_forward.9} parent=121 // loop_footer
                %s377 = sadd.s32 1, %s373
              $region128: #{siglip_vision_forward.9} parent=121 // loop_footer_branch
                %372 = sbr.rel target = $region124
              $region129: #{siglip_vision_forward.9} parent=121 // loop_exit
                _
            $region122: #{siglip_vision_forward.9} parent=113 // pred_fallthru
              _
          $region114: #{siglip_vision_forward.9} parent=109 // pred_fallthru
            _
          %407 = vnop
        $region110: #{siglip_vision_forward.9} parent=23 // pred_fallthru
          _
        // Predicated region
        $region148: #{siglip_vision_forward.9} parent=23 // pred_check
          %p408 = pneg %p137
        $region149: #{siglip_vision_forward.9} parent=23 // pred_check_branch
          %410 = sbr.rel (%p408) target = $region151
        $region150: #{siglip_vision_forward.9} parent=23 // pred_region
          %s411 = smul.u32 2, %s20
          %p412 = scmp.lt.s32.totalorder %s19, 1
          %s413 = scalar_select %p412, %s19, 1
          %p414 = scmp.lt.s32.totalorder %s411, 1
          %s415 = scalar_select %p414, %s411, 1
          %s416 = smul.addr %s413, 2
          %s417 = sadd.s32 %s415, %s416
          %s418 = smul.addr %s417, 4
          %s419 = scalar_lea.vmem %s3, %s418
          %s420 = smul.u32 2, %s20
        $region151: #{siglip_vision_forward.9} parent=23 // pred_fallthru
          _
      $region24: #{siglip_vision_forward.9} parent=5 // pred_fallthru
        _
      %p421 = scmp.le.s32.totalorder 1, %s12
      %p422 = scmp.lt.s32.totalorder %s12, 3
      %p423 = pnand %p421, %p422
      %p424 = pneg %p423
      // Predicated region
      $region152: #{siglip_vision_forward.9} parent=5 // pred_check
        _
      $region153: #{siglip_vision_forward.9} parent=5 // pred_check_branch
        %426 = sbr.rel (%p423) target = $region155
      $region154: #{siglip_vision_forward.9} parent=5 // pred_region
        %s427 = ssub.s32 %s12, 1
        %s428 = sand.u32 %s46, 1
        %s429 = sand.u32 %s46, 1
        %s430 = smul.addr %s429, 8
        %s431 = scalar_lea.vmem [#allocation5], %s430
        // Predicated region
        $region156: #{siglip_vision_forward.9} parent=154 // pred_check
          %p432 = pneg %p59
        $region157: #{siglip_vision_forward.9} parent=154 // pred_check_branch
          %434 = sbr.rel (%p432) target = $region159
        $region158: #{siglip_vision_forward.9} parent=154 // pred_region
          _
        $region159: #{siglip_vision_forward.9} parent=154 // pred_fallthru
          _
        %s435 = sand.u32 %s74, 1
        %s436 = sand.u32 %s74, 1
        %s437 = smul.addr %s436, 8
        %s438 = scalar_lea.vmem [#allocation6], %s437
        // Predicated region
        $region160: #{siglip_vision_forward.9} parent=154 // pred_check
          %p439 = pneg %p87
        $region161: #{siglip_vision_forward.9} parent=154 // pred_check_branch
          %441 = sbr.rel (%p439) target = $region163
        $region162: #{siglip_vision_forward.9} parent=154 // pred_region
          _
        $region163: #{siglip_vision_forward.9} parent=154 // pred_fallthru
          _
        %s442 = sand.u32 %s102, 1
        %s443 = sand.u32 %s102, 1
        %s444 = smul.addr %s443, 8
        %s445 = scalar_lea.vmem [#allocation7], %s444
        // Predicated region
        $region164: #{siglip_vision_forward.9} parent=154 // pred_check
          %p446 = pneg %p115
        $region165: #{siglip_vision_forward.9} parent=154 // pred_check_branch
          %448 = sbr.rel (%p446) target = $region167
        $region166: #{siglip_vision_forward.9} parent=154 // pred_region
          _
        $region167: #{siglip_vision_forward.9} parent=154 // pred_fallthru
          _
        %s449 = sand.u32 %s46, 1
        %s450 = sand.u32 %s46, 1
        %s451 = smul.addr %s450, 8
        %s452 = scalar_lea.vmem [#allocation5], %s451
        %p453 = pneg %p59
        %p454 = pneg %p56
        %s455 = sand.u32 %s74, 1
        %s456 = sand.u32 %s74, 1
        %s457 = smul.addr %s456, 8
        %s458 = scalar_lea.vmem [#allocation6], %s457
        %p459 = pneg %p87
        %p460 = pneg %p84
        %s461 = sand.u32 %s102, 1
        %s462 = sand.u32 %s102, 1
        %s463 = smul.addr %s462, 8
        %s464 = scalar_lea.vmem [#allocation7], %s463
        %p465 = pneg %p115
        %p466 = pneg %p112
        %s467 = smul.u32 2, %s23
        %p468 = scmp.lt.s32.totalorder %s22, 1
        %s469 = scalar_select %p468, %s22, 1
        %p470 = scmp.lt.s32.totalorder %s467, 1
        %s471 = scalar_select %p470, %s467, 1
        %s472 = smul.addr %s469, 2
        %s473 = sadd.s32 %s471, %s472
        %s474 = smul.addr %s473, 4
        %s475 = scalar_lea.vmem %s3, %s474
        %p476 = pneg %p143
        %p477 = pneg %p140
        %p478 = pneg %p164
        %p479 = pneg %p161
        %p480 = pneg %p185
        %p481 = pneg %p182
        %p482 = pneg %p213
        %p483 = pneg %p210
        %s484 = smul.u32 2, %s23
        %p485 = scmp.lt.s32.totalorder %s22, 1
        %s486 = scalar_select %p485, %s22, 1
        %p487 = scmp.lt.s32.totalorder %s484, 1
        %s488 = scalar_select %p487, %s484, 1
        %s489 = smul.addr %s486, 2
        %s490 = sadd.s32 %s488, %s489
        %s491 = smul.addr %s490, 4
        %s492 = scalar_lea.vmem %s6, %s491
        %s493 = smul.u32 2, %s23
        %s494 = smul.u32 2, %s24
        %s495 = smul.u32 2, %s24
        %s496 = smul.u32 2, %s23
        %p497 = scmp.lt.s32.totalorder %s22, 1
        %s498 = scalar_select %p497, %s22, 1
        %p499 = scmp.lt.s32.totalorder %s496, 1
        %s500 = scalar_select %p499, %s496, 1
        %s501 = smul.addr %s498, 2
        %s502 = sadd.s32 %s500, %s501
        %s503 = smul.addr %s502, 4
        %s504 = scalar_lea.vmem %s3, %s503
        %s505 = smul.u32 2, %s23
        %s506 = smul.u32 2, %s23
        %p507 = scmp.lt.s32.totalorder %s22, 1
        %s508 = scalar_select %p507, %s22, 1
        %p509 = scmp.lt.s32.totalorder %s506, 1
        %s510 = scalar_select %p509, %s506, 1
        %s511 = smul.addr %s508, 2
        %s512 = sadd.s32 %s510, %s511
        %s513 = smul.addr %s512, 4
        %s514 = scalar_lea.vmem %s6, %s513
        %s515 = smul.u32 2, %s23
        %p517 = scmp.eq.s32.totalorder %s24, 0
        // Predicated region
        $region168: #{siglip_vision_forward.9} parent=154 // pred_check
          %p518 = pneg %p517
        $region169: #{siglip_vision_forward.9} parent=154 // pred_check_branch
          %520 = sbr.rel (%p518) target = $region171
        $region170: #{siglip_vision_forward.9} parent=154 // pred_region
          %vm521 = vcmask 31744
          %522 = vst.msk [vmem:[#allocation3] sm:$0xff] %vm521, -1e+30
          %523 = vst.msk [vmem:[#allocation3 + $0x8] sm:$0xff] %vm521, -1e+30
          %524 = vst.msk [vmem:[#allocation4] sm:$0xff] %vm521, 0.0
          %525 = vst.msk [vmem:[#allocation4 + $0x8] sm:$0xff] %vm521, 0.0
          %526 = vst [vmem:[#allocation2] sm:$0xff] 0.0
          %527 = vst [vmem:[#allocation2 + $0x8] sm:$0xff] 0.0
        $region171: #{siglip_vision_forward.9} parent=154 // pred_fallthru
          _
        %v528 = vld [vmem:[%s431] sm:$0xf]
        %v529 = vld [vmem:[%s431 + $0x4] sm:$0xf]
        %v530 = vld [vmem:[%s438] sm:$0xf]
        %v531 = vld [vmem:[%s438 + $0x4] sm:$0xf]
        %v532 = vld [vmem:[%s445] sm:$0xf]
        %v533 = vld [vmem:[%s445 + $0x4] sm:$0xf]
        %v536 = vunpack.c.l.b16 %v528
        %v537 = vunpack.c.l.b16 %v529
        %v538 = vpack.c.b16 %v537, %v536
        %v541 = vunpack.c.l.b16 %v530
        %v542 = vunpack.c.l.b16 %v531
        %v543 = vpack.c.b16 %v542, %v541
        %vm544 = vcmask 261120
        %v546 = vsel %vm544, %v538, 0
        %v549 = vsel %vm544, %v543, 0
        %551 = vmatprep.subr.bf16.mxu0 0
        %552 = vmatpush1.bf16.xpose.msra.mxu0 %v549
        %553 = vmatprep.subr.bf16.mxu0 0
        %554 = vmatpush1.bf16.xpose.msra.mxu0 0
        %555 = vmatprep.subr.bf16.mxu0 0
        %556 = vmatpush1.bf16.xpose.msra.mxu0 0
        %557 = vmatprep.subr.bf16.mxu0 0
        %558 = vmatpush1.bf16.xpose.msra.mxu0 0
        %559 = vmatprep.subr.bf16.mxu0 0
        %560 = vmatpush1.bf16.xpose.msra.mxu0 0
        %561 = vmatprep.subr.bf16.mxu0 0
        %562 = vmatpush1.bf16.xpose.msra.mxu0 0
        %563 = vmatprep.subr.bf16.mxu0 0
        %564 = vmatpush1.bf16.xpose.msra.mxu0 0
        %565 = vmatprep.subr.bf16.mxu0 0
        %566 = vmatpush1.bf16.xpose.msra.mxu0 0
        %567 = vmatprep.subr.bf16.mxu0 0
        %568 = vmatpush1.bf16.xpose.msra.mxu0 0
        %569 = vmatprep.subr.bf16.mxu0 0
        %570 = vmatpush1.bf16.xpose.msra.mxu0 0
        %571 = vmatprep.subr.bf16.mxu0 0
        %572 = vmatpush1.bf16.xpose.msra.mxu0 0
        %573 = vmatprep.subr.bf16.mxu0 0
        %574 = vmatpush1.bf16.xpose.msra.mxu0 0
        %575 = vmatprep.subr.bf16.mxu0 0
        %576 = vmatpush1.bf16.xpose.msra.mxu0 0
        %577 = vmatprep.subr.bf16.mxu0 0
        %578 = vmatpush1.bf16.xpose.msra.mxu0 0
        %579 = vmatprep.subr.bf16.mxu0 0
        %580 = vmatpush1.bf16.xpose.msra.mxu0 0
        %581 = vmatprep.subr.bf16.mxu0 0
        %582 = vmatpush1.bf16.xpose.msra.mxu0 0
        %583 = vmatprep.mubr.bf16.mxu0 0
        %584 = vmatmul.mubr.bf16.gmra.mrb[0].mxu0 %v546
        %v585 = vpop.f32.mrb[0].mxu0
        %v586 = vadd.f32 0.0, %v585
        %v587 = vpop.f32.mrb[0].mxu0
        %v588 = vpop.f32.mrb[0].mxu0
        %v589 = vadd.f32 0.0, %v588
        %v590 = vpop.f32.mrb[0].mxu0
        %591 = vdwg.mxu0
        %v592 = vld [vmem:[#allocation3] sm:$0xff]
        %v593 = vld [vmem:[#allocation3 + $0x8] sm:$0xff]
        %vm594 = vcmask 130048
        %v595 = vsel %vm594, %v586, -inf
        %596 = vmax.xlane.f32.xlu0 %v595
        %v597 = vpop.xlane.xlu0 %596
        %v598 = vsel %vm594, %v589, -inf
        %599 = vmax.xlane.f32.xlu0 %v598
        %v600 = vpop.xlane.xlu0 %599
        %v601 = vmax.f32 %v592, %v597
        %v602 = vmax.f32 %v593, %v600
        %v603 = vsub.f32 %v592, %v601
        %v604 = vsub.f32 %v593, %v602
        %v605 = vmul.f32 %v603, 1.442695
        %v606 = vpow.pop %v605
        %v607 = vmul.f32 %v604, 1.442695
        %v608 = vpow.pop %v607
        %610 = vset.pattern.permute.xlu0 0
        %611 = vperm.xlu0 %610, %v601
        %v612 = vpop.permute.xlu0 %611
        %615 = vset.pattern.permute.xlu0 0
        %616 = vperm.xlu0 %615, %v602
        %v617 = vpop.permute.xlu0 %616
        %v619 = vsub.f32 %v586, %v612
        %v620 = vsub.f32 %v589, %v617
        %v621 = vmul.f32 %v619, 1.442695
        %v622 = vpow.pop %v621
        %v623 = vmul.f32 %v620, 1.442695
        %v624 = vpow.pop %v623
        %v625 = vld [vmem:[#allocation4] sm:$0xff]
        %v626 = vld [vmem:[#allocation4 + $0x8] sm:$0xff]
        %v627 = vmul.f32 %v606, %v625
        %v628 = vmul.f32 %v608, %v626
        %v629 = vsel %vm594, %v622, 0.0
        %630 = vadd.xlane.f32.xlu0 %v629
        %v631 = vpop.xlane.xlu0 %630
        %v632 = vsel %vm594, %v624, 0.0
        %633 = vadd.xlane.f32.xlu0 %v632
        %v634 = vpop.xlane.xlu0 %633
        %v635 = vadd.f32 %v627, %v631
        %v636 = vadd.f32 %v628, %v634
        %vm637 = vcmask 7168
        %638 = vst.msk [vmem:[#allocation4] sm:$0xff] %vm637, %v635
        %639 = vst.msk [vmem:[#allocation4 + $0x8] sm:$0xff] %vm637, %v636
        %v640 = vld [vmem:[#allocation2] sm:$0xff]
        %v641 = vld [vmem:[#allocation2 + $0x8] sm:$0xff]
        %643 = vset.pattern.permute.xlu0 0
        %644 = vperm.xlu0 %643, %v606
        %v645 = vpop.permute.xlu0 %644
        %648 = vset.pattern.permute.xlu0 0
        %649 = vperm.xlu0 %648, %v608
        %v650 = vpop.permute.xlu0 %649
        %v652 = vmul.f32 %v645, %v640
        %v653 = vmul.f32 %v650, %v641
        %v654 = vpack.c.bf16 %v624, %v622
        %v657 = vunpack.c.l.b16 %v532
        %v658 = vunpack.c.l.b16 %v533
        %v659 = vpack.c.b16 %v658, %v657
        %v662 = vsel %vm594, %v654, 0
        %664 = vmatprep.subr.bf16.mxu0 0
        %665 = vmatpush1.bf16.msra.mxu0 %v659
        %666 = vmatprep.subr.bf16.mxu0 0
        %667 = vmatpush1.bf16.msra.mxu0 0
        %668 = vmatprep.subr.bf16.mxu0 0
        %669 = vmatpush1.bf16.msra.mxu0 0
        %670 = vmatprep.subr.bf16.mxu0 0
        %671 = vmatpush1.bf16.msra.mxu0 0
        %672 = vmatprep.subr.bf16.mxu0 0
        %673 = vmatpush1.bf16.msra.mxu0 0
        %674 = vmatprep.subr.bf16.mxu0 0
        %675 = vmatpush1.bf16.msra.mxu0 0
        %676 = vmatprep.subr.bf16.mxu0 0
        %677 = vmatpush1.bf16.msra.mxu0 0
        %678 = vmatprep.subr.bf16.mxu0 0
        %679 = vmatpush1.bf16.msra.mxu0 0
        %680 = vmatprep.subr.bf16.mxu0 0
        %681 = vmatpush1.bf16.msra.mxu0 0
        %682 = vmatprep.subr.bf16.mxu0 0
        %683 = vmatpush1.bf16.msra.mxu0 0
        %684 = vmatprep.subr.bf16.mxu0 0
        %685 = vmatpush1.bf16.msra.mxu0 0
        %686 = vmatprep.subr.bf16.mxu0 0
        %687 = vmatpush1.bf16.msra.mxu0 0
        %688 = vmatprep.subr.bf16.mxu0 0
        %689 = vmatpush1.bf16.msra.mxu0 0
        %690 = vmatprep.subr.bf16.mxu0 0
        %691 = vmatpush1.bf16.msra.mxu0 0
        %692 = vmatprep.subr.bf16.mxu0 0
        %693 = vmatpush1.bf16.msra.mxu0 0
        %694 = vmatprep.subr.bf16.mxu0 0
        %695 = vmatpush1.bf16.msra.mxu0 0
        %696 = vmatprep.mubr.bf16.mxu0 0
        %697 = vmatmul.mubr.bf16.gmra.mrb[0].mxu0 %v662
        %v698 = vpop.f32.mrb[0].mxu0
        %v699 = vadd.f32 0.0, %v698
        %v700 = vpop.f32.mrb[0].mxu0
        %v701 = vpop.f32.mrb[0].mxu0
        %v702 = vadd.f32 0.0, %v701
        %v703 = vpop.f32.mrb[0].mxu0
        %704 = vdwg.mxu0
        %v705 = vadd.f32 %v652, %v699
        %v706 = vadd.f32 %v653, %v702
        %707 = vst.msk [vmem:[#allocation2] sm:$0xff] %vm544, %v705
        %708 = vst.msk [vmem:[#allocation2 + $0x8] sm:$0xff] %vm544, %v706
        %709 = vst.msk [vmem:[#allocation3] sm:$0xff] %vm637, %v601
        %710 = vst.msk [vmem:[#allocation3 + $0x8] sm:$0xff] %vm637, %v602
        %711 = vrot.lane.b32.xlu0 %v538, 96
        %v712 = vpop.permute.xlu0 %711
        %713 = vrot.lane.b32.xlu0 %v543, 96
        %v714 = vpop.permute.xlu0 %713
        %v716 = vsel %vm544, %v712, 0
        %v719 = vsel %vm544, %v714, 0
        %721 = vmatprep.subr.bf16.mxu0 0
        %722 = vmatpush1.bf16.xpose.msra.mxu0 %v719
        %723 = vmatprep.subr.bf16.mxu0 0
        %724 = vmatpush1.bf16.xpose.msra.mxu0 0
        %725 = vmatprep.subr.bf16.mxu0 0
        %726 = vmatpush1.bf16.xpose.msra.mxu0 0
        %727 = vmatprep.subr.bf16.mxu0 0
        %728 = vmatpush1.bf16.xpose.msra.mxu0 0
        %729 = vmatprep.subr.bf16.mxu0 0
        %730 = vmatpush1.bf16.xpose.msra.mxu0 0
        %731 = vmatprep.subr.bf16.mxu0 0
        %732 = vmatpush1.bf16.xpose.msra.mxu0 0
        %733 = vmatprep.subr.bf16.mxu0 0
        %734 = vmatpush1.bf16.xpose.msra.mxu0 0
        %735 = vmatprep.subr.bf16.mxu0 0
        %736 = vmatpush1.bf16.xpose.msra.mxu0 0
        %737 = vmatprep.subr.bf16.mxu0 0
        %738 = vmatpush1.bf16.xpose.msra.mxu0 0
        %739 = vmatprep.subr.bf16.mxu0 0
        %740 = vmatpush1.bf16.xpose.msra.mxu0 0
        %741 = vmatprep.subr.bf16.mxu0 0
        %742 = vmatpush1.bf16.xpose.msra.mxu0 0
        %743 = vmatprep.subr.bf16.mxu0 0
        %744 = vmatpush1.bf16.xpose.msra.mxu0 0
        %745 = vmatprep.subr.bf16.mxu0 0
        %746 = vmatpush1.bf16.xpose.msra.mxu0 0
        %747 = vmatprep.subr.bf16.mxu0 0
        %748 = vmatpush1.bf16.xpose.msra.mxu0 0
        %749 = vmatprep.subr.bf16.mxu0 0
        %750 = vmatpush1.bf16.xpose.msra.mxu0 0
        %751 = vmatprep.subr.bf16.mxu0 0
        %752 = vmatpush1.bf16.xpose.msra.mxu0 0
        %753 = vmatprep.mubr.bf16.mxu0 0
        %754 = vmatmul.mubr.bf16.gmra.mrb[0].mxu0 %v716
        %v755 = vpop.f32.mrb[0].mxu0
        %v756 = vadd.f32 0.0, %v755
        %v757 = vpop.f32.mrb[0].mxu0
        %v758 = vpop.f32.mrb[0].mxu0
        %v759 = vadd.f32 0.0, %v758
        %v760 = vpop.f32.mrb[0].mxu0
        %761 = vdwg.mxu0
        %v762 = vld [vmem:[#allocation3] sm:$0xff]
        %v763 = vld [vmem:[#allocation3 + $0x8] sm:$0xff]
        %v764 = vsel %vm594, %v756, -inf
        %765 = vmax.xlane.f32.xlu0 %v764
        %v766 = vpop.xlane.xlu0 %765
        %v767 = vsel %vm594, %v759, -inf
        %768 = vmax.xlane.f32.xlu0 %v767
        %v769 = vpop.xlane.xlu0 %768
        %v770 = vmax.f32 %v762, %v766
        %v771 = vmax.f32 %v763, %v769
        %v772 = vsub.f32 %v762, %v770
        %v773 = vsub.f32 %v763, %v771
        %v774 = vmul.f32 %v772, 1.442695
        %v775 = vpow.pop %v774
        %v776 = vmul.f32 %v773, 1.442695
        %v777 = vpow.pop %v776
        %779 = vset.pattern.permute.xlu0 1
        %780 = vperm.xlu0 %779, %v770
        %v781 = vpop.permute.xlu0 %780
        %784 = vset.pattern.permute.xlu0 1
        %785 = vperm.xlu0 %784, %v771
        %v786 = vpop.permute.xlu0 %785
        %v788 = vsub.f32 %v756, %v781
        %v789 = vsub.f32 %v759, %v786
        %v790 = vmul.f32 %v788, 1.442695
        %v791 = vpow.pop %v790
        %v792 = vmul.f32 %v789, 1.442695
        %v793 = vpow.pop %v792
        %v794 = vld [vmem:[#allocation4] sm:$0xff]
        %v795 = vld [vmem:[#allocation4 + $0x8] sm:$0xff]
        %v796 = vmul.f32 %v775, %v794
        %v797 = vmul.f32 %v777, %v795
        %v798 = vsel %vm594, %v791, 0.0
        %799 = vadd.xlane.f32.xlu0 %v798
        %v800 = vpop.xlane.xlu0 %799
        %v801 = vsel %vm594, %v793, 0.0
        %802 = vadd.xlane.f32.xlu0 %v801
        %v803 = vpop.xlane.xlu0 %802
        %v804 = vadd.f32 %v796, %v800
        %v805 = vadd.f32 %v797, %v803
        %vm806 = vcmask 15368
        %807 = vst.msk [vmem:[#allocation4] sm:$0xff] %vm806, %v804
        %808 = vst.msk [vmem:[#allocation4 + $0x8] sm:$0xff] %vm806, %v805
        %v809 = vld [vmem:[#allocation2] sm:$0xff]
        %v810 = vld [vmem:[#allocation2 + $0x8] sm:$0xff]
        %812 = vset.pattern.permute.xlu0 1
        %813 = vperm.xlu0 %812, %v775
        %v814 = vpop.permute.xlu0 %813
        %817 = vset.pattern.permute.xlu0 1
        %818 = vperm.xlu0 %817, %v777
        %v819 = vpop.permute.xlu0 %818
        %v821 = vmul.f32 %v814, %v809
        %v822 = vmul.f32 %v819, %v810
        %v823 = vpack.c.bf16 %v793, %v791
        %824 = vrot.lane.b32.xlu0 %v659, 96
        %v825 = vpop.permute.xlu0 %824
        %v828 = vsel %vm594, %v823, 0
        %830 = vmatprep.subr.bf16.mxu0 0
        %831 = vmatpush1.bf16.msra.mxu0 %v825
        %832 = vmatprep.subr.bf16.mxu0 0
        %833 = vmatpush1.bf16.msra.mxu0 0
        %834 = vmatprep.subr.bf16.mxu0 0
        %835 = vmatpush1.bf16.msra.mxu0 0
        %836 = vmatprep.subr.bf16.mxu0 0
        %837 = vmatpush1.bf16.msra.mxu0 0
        %838 = vmatprep.subr.bf16.mxu0 0
        %839 = vmatpush1.bf16.msra.mxu0 0
        %840 = vmatprep.subr.bf16.mxu0 0
        %841 = vmatpush1.bf16.msra.mxu0 0
        %842 = vmatprep.subr.bf16.mxu0 0
        %843 = vmatpush1.bf16.msra.mxu0 0
        %844 = vmatprep.subr.bf16.mxu0 0
        %845 = vmatpush1.bf16.msra.mxu0 0
        %846 = vmatprep.subr.bf16.mxu0 0
        %847 = vmatpush1.bf16.msra.mxu0 0
        %848 = vmatprep.subr.bf16.mxu0 0
        %849 = vmatpush1.bf16.msra.mxu0 0
        %850 = vmatprep.subr.bf16.mxu0 0
        %851 = vmatpush1.bf16.msra.mxu0 0
        %852 = vmatprep.subr.bf16.mxu0 0
        %853 = vmatpush1.bf16.msra.mxu0 0
        %854 = vmatprep.subr.bf16.mxu0 0
        %855 = vmatpush1.bf16.msra.mxu0 0
        %856 = vmatprep.subr.bf16.mxu0 0
        %857 = vmatpush1.bf16.msra.mxu0 0
        %858 = vmatprep.subr.bf16.mxu0 0
        %859 = vmatpush1.bf16.msra.mxu0 0
        %860 = vmatprep.subr.bf16.mxu0 0
        %861 = vmatpush1.bf16.msra.mxu0 0
        %862 = vmatprep.mubr.bf16.mxu0 0
        %863 = vmatmul.mubr.bf16.gmra.mrb[0].mxu0 %v828
        %v864 = vpop.f32.mrb[0].mxu0
        %v865 = vadd.f32 0.0, %v864
        %v866 = vpop.f32.mrb[0].mxu0
        %v867 = vpop.f32.mrb[0].mxu0
        %v868 = vadd.f32 0.0, %v867
        %v869 = vpop.f32.mrb[0].mxu0
        %870 = vdwg.mxu0
        %873 = vrot.lane.b32.xlu0 %v865, 32
        %v874 = vpop.permute.xlu0 %873
        %875 = vrot.lane.b32.xlu0 %v868, 32
        %v876 = vpop.permute.xlu0 %875
        %v879 = vadd.f32 %v821, %v874
        %v880 = vadd.f32 %v822, %v876
        %vm881 = vcmask 523520
        %882 = vst.msk [vmem:[#allocation2] sm:$0xff] %vm881, %v879
        %883 = vst.msk [vmem:[#allocation2 + $0x8] sm:$0xff] %vm881, %v880
        %884 = vst.msk [vmem:[#allocation3] sm:$0xff] %vm806, %v770
        %885 = vst.msk [vmem:[#allocation3 + $0x8] sm:$0xff] %vm806, %v771
        %886 = vrot.lane.b32.xlu0 %v538, 64
        %v887 = vpop.permute.xlu0 %886
        %888 = vrot.lane.b32.xlu0 %v543, 64
        %v889 = vpop.permute.xlu0 %888
        %v891 = vsel %vm544, %v887, 0
        %v894 = vsel %vm544, %v889, 0
        %896 = vmatprep.subr.bf16.mxu0 0
        %897 = vmatpush1.bf16.xpose.msra.mxu0 %v894
        %898 = vmatprep.subr.bf16.mxu0 0
        %899 = vmatpush1.bf16.xpose.msra.mxu0 0
        %900 = vmatprep.subr.bf16.mxu0 0
        %901 = vmatpush1.bf16.xpose.msra.mxu0 0
        %902 = vmatprep.subr.bf16.mxu0 0
        %903 = vmatpush1.bf16.xpose.msra.mxu0 0
        %904 = vmatprep.subr.bf16.mxu0 0
        %905 = vmatpush1.bf16.xpose.msra.mxu0 0
        %906 = vmatprep.subr.bf16.mxu0 0
        %907 = vmatpush1.bf16.xpose.msra.mxu0 0
        %908 = vmatprep.subr.bf16.mxu0 0
        %909 = vmatpush1.bf16.xpose.msra.mxu0 0
        %910 = vmatprep.subr.bf16.mxu0 0
        %911 = vmatpush1.bf16.xpose.msra.mxu0 0
        %912 = vmatprep.subr.bf16.mxu0 0
        %913 = vmatpush1.bf16.xpose.msra.mxu0 0
        %914 = vmatprep.subr.bf16.mxu0 0
        %915 = vmatpush1.bf16.xpose.msra.mxu0 0
        %916 = vmatprep.subr.bf16.mxu0 0
        %917 = vmatpush1.bf16.xpose.msra.mxu0 0
        %918 = vmatprep.subr.bf16.mxu0 0
        %919 = vmatpush1.bf16.xpose.msra.mxu0 0
        %920 = vmatprep.subr.bf16.mxu0 0
        %921 = vmatpush1.bf16.xpose.msra.mxu0 0
        %922 = vmatprep.subr.bf16.mxu0 0
        %923 = vmatpush1.bf16.xpose.msra.mxu0 0
        %924 = vmatprep.subr.bf16.mxu0 0
        %925 = vmatpush1.bf16.xpose.msra.mxu0 0
        %926 = vmatprep.subr.bf16.mxu0 0
        %927 = vmatpush1.bf16.xpose.msra.mxu0 0
        %928 = vmatprep.mubr.bf16.mxu0 0
        %929 = vmatmul.mubr.bf16.gmra.mrb[0].mxu0 %v891
        %v930 = vpop.f32.mrb[0].mxu0
        %v931 = vadd.f32 0.0, %v930
        %v932 = vpop.f32.mrb[0].mxu0
        %v933 = vpop.f32.mrb[0].mxu0
        %v934 = vadd.f32 0.0, %v933
        %v935 = vpop.f32.mrb[0].mxu0
        %936 = vdwg.mxu0
        %v937 = vld [vmem:[#allocation3] sm:$0xff]
        %v938 = vld [vmem:[#allocation3 + $0x8] sm:$0xff]
        %v939 = vsel %vm594, %v931, -inf
        %940 = vmax.xlane.f32.xlu0 %v939
        %v941 = vpop.xlane.xlu0 %940
        %v942 = vsel %vm594, %v934, -inf
        %943 = vmax.xlane.f32.xlu0 %v942
        %v944 = vpop.xlane.xlu0 %943
        %v945 = vmax.f32 %v937, %v941
        %v946 = vmax.f32 %v938, %v944
        %v947 = vsub.f32 %v937, %v945
        %v948 = vsub.f32 %v938, %v946
        %v949 = vmul.f32 %v947, 1.442695
        %v950 = vpow.pop %v949
        %v951 = vmul.f32 %v948, 1.442695
        %v952 = vpow.pop %v951
        %954 = vset.pattern.permute.xlu0 2
        %955 = vperm.xlu0 %954, %v945
        %v956 = vpop.permute.xlu0 %955
        %959 = vset.pattern.permute.xlu0 2
        %960 = vperm.xlu0 %959, %v946
        %v961 = vpop.permute.xlu0 %960
        %v963 = vsub.f32 %v931, %v956
        %v964 = vsub.f32 %v934, %v961
        %v965 = vmul.f32 %v963, 1.442695
        %v966 = vpow.pop %v965
        %v967 = vmul.f32 %v964, 1.442695
        %v968 = vpow.pop %v967
        %v969 = vld [vmem:[#allocation4] sm:$0xff]
        %v970 = vld [vmem:[#allocation4 + $0x8] sm:$0xff]
        %v971 = vmul.f32 %v950, %v969
        %v972 = vmul.f32 %v952, %v970
        %v973 = vsel %vm594, %v966, 0.0
        %974 = vadd.xlane.f32.xlu0 %v973
        %v975 = vpop.xlane.xlu0 %974
        %v976 = vsel %vm594, %v968, 0.0
        %977 = vadd.xlane.f32.xlu0 %v976
        %v978 = vpop.xlane.xlu0 %977
        %v979 = vadd.f32 %v971, %v975
        %v980 = vadd.f32 %v972, %v978
        %vm981 = vcmask 23568
        %982 = vst.msk [vmem:[#allocation4] sm:$0xff] %vm981, %v979
        %983 = vst.msk [vmem:[#allocation4 + $0x8] sm:$0xff] %vm981, %v980
        %v984 = vld [vmem:[#allocation2] sm:$0xff]
        %v985 = vld [vmem:[#allocation2 + $0x8] sm:$0xff]
        %987 = vset.pattern.permute.xlu0 2
        %988 = vperm.xlu0 %987, %v950
        %v989 = vpop.permute.xlu0 %988
        %992 = vset.pattern.permute.xlu0 2
        %993 = vperm.xlu0 %992, %v952
        %v994 = vpop.permute.xlu0 %993
        %v996 = vmul.f32 %v989, %v984
        %v997 = vmul.f32 %v994, %v985
        %v998 = vpack.c.bf16 %v968, %v966
        %999 = vrot.lane.b32.xlu0 %v659, 64
        %v1000 = vpop.permute.xlu0 %999
        %v1003 = vsel %vm594, %v998, 0
        %1005 = vmatprep.subr.bf16.mxu0 0
        %1006 = vmatpush1.bf16.msra.mxu0 %v1000
        %1007 = vmatprep.subr.bf16.mxu0 0
        %1008 = vmatpush1.bf16.msra.mxu0 0
        %1009 = vmatprep.subr.bf16.mxu0 0
        %1010 = vmatpush1.bf16.msra.mxu0 0
        %1011 = vmatprep.subr.bf16.mxu0 0
        %1012 = vmatpush1.bf16.msra.mxu0 0
        %1013 = vmatprep.subr.bf16.mxu0 0
        %1014 = vmatpush1.bf16.msra.mxu0 0
        %1015 = vmatprep.subr.bf16.mxu0 0
        %1016 = vmatpush1.bf16.msra.mxu0 0
        %1017 = vmatprep.subr.bf16.mxu0 0
        %1018 = vmatpush1.bf16.msra.mxu0 0
        %1019 = vmatprep.subr.bf16.mxu0 0
        %1020 = vmatpush1.bf16.msra.mxu0 0
        %1021 = vmatprep.subr.bf16.mxu0 0
        %1022 = vmatpush1.bf16.msra.mxu0 0
        %1023 = vmatprep.subr.bf16.mxu0 0
        %1024 = vmatpush1.bf16.msra.mxu0 0
        %1025 = vmatprep.subr.bf16.mxu0 0
        %1026 = vmatpush1.bf16.msra.mxu0 0
        %1027 = vmatprep.subr.bf16.mxu0 0
        %1028 = vmatpush1.bf16.msra.mxu0 0
        %1029 = vmatprep.subr.bf16.mxu0 0
        %1030 = vmatpush1.bf16.msra.mxu0 0
        %1031 = vmatprep.subr.bf16.mxu0 0
        %1032 = vmatpush1.bf16.msra.mxu0 0
        %1033 = vmatprep.subr.bf16.mxu0 0
        %1034 = vmatpush1.bf16.msra.mxu0 0
        %1035 = vmatprep.subr.bf16.mxu0 0
        %1036 = vmatpush1.bf16.msra.mxu0 0
        %1037 = vmatprep.mubr.bf16.mxu0 0
        %1038 = vmatmul.mubr.bf16.gmra.mrb[0].mxu0 %v1003
        %v1039 = vpop.f32.mrb[0].mxu0
        %v1040 = vadd.f32 0.0, %v1039
        %v1041 = vpop.f32.mrb[0].mxu0
        %v1042 = vpop.f32.mrb[0].mxu0
        %v1043 = vadd.f32 0.0, %v1042
        %v1044 = vpop.f32.mrb[0].mxu0
        %1045 = vdwg.mxu0
        %1048 = vrot.lane.b32.xlu0 %v1040, 64
        %v1049 = vpop.permute.xlu0 %1048
        %1050 = vrot.lane.b32.xlu0 %v1043, 64
        %v1051 = vpop.permute.xlu0 %1050
        %v1054 = vadd.f32 %v996, %v1049
        %v1055 = vadd.f32 %v997, %v1051
        %vm1056 = vcmask 785920
        %1057 = vst.msk [vmem:[#allocation2] sm:$0xff] %vm1056, %v1054
        %1058 = vst.msk [vmem:[#allocation2 + $0x8] sm:$0xff] %vm1056, %v1055
        %1059 = vst.msk [vmem:[#allocation3] sm:$0xff] %vm981, %v945
        %1060 = vst.msk [vmem:[#allocation3 + $0x8] sm:$0xff] %vm981, %v946
        %1061 = vrot.lane.b32.xlu0 %v538, 32
        %v1062 = vpop.permute.xlu0 %1061
        %1063 = vrot.lane.b32.xlu0 %v543, 32
        %v1064 = vpop.permute.xlu0 %1063
        %v1066 = vsel %vm544, %v1062, 0
        %v1069 = vsel %vm544, %v1064, 0
        %1071 = vmatprep.subr.bf16.mxu0 0
        %1072 = vmatpush1.bf16.xpose.msra.mxu0 %v1069
        %1073 = vmatprep.subr.bf16.mxu0 0
        %1074 = vmatpush1.bf16.xpose.msra.mxu0 0
        %1075 = vmatprep.subr.bf16.mxu0 0
        %1076 = vmatpush1.bf16.xpose.msra.mxu0 0
        %1077 = vmatprep.subr.bf16.mxu0 0
        %1078 = vmatpush1.bf16.xpose.msra.mxu0 0
        %1079 = vmatprep.subr.bf16.mxu0 0
        %1080 = vmatpush1.bf16.xpose.msra.mxu0 0
        %1081 = vmatprep.subr.bf16.mxu0 0
        %1082 = vmatpush1.bf16.xpose.msra.mxu0 0
        %1083 = vmatprep.subr.bf16.mxu0 0
        %1084 = vmatpush1.bf16.xpose.msra.mxu0 0
        %1085 = vmatprep.subr.bf16.mxu0 0
        %1086 = vmatpush1.bf16.xpose.msra.mxu0 0
        %1087 = vmatprep.subr.bf16.mxu0 0
        %1088 = vmatpush1.bf16.xpose.msra.mxu0 0
        %1089 = vmatprep.subr.bf16.mxu0 0
        %1090 = vmatpush1.bf16.xpose.msra.mxu0 0
        %1091 = vmatprep.subr.bf16.mxu0 0
        %1092 = vmatpush1.bf16.xpose.msra.mxu0 0
        %1093 = vmatprep.subr.bf16.mxu0 0
        %1094 = vmatpush1.bf16.xpose.msra.mxu0 0
        %1095 = vmatprep.subr.bf16.mxu0 0
        %1096 = vmatpush1.bf16.xpose.msra.mxu0 0
        %1097 = vmatprep.subr.bf16.mxu0 0
        %1098 = vmatpush1.bf16.xpose.msra.mxu0 0
        %1099 = vmatprep.subr.bf16.mxu0 0
        %1100 = vmatpush1.bf16.xpose.msra.mxu0 0
        %1101 = vmatprep.subr.bf16.mxu0 0
        %1102 = vmatpush1.bf16.xpose.msra.mxu0 0
        %1103 = vmatprep.mubr.bf16.mxu0 0
        %1104 = vmatmul.mubr.bf16.gmra.mrb[0].mxu0 %v1066
        %v1105 = vpop.f32.mrb[0].mxu0
        %v1106 = vadd.f32 0.0, %v1105
        %v1107 = vpop.f32.mrb[0].mxu0
        %v1108 = vpop.f32.mrb[0].mxu0
        %v1109 = vadd.f32 0.0, %v1108
        %v1110 = vpop.f32.mrb[0].mxu0
        %1111 = vdwg.mxu0
        %v1112 = vld [vmem:[#allocation3] sm:$0xff]
        %v1113 = vld [vmem:[#allocation3 + $0x8] sm:$0xff]
        %v1114 = vsel %vm594, %v1106, -inf
        %1115 = vmax.xlane.f32.xlu0 %v1114
        %v1116 = vpop.xlane.xlu0 %1115
        %v1117 = vsel %vm594, %v1109, -inf
        %1118 = vmax.xlane.f32.xlu0 %v1117
        %v1119 = vpop.xlane.xlu0 %1118
        %v1120 = vmax.f32 %v1112, %v1116
        %v1121 = vmax.f32 %v1113, %v1119
        %v1122 = vsub.f32 %v1112, %v1120
        %v1123 = vsub.f32 %v1113, %v1121
        %v1124 = vmul.f32 %v1122, 1.442695
        %v1125 = vpow.pop %v1124
        %v1126 = vmul.f32 %v1123, 1.442695
        %v1127 = vpow.pop %v1126
        %1129 = vset.pattern.permute.xlu0 3
        %1130 = vperm.xlu0 %1129, %v1120
        %v1131 = vpop.permute.xlu0 %1130
        %1134 = vset.pattern.permute.xlu0 3
        %1135 = vperm.xlu0 %1134, %v1121
        %v1136 = vpop.permute.xlu0 %1135
        %v1138 = vsub.f32 %v1106, %v1131
        %v1139 = vsub.f32 %v1109, %v1136
        %v1140 = vmul.f32 %v1138, 1.442695
        %v1141 = vpow.pop %v1140
        %v1142 = vmul.f32 %v1139, 1.442695
        %v1143 = vpow.pop %v1142
        %v1144 = vld [vmem:[#allocation4] sm:$0xff]
        %v1145 = vld [vmem:[#allocation4 + $0x8] sm:$0xff]
        %v1146 = vmul.f32 %v1125, %v1144
        %v1147 = vmul.f32 %v1127, %v1145
        %v1148 = vsel %vm594, %v1141, 0.0
        %1149 = vadd.xlane.f32.xlu0 %v1148
        %v1150 = vpop.xlane.xlu0 %1149
        %v1151 = vsel %vm594, %v1143, 0.0
        %1152 = vadd.xlane.f32.xlu0 %v1151
        %v1153 = vpop.xlane.xlu0 %1152
        %v1154 = vadd.f32 %v1146, %v1150
        %v1155 = vadd.f32 %v1147, %v1153
        %vm1156 = vcmask 31768
        %1157 = vst.msk [vmem:[#allocation4] sm:$0xff] %vm1156, %v1154
        %1158 = vst.msk [vmem:[#allocation4 + $0x8] sm:$0xff] %vm1156, %v1155
        %v1159 = vld [vmem:[#allocation2] sm:$0xff]
        %v1160 = vld [vmem:[#allocation2 + $0x8] sm:$0xff]
        %1162 = vset.pattern.permute.xlu0 3
        %1163 = vperm.xlu0 %1162, %v1125
        %v1164 = vpop.permute.xlu0 %1163
        %1167 = vset.pattern.permute.xlu0 3
        %1168 = vperm.xlu0 %1167, %v1127
        %v1169 = vpop.permute.xlu0 %1168
        %v1171 = vmul.f32 %v1164, %v1159
        %v1172 = vmul.f32 %v1169, %v1160
        %v1173 = vpack.c.bf16 %v1143, %v1141
        %1174 = vrot.lane.b32.xlu0 %v659, 32
        %v1175 = vpop.permute.xlu0 %1174
        %v1178 = vsel %vm594, %v1173, 0
        %1180 = vmatprep.subr.bf16.mxu0 0
        %1181 = vmatpush1.bf16.msra.mxu0 %v1175
        %1182 = vmatprep.subr.bf16.mxu0 0
        %1183 = vmatpush1.bf16.msra.mxu0 0
        %1184 = vmatprep.subr.bf16.mxu0 0
        %1185 = vmatpush1.bf16.msra.mxu0 0
        %1186 = vmatprep.subr.bf16.mxu0 0
        %1187 = vmatpush1.bf16.msra.mxu0 0
        %1188 = vmatprep.subr.bf16.mxu0 0
        %1189 = vmatpush1.bf16.msra.mxu0 0
        %1190 = vmatprep.subr.bf16.mxu0 0
        %1191 = vmatpush1.bf16.msra.mxu0 0
        %1192 = vmatprep.subr.bf16.mxu0 0
        %1193 = vmatpush1.bf16.msra.mxu0 0
        %1194 = vmatprep.subr.bf16.mxu0 0
        %1195 = vmatpush1.bf16.msra.mxu0 0
        %1196 = vmatprep.subr.bf16.mxu0 0
        %1197 = vmatpush1.bf16.msra.mxu0 0
        %1198 = vmatprep.subr.bf16.mxu0 0
        %1199 = vmatpush1.bf16.msra.mxu0 0
        %1200 = vmatprep.subr.bf16.mxu0 0
        %1201 = vmatpush1.bf16.msra.mxu0 0
        %1202 = vmatprep.subr.bf16.mxu0 0
        %1203 = vmatpush1.bf16.msra.mxu0 0
        %1204 = vmatprep.subr.bf16.mxu0 0
        %1205 = vmatpush1.bf16.msra.mxu0 0
        %1206 = vmatprep.subr.bf16.mxu0 0
        %1207 = vmatpush1.bf16.msra.mxu0 0
        %1208 = vmatprep.subr.bf16.mxu0 0
        %1209 = vmatpush1.bf16.msra.mxu0 0
        %1210 = vmatprep.subr.bf16.mxu0 0
        %1211 = vmatpush1.bf16.msra.mxu0 0
        %1212 = vmatprep.mubr.bf16.mxu0 0
        %1213 = vmatmul.mubr.bf16.gmra.mrb[0].mxu0 %v1178
        %v1214 = vpop.f32.mrb[0].mxu0
        %v1215 = vadd.f32 0.0, %v1214
        %v1216 = vpop.f32.mrb[0].mxu0
        %v1217 = vpop.f32.mrb[0].mxu0
        %v1218 = vadd.f32 0.0, %v1217
        %v1219 = vpop.f32.mrb[0].mxu0
        %1220 = vdwg.mxu0
        %1223 = vrot.lane.b32.xlu0 %v1215, 96
        %v1224 = vpop.permute.xlu0 %1223
        %1225 = vrot.lane.b32.xlu0 %v1218, 96
        %v1226 = vpop.permute.xlu0 %1225
        %v1229 = vadd.f32 %v1171, %v1224
        %v1230 = vadd.f32 %v1172, %v1226
        %vm1231 = vcmask 1048320
        %1232 = vst.msk [vmem:[#allocation2] sm:$0xff] %vm1231, %v1229
        %1233 = vst.msk [vmem:[#allocation2 + $0x8] sm:$0xff] %vm1231, %v1230
        %1234 = vst.msk [vmem:[#allocation3] sm:$0xff] %vm1156, %v1120
        %1235 = vst.msk [vmem:[#allocation3 + $0x8] sm:$0xff] %vm1156, %v1121
        // Predicated region
        $region172: #{siglip_vision_forward.9} parent=154 // pred_check
          %p1236 = pneg %p517
        $region173: #{siglip_vision_forward.9} parent=154 // pred_check_branch
          %1238 = sbr.rel (%p1236) target = $region175
        $region174: #{siglip_vision_forward.9} parent=154 // pred_region
          %v1239 = vld [vmem:[#allocation4] sm:$0xff]
          %v1240 = vld [vmem:[#allocation4 + $0x8] sm:$0xff]
          %v1241 = vrcp.pop %v1239
          %v1242 = vrcp.pop %v1240
          %v1243 = vld [vmem:[#allocation2] sm:$0xff]
          %v1244 = vld [vmem:[#allocation2 + $0x8] sm:$0xff]
          %1246 = vset.pattern.permute.xlu0 0
          %1247 = vperm.xlu0 %1246, %v1241
          %v1248 = vpop.permute.xlu0 %1247
          %1251 = vset.pattern.permute.xlu0 0
          %1252 = vperm.xlu0 %1251, %v1242
          %v1253 = vpop.permute.xlu0 %1252
          %v1255 = vmul.f32 %v1243, %v1248
          %v1256 = vmul.f32 %v1244, %v1253
          %1257 = vst.msk [vmem:[#allocation2] sm:$0xff] %vm544, %v1255
          %1258 = vst.msk [vmem:[#allocation2 + $0x8] sm:$0xff] %vm544, %v1256
          %v1259 = vld [vmem:[#allocation2] sm:$0xff]
          %v1260 = vld [vmem:[#allocation2 + $0x8] sm:$0xff]
          %1261 = vset.pattern.permute.xlu0 1
          %1262 = vperm.xlu0 %1261, %v1241
          %v1263 = vpop.permute.xlu0 %1262
          %1265 = vset.pattern.permute.xlu0 1
          %1266 = vperm.xlu0 %1265, %v1242
          %v1267 = vpop.permute.xlu0 %1266
          %v1269 = vmul.f32 %v1259, %v1263
          %v1270 = vmul.f32 %v1260, %v1267
          %1271 = vst.msk [vmem:[#allocation2] sm:$0xff] %vm881, %v1269
          %1272 = vst.msk [vmem:[#allocation2 + $0x8] sm:$0xff] %vm881, %v1270
          %v1273 = vld [vmem:[#allocation2] sm:$0xff]
          %v1274 = vld [vmem:[#allocation2 + $0x8] sm:$0xff]
          %1275 = vset.pattern.permute.xlu0 2
          %1276 = vperm.xlu0 %1275, %v1241
          %v1277 = vpop.permute.xlu0 %1276
          %1279 = vset.pattern.permute.xlu0 2
          %1280 = vperm.xlu0 %1279, %v1242
          %v1281 = vpop.permute.xlu0 %1280
          %v1283 = vmul.f32 %v1273, %v1277
          %v1284 = vmul.f32 %v1274, %v1281
          %1285 = vst.msk [vmem:[#allocation2] sm:$0xff] %vm1056, %v1283
          %1286 = vst.msk [vmem:[#allocation2 + $0x8] sm:$0xff] %vm1056, %v1284
          %v1287 = vld [vmem:[#allocation2] sm:$0xff]
          %v1288 = vld [vmem:[#allocation2 + $0x8] sm:$0xff]
          %1289 = vset.pattern.permute.xlu0 3
          %1290 = vperm.xlu0 %1289, %v1241
          %v1291 = vpop.permute.xlu0 %1290
          %1293 = vset.pattern.permute.xlu0 3
          %1294 = vperm.xlu0 %1293, %v1242
          %v1295 = vpop.permute.xlu0 %1294
          %v1297 = vmul.f32 %v1287, %v1291
          %v1298 = vmul.f32 %v1288, %v1295
          %1299 = vst.msk [vmem:[#allocation2] sm:$0xff] %vm1231, %v1297
          %1300 = vst.msk [vmem:[#allocation2 + $0x8] sm:$0xff] %vm1231, %v1298
          %v1301 = vld [vmem:[#allocation2] sm:$0xff]
          %v1302 = vld [vmem:[#allocation2 + $0x8] sm:$0xff]
          %v1303 = vpack.c.bf16 %v1302, %v1301
          %v1304 = vld [vmem:[%s4] sm:$0xf]
          %v1305 = vld [vmem:[%s4 + $0x4] sm:$0xf]
          %v1306 = vld [vmem:[%s4 + $0x8] sm:$0xf]
          %v1307 = vld [vmem:[%s4 + $0xc] sm:$0xf]
          %v1308 = vld [vmem:[%s4 + $0x10] sm:$0xf]
          %v1309 = vld [vmem:[%s4 + $0x14] sm:$0xf]
          %v1310 = vld [vmem:[%s4 + $0x18] sm:$0xf]
          %v1311 = vld [vmem:[%s4 + $0x1c] sm:$0xf]
          %v1312 = vld [vmem:[%s4 + $0x20] sm:$0xf]
          %v1313 = vld [vmem:[%s4 + $0x24] sm:$0xf]
          %v1314 = vld [vmem:[%s4 + $0x28] sm:$0xf]
          %v1315 = vld [vmem:[%s4 + $0x2c] sm:$0xf]
          %v1316 = vld [vmem:[%s4 + $0x30] sm:$0xf]
          %v1317 = vld [vmem:[%s4 + $0x34] sm:$0xf]
          %v1318 = vld [vmem:[%s4 + $0x38] sm:$0xf]
          %v1319 = vld [vmem:[%s4 + $0x3c] sm:$0xf]
          %v1320 = vld [vmem:[%s5] sm:$0x1]
          %v1322 = vlaneseq
          %v1323 = vshrl.u32 %v1322, 7
          %v1324 = vsub.s32 0, %v1323
          %v1325 = vrot.slane %v1320, %v1324
          %v1343 = vunpack.c.l.b16 %v1304
          %v1344 = vunpack.c.l.b16 %v1305
          %v1345 = vunpack.c.l.b16 %v1306
          %v1346 = vunpack.c.l.b16 %v1307
          %v1347 = vunpack.c.l.b16 %v1308
          %v1348 = vunpack.c.l.b16 %v1309
          %v1349 = vunpack.c.l.b16 %v1310
          %v1350 = vunpack.c.l.b16 %v1311
          %v1351 = vunpack.c.l.b16 %v1312
          %v1352 = vunpack.c.l.b16 %v1313
          %v1353 = vunpack.c.l.b16 %v1314
          %v1354 = vunpack.c.l.b16 %v1315
          %v1355 = vunpack.c.l.b16 %v1316
          %v1356 = vunpack.c.l.b16 %v1317
          %v1357 = vunpack.c.l.b16 %v1318
          %v1358 = vunpack.c.l.b16 %v1319
          %v1359 = vpack.c.b16 %v1344, %v1343
          %v1360 = vpack.c.b16 %v1346, %v1345
          %v1361 = vpack.c.b16 %v1348, %v1347
          %v1362 = vpack.c.b16 %v1350, %v1349
          %v1363 = vpack.c.b16 %v1352, %v1351
          %v1364 = vpack.c.b16 %v1354, %v1353
          %v1365 = vpack.c.b16 %v1356, %v1355
          %v1366 = vpack.c.b16 %v1358, %v1357
          %1375 = vmatprep.subr.bf16.mxu0 0
          %1376 = vmatpush1.bf16.msra.mxu0 %v1359
          %1377 = vmatprep.subr.bf16.mxu0 0
          %1378 = vmatpush1.bf16.msra.mxu0 %v1360
          %1379 = vmatprep.subr.bf16.mxu0 0
          %1380 = vmatpush1.bf16.msra.mxu0 %v1361
          %1381 = vmatprep.subr.bf16.mxu0 0
          %1382 = vmatpush1.bf16.msra.mxu0 %v1362
          %1383 = vmatprep.subr.bf16.mxu0 0
          %1384 = vmatpush1.bf16.msra.mxu0 %v1363
          %1385 = vmatprep.subr.bf16.mxu0 0
          %1386 = vmatpush1.bf16.msra.mxu0 %v1364
          %1387 = vmatprep.subr.bf16.mxu0 0
          %1388 = vmatpush1.bf16.msra.mxu0 %v1365
          %1389 = vmatprep.subr.bf16.mxu0 0
          %1390 = vmatpush1.bf16.msra.mxu0 %v1366
          %1391 = vmatprep.subr.bf16.mxu0 0
          %1392 = vmatpush1.bf16.msra.mxu0 0
          %1393 = vmatprep.subr.bf16.mxu0 0
          %1394 = vmatpush1.bf16.msra.mxu0 0
          %1395 = vmatprep.subr.bf16.mxu0 0
          %1396 = vmatpush1.bf16.msra.mxu0 0
          %1397 = vmatprep.subr.bf16.mxu0 0
          %1398 = vmatpush1.bf16.msra.mxu0 0
          %1399 = vmatprep.subr.bf16.mxu0 0
          %1400 = vmatpush1.bf16.msra.mxu0 0
          %1401 = vmatprep.subr.bf16.mxu0 0
          %1402 = vmatpush1.bf16.msra.mxu0 0
          %1403 = vmatprep.subr.bf16.mxu0 0
          %1404 = vmatpush1.bf16.msra.mxu0 0
          %1405 = vmatprep.subr.bf16.mxu0 0
          %1406 = vmatpush1.bf16.msra.mxu0 0
          %1407 = vmatprep.mubr.bf16.mxu0 0
          %1408 = vmatmul.mubr.bf16.gmra.mrb[0].mxu0 %v1303
          %v1409 = vpop.f32.mrb[0].mxu0
          %v1410 = vadd.f32 %v1325, %v1409
          %v1411 = vpop.f32.mrb[0].mxu0
          %v1412 = vpop.f32.mrb[0].mxu0
          %v1413 = vadd.f32 %v1325, %v1412
          %v1414 = vpop.f32.mrb[0].mxu0
          %1415 = vdwg.mxu0
          %v1416 = vld [vmem:[%s504] sm:$0xf]
          %v1417 = vld [vmem:[%s504 + $0x4] sm:$0xf]
          %v1418 = vunpack.c.l.bf16 %v1416
          %v1419 = vunpack.c.l.bf16 %v1417
          %v1420 = vadd.f32 %v1418, %v1410
          %v1421 = vadd.f32 %v1419, %v1413
          %v1422 = vpack.c.bf16 %v1421, %v1420
          %v1424 = vunpack.c.l.b16 %v1422
          %v1425 = vunpack.c.h.b16 %v1422
          %v1426 = vpack.c.b16 %v1424, %v1424
          %v1427 = vpack.c.b16 %v1425, %v1425
          %1430 = vst [vmem:[%s514] sm:$0xf] %v1426
          %1431 = vst [vmem:[%s514 + $0x4] sm:$0xf] %v1427
        $region175: #{siglip_vision_forward.9} parent=154 // pred_fallthru
          _
        %s1432 = smul.u32 2, %s23
        %p1433 = scmp.lt.s32.totalorder %s22, 1
        %s1434 = scalar_select %p1433, %s22, 1
        %p1435 = scmp.lt.s32.totalorder %s1432, 1
        %s1436 = scalar_select %p1435, %s1432, 1
        %s1437 = smul.addr %s1434, 2
        %s1438 = sadd.s32 %s1436, %s1437
        %s1439 = smul.addr %s1438, 4
        %s1440 = scalar_lea.vmem %s6, %s1439
        // Predicated region
        $region176: #{siglip_vision_forward.9} parent=154 // pred_check
          %p1441 = pneg %p210
        $region177: #{siglip_vision_forward.9} parent=154 // pred_check_branch
          %1443 = sbr.rel (%p1441) target = $region179
        $region178: #{siglip_vision_forward.9} parent=154 // pred_region
          %s1444 = smul.u32 2, %s23
        $region179: #{siglip_vision_forward.9} parent=154 // pred_fallthru
          _
      $region155: #{siglip_vision_forward.9} parent=5 // pred_fallthru
        _
      %p1445 = scmp.le.s32.totalorder 2, %s12
      // Predicated region
      $region180: #{siglip_vision_forward.9} parent=5 // pred_check
        %p1446 = pneg %p1445
      $region181: #{siglip_vision_forward.9} parent=5 // pred_check_branch
        %1448 = sbr.rel (%p1446) target = $region183
      $region182: #{siglip_vision_forward.9} parent=5 // pred_region
        %s1449 = ssub.s32 %s12, 2
        // Predicated region
        $region184: #{siglip_vision_forward.9} parent=182 // pred_check
          %p1450 = pneg %p216
        $region185: #{siglip_vision_forward.9} parent=182 // pred_check_branch
          %1452 = sbr.rel (%p1450) target = $region187
        $region186: #{siglip_vision_forward.9} parent=182 // pred_region
          %s1453 = smul.u32 2, %s26
          %p1454 = scmp.lt.s32.totalorder %s25, 1
          %s1455 = scalar_select %p1454, %s25, 1
          %p1456 = scmp.lt.s32.totalorder %s1453, 1
          %s1457 = scalar_select %p1456, %s1453, 1
          %s1458 = smul.addr %s1455, 2
          %s1459 = sadd.s32 %s1457, %s1458
          %s1460 = smul.addr %s1459, 4
          %s1461 = scalar_lea.vmem %s6, %s1460
        $region187: #{siglip_vision_forward.9} parent=182 // pred_fallthru
          _
      $region183: #{siglip_vision_forward.9} parent=5 // pred_fallthru
        _
    $region6: #{siglip_vision_forward.9} parent=1 // loop_footer
      %s16 = sadd.s32 1, %s12
    $region7: #{siglip_vision_forward.9} parent=1 // loop_footer_branch
      %11 = sbr.rel target = $region3
    $region8: #{siglip_vision_forward.9} parent=1 // loop_exit
      _

// kernel: siglip_vision_forward.13
$region0: #{siglip_vision_forward.13}
  #allocation0 [shape = 'u32[]', space=smem, size = 0x4, offset = 0x4, fixed_abs, tag = 'smem constant byte address 0x4 - core index']
  #allocation1 [shape = 'u32[144,128]{1,0:T(1,128)}', space=vmem, size = 0x12000, scoped, tag = 'internal scratch']
  %s0 = inlined_call_operand.vmem [shape: bf16[2,16,128], index: 0, kind: input, shape index: {}]
  %s1 = inlined_call_operand.vmem [shape: f32[1,128], index: 1, kind: input, shape index: {}]
  %s2 = inlined_call_operand.vmem [shape: f32[1,128], index: 2, kind: input, shape index: {}]
  %s3 = inlined_call_operand.vmem [shape: bf16[128,256], index: 3, kind: input, shape index: {}]
  %s4 = inlined_call_operand.vmem [shape: f32[1,256], index: 4, kind: input, shape index: {}]
  %s5 = inlined_call_operand.vmem [shape: bf16[256,128], index: 5, kind: input, shape index: {}]
  %s6 = inlined_call_operand.vmem [shape: f32[1,128], index: 6, kind: input, shape index: {}]
  %s7 = inlined_call_operand.vmem [shape: f32[1,128], index: 7, kind: input, shape index: {}]
  %s8 = inlined_call_operand.vmem [shape: f32[1,128], index: 8, kind: input, shape index: {}]
  %s9 = inlined_call_operand.hbm [shape: f32[2,16,128], index: 9, kind: output, shape index: {}]
  %s10 = sld [smem:[#allocation0]]
  $region69: #{siglip_vision_forward.13} parent=0
    _
  %s12 = ssub.s32 1, %s10
  %s13 = scalar_select 0, %s12, %s10
  $region1: #{siglip_vision_forward.13} parent=0
    #allocation2 [shape = 'u8[16384]{0}', space=vmem, size = 0x4000, scoped, tag = 'output window, operand 0']
    #allocation3 [shape = 's32[2]{0}', space=sflag, size = 0x8, scoped, tag = 'scoped memory for siglip_vision_forward.13']
    %14 = vsyncpa [#allocation3], 0
    %s15 = scalar_lea.sflag [#allocation3], 1
    %16 = vsyncpa %s15, 0
    loop: start=0, step=1, limit=4
    $region2: #{siglip_vision_forward.13} parent=1 // loop_pre_header
      _
    $region3: #{siglip_vision_forward.13} parent=1 // loop_header
      %s18 = sphi 0, %s22
      %p19 = scmp.ge.s32.totalorder %s18, 4
      %s25 = sphi 0, %s37
      %s26 = sphi 0, %s33
      %s27 = sphi 0, %s25
      %s28 = sphi 0, %s26
      %s29 = sphi 0, %s27
      %s30 = sphi 0, %s28
      %s42 = sphi 0, %s44
      %s45 = sphi 0, %s42
      %s46 = sphi 0, %s45
      %s62 = sphi 0, %s46
      %s66 = sphi 0, %s66
      %s68 = sphi 0, %s66
      %s69 = sphi 0, %s68
      %s83 = sphi 0, %s69
      %s87 = sphi 0, %s87
      %s89 = sphi 0, %s87
      %s90 = sphi 0, %s89
      %s104 = sphi 0, %s90
      %s108 = sphi 0, %s108
      %s110 = sphi 0, %s108
      %s111 = sphi 0, %s110
      %s125 = sphi 0, %s111
      %s129 = sphi 0, %s129
      %s131 = sphi 0, %s129
      %s132 = sphi 0, %s131
      %s146 = sphi 0, %s132
      %s150 = sphi 0, %s150
      %s152 = sphi 0, %s150
      %s153 = sphi 0, %s152
      %s167 = sphi 0, %s153
      %s171 = sphi 0, %s171
      %s173 = sphi 0, %s171
      %s174 = sphi 0, %s173
      %s188 = sphi 0, %s174
      %s192 = sphi 0, %s192
      %s194 = sphi 0, %s192
      %s195 = sphi 0, %s194
      %s209 = sphi 0, %s195
      %s213 = sphi 0, %s213
      %s215 = sphi 0, %s213
      %s216 = sphi 0, %s215
      %s230 = sphi 0, %s216
      %s238 = sphi 0, %s240
      %s241 = sphi 0, %s238
      %s242 = sphi 0, %s241
      %s258 = sphi 0, %s242
    $region4: #{siglip_vision_forward.13} parent=1 // loop_header_branch
      %21 = sbr.rel (%p19) target = $region8
    $region5: #{siglip_vision_forward.13} parent=1 // loop_body
      %s23 = ssub.s32 %s18, 1
      %s24 = ssub.s32 %s18, 2
      %s31 = sadd.s32 1, %s26
      %p32 = scmp.ge.s32.totalorder %s31, 1
      %s33 = scalar_select %p32, 0, %s31
      %s34 = sadd.s32 1, %s25
      %s35 = scalar_select %p32, %s34, %s25
      %p36 = scmp.ge.s32.totalorder %s35, 2
      %s37 = scalar_select %p36, 0, %s35
      %s38 = ssub.s32 %s25, %s37
      %s39 = ssub.s32 %s26, %s33
      %s40 = sor.u32 %s38, %s39
      %p41 = scmp.eq.s32.totalorder %s40, 0
      %s43 = sadd.s32 %s42, 1
      %s44 = scalar_select %p41, %s42, %s43
      %p47 = pneg %p41
      %p48 = scmp.eq.s32.totalorder %s18, 1
      %p49 = por %p47, %p48
      %p50 = scmp.ne.s32.totalorder %s42, %s45
      %p51 = scmp.eq.s32.totalorder %s18, 0
      %p52 = por %p50, %p51
      %p53 = scmp.ne.s32.totalorder %s42, %s45
      %p54 = scmp.eq.s32.totalorder %s23, 1
      %p55 = por %p53, %p54
      %p56 = scmp.ne.s32.totalorder %s45, %s46
      %p57 = scmp.eq.s32.totalorder %s23, 0
      %p58 = por %p56, %p57
      %p59 = scmp.ne.s32.totalorder %s45, %s46
      %p60 = scmp.eq.s32.totalorder %s24, 1
      %p61 = por %p59, %p60
      %p63 = scmp.ne.s32.totalorder %s46, %s62
      %p64 = scmp.eq.s32.totalorder %s24, 0
      %p65 = por %p63, %p64
      %s67 = sadd.s32 %s66, 1
      %p70 = scmp.eq.s32.totalorder %s18, 1
      %p71 = scmp.ne.s32.totalorder %s66, %s68
      %p72 = scmp.eq.s32.totalorder %s18, 0
      %p73 = por %p71, %p72
      %p74 = scmp.ne.s32.totalorder %s66, %s68
      %p75 = scmp.eq.s32.totalorder %s23, 1
      %p76 = por %p74, %p75
      %p77 = scmp.ne.s32.totalorder %s68, %s69
      %p78 = scmp.eq.s32.totalorder %s23, 0
      %p79 = por %p77, %p78
      %p80 = scmp.ne.s32.totalorder %s68, %s69
      %p81 = scmp.eq.s32.totalorder %s24, 1
      %p82 = por %p80, %p81
      %p84 = scmp.ne.s32.totalorder %s69, %s83
      %p85 = scmp.eq.s32.totalorder %s24, 0
      %p86 = por %p84, %p85
      %s88 = sadd.s32 %s87, 1
      %p91 = scmp.eq.s32.totalorder %s18, 1
      %p92 = scmp.ne.s32.totalorder %s87, %s89
      %p93 = scmp.eq.s32.totalorder %s18, 0
      %p94 = por %p92, %p93
      %p95 = scmp.ne.s32.totalorder %s87, %s89
      %p96 = scmp.eq.s32.totalorder %s23, 1
      %p97 = por %p95, %p96
      %p98 = scmp.ne.s32.totalorder %s89, %s90
      %p99 = scmp.eq.s32.totalorder %s23, 0
      %p100 = por %p98, %p99
      %p101 = scmp.ne.s32.totalorder %s89, %s90
      %p102 = scmp.eq.s32.totalorder %s24, 1
      %p103 = por %p101, %p102
      %p105 = scmp.ne.s32.totalorder %s90, %s104
      %p106 = scmp.eq.s32.totalorder %s24, 0
      %p107 = por %p105, %p106
      %s109 = sadd.s32 %s108, 1
      %p112 = scmp.eq.s32.totalorder %s18, 1
      %p113 = scmp.ne.s32.totalorder %s108, %s110
      %p114 = scmp.eq.s32.totalorder %s18, 0
      %p115 = por %p113, %p114
      %p116 = scmp.ne.s32.totalorder %s108, %s110
      %p117 = scmp.eq.s32.totalorder %s23, 1
      %p118 = por %p116, %p117
      %p119 = scmp.ne.s32.totalorder %s110, %s111
      %p120 = scmp.eq.s32.totalorder %s23, 0
      %p121 = por %p119, %p120
      %p122 = scmp.ne.s32.totalorder %s110, %s111
      %p123 = scmp.eq.s32.totalorder %s24, 1
      %p124 = por %p122, %p123
      %p126 = scmp.ne.s32.totalorder %s111, %s125
      %p127 = scmp.eq.s32.totalorder %s24, 0
      %p128 = por %p126, %p127
      %s130 = sadd.s32 %s129, 1
      %p133 = scmp.eq.s32.totalorder %s18, 1
      %p134 = scmp.ne.s32.totalorder %s129, %s131
      %p135 = scmp.eq.s32.totalorder %s18, 0
      %p136 = por %p134, %p135
      %p137 = scmp.ne.s32.totalorder %s129, %s131
      %p138 = scmp.eq.s32.totalorder %s23, 1
      %p139 = por %p137, %p138
      %p140 = scmp.ne.s32.totalorder %s131, %s132
      %p141 = scmp.eq.s32.totalorder %s23, 0
      %p142 = por %p140, %p141
      %p143 = scmp.ne.s32.totalorder %s131, %s132
      %p144 = scmp.eq.s32.totalorder %s24, 1
      %p145 = por %p143, %p144
      %p147 = scmp.ne.s32.totalorder %s132, %s146
      %p148 = scmp.eq.s32.totalorder %s24, 0
      %p149 = por %p147, %p148
      %s151 = sadd.s32 %s150, 1
      %p154 = scmp.eq.s32.totalorder %s18, 1
      %p155 = scmp.ne.s32.totalorder %s150, %s152
      %p156 = scmp.eq.s32.totalorder %s18, 0
      %p157 = por %p155, %p156
      %p158 = scmp.ne.s32.totalorder %s150, %s152
      %p159 = scmp.eq.s32.totalorder %s23, 1
      %p160 = por %p158, %p159
      %p161 = scmp.ne.s32.totalorder %s152, %s153
      %p162 = scmp.eq.s32.totalorder %s23, 0
      %p163 = por %p161, %p162
      %p164 = scmp.ne.s32.totalorder %s152, %s153
      %p165 = scmp.eq.s32.totalorder %s24, 1
      %p166 = por %p164, %p165
      %p168 = scmp.ne.s32.totalorder %s153, %s167
      %p169 = scmp.eq.s32.totalorder %s24, 0
      %p170 = por %p168, %p169
      %s172 = sadd.s32 %s171, 1
      %p175 = scmp.eq.s32.totalorder %s18, 1
      %p176 = scmp.ne.s32.totalorder %s171, %s173
      %p177 = scmp.eq.s32.totalorder %s18, 0
      %p178 = por %p176, %p177
      %p179 = scmp.ne.s32.totalorder %s171, %s173
      %p180 = scmp.eq.s32.totalorder %s23, 1
      %p181 = por %p179, %p180
      %p182 = scmp.ne.s32.totalorder %s173, %s174
      %p183 = scmp.eq.s32.totalorder %s23, 0
      %p184 = por %p182, %p183
      %p185 = scmp.ne.s32.totalorder %s173, %s174
      %p186 = scmp.eq.s32.totalorder %s24, 1
      %p187 = por %p185, %p186
      %p189 = scmp.ne.s32.totalorder %s174, %s188
      %p190 = scmp.eq.s32.totalorder %s24, 0
      %p191 = por %p189, %p190
      %s193 = sadd.s32 %s192, 1
      %p196 = scmp.eq.s32.totalorder %s18, 1
      %p197 = scmp.ne.s32.totalorder %s192, %s194
      %p198 = scmp.eq.s32.totalorder %s18, 0
      %p199 = por %p197, %p198
      %p200 = scmp.ne.s32.totalorder %s192, %s194
      %p201 = scmp.eq.s32.totalorder %s23, 1
      %p202 = por %p200, %p201
      %p203 = scmp.ne.s32.totalorder %s194, %s195
      %p204 = scmp.eq.s32.totalorder %s23, 0
      %p205 = por %p203, %p204
      %p206 = scmp.ne.s32.totalorder %s194, %s195
      %p207 = scmp.eq.s32.totalorder %s24, 1
      %p208 = por %p206, %p207
      %p210 = scmp.ne.s32.totalorder %s195, %s209
      %p211 = scmp.eq.s32.totalorder %s24, 0
      %p212 = por %p210, %p211
      %s214 = sadd.s32 %s213, 1
      %p217 = scmp.eq.s32.totalorder %s18, 1
      %p218 = scmp.ne.s32.totalorder %s213, %s215
      %p219 = scmp.eq.s32.totalorder %s18, 0
      %p220 = por %p218, %p219
      %p221 = scmp.ne.s32.totalorder %s213, %s215
      %p222 = scmp.eq.s32.totalorder %s23, 1
      %p223 = por %p221, %p222
      %p224 = scmp.ne.s32.totalorder %s215, %s216
      %p225 = scmp.eq.s32.totalorder %s23, 0
      %p226 = por %p224, %p225
      %p227 = scmp.ne.s32.totalorder %s215, %s216
      %p228 = scmp.eq.s32.totalorder %s24, 1
      %p229 = por %p227, %p228
      %p231 = scmp.ne.s32.totalorder %s216, %s230
      %p232 = scmp.eq.s32.totalorder %s24, 0
      %p233 = por %p231, %p232
      %s234 = ssub.s32 %s25, %s37
      %s235 = ssub.s32 %s26, %s33
      %s236 = sor.u32 %s234, %s235
      %p237 = scmp.eq.s32.totalorder %s236, 0
      %s239 = sadd.s32 %s238, 1
      %s240 = scalar_select %p237, %s238, %s239
      %p243 = pneg %p237
      %p244 = scmp.eq.s32.totalorder %s18, 1
      %p245 = por %p243, %p244
      %p246 = scmp.ne.s32.totalorder %s238, %s241
      %p247 = scmp.eq.s32.totalorder %s18, 0
      %p248 = por %p246, %p247
      %p249 = scmp.ne.s32.totalorder %s238, %s241
      %p250 = scmp.eq.s32.totalorder %s23, 1
      %p251 = por %p249, %p250
      %p252 = scmp.ne.s32.totalorder %s241, %s242
      %p253 = scmp.eq.s32.totalorder %s23, 0
      %p254 = por %p252, %p253
      %p255 = scmp.ne.s32.totalorder %s241, %s242
      %p256 = scmp.eq.s32.totalorder %s24, 1
      %p257 = por %p255, %p256
      %p259 = scmp.ne.s32.totalorder %s242, %s258
      %p260 = scmp.eq.s32.totalorder %s24, 0
      %p261 = por %p259, %p260
      %p262 = scmp.le.s32.totalorder 1, %s18
      %p263 = scmp.lt.s32.totalorder %s18, 3
      %p264 = pnand %p262, %p263
      %p265 = pneg %p264
      // Predicated region
      $region9: #{siglip_vision_forward.13} parent=5 // pred_check
        _
      $region10: #{siglip_vision_forward.13} parent=5 // pred_check_branch
        %267 = sbr.rel (%p264) target = $region12
      $region11: #{siglip_vision_forward.13} parent=5 // pred_region
        %s268 = ssub.s32 %s18, 1
        // Predicated region
        $region13: #{siglip_vision_forward.13} parent=11 // pred_check
          %p269 = pneg %p79
        $region14: #{siglip_vision_forward.13} parent=11 // pred_check_branch
          %271 = sbr.rel (%p269) target = $region16
        $region15: #{siglip_vision_forward.13} parent=11 // pred_region
          _
        $region16: #{siglip_vision_forward.13} parent=11 // pred_fallthru
          _
        // Predicated region
        $region17: #{siglip_vision_forward.13} parent=11 // pred_check
          %p272 = pneg %p100
        $region18: #{siglip_vision_forward.13} parent=11 // pred_check_branch
          %274 = sbr.rel (%p272) target = $region20
        $region19: #{siglip_vision_forward.13} parent=11 // pred_region
          _
        $region20: #{siglip_vision_forward.13} parent=11 // pred_fallthru
          _
        // Predicated region
        $region21: #{siglip_vision_forward.13} parent=11 // pred_check
          %p275 = pneg %p121
        $region22: #{siglip_vision_forward.13} parent=11 // pred_check_branch
          %277 = sbr.rel (%p275) target = $region24
        $region23: #{siglip_vision_forward.13} parent=11 // pred_region
          _
        $region24: #{siglip_vision_forward.13} parent=11 // pred_fallthru
          _
        // Predicated region
        $region25: #{siglip_vision_forward.13} parent=11 // pred_check
          %p278 = pneg %p142
        $region26: #{siglip_vision_forward.13} parent=11 // pred_check_branch
          %280 = sbr.rel (%p278) target = $region28
        $region27: #{siglip_vision_forward.13} parent=11 // pred_region
          _
        $region28: #{siglip_vision_forward.13} parent=11 // pred_fallthru
          _
        // Predicated region
        $region29: #{siglip_vision_forward.13} parent=11 // pred_check
          %p281 = pneg %p163
        $region30: #{siglip_vision_forward.13} parent=11 // pred_check_branch
          %283 = sbr.rel (%p281) target = $region32
        $region31: #{siglip_vision_forward.13} parent=11 // pred_region
          _
        $region32: #{siglip_vision_forward.13} parent=11 // pred_fallthru
          _
        // Predicated region
        $region33: #{siglip_vision_forward.13} parent=11 // pred_check
          %p284 = pneg %p184
        $region34: #{siglip_vision_forward.13} parent=11 // pred_check_branch
          %286 = sbr.rel (%p284) target = $region36
        $region35: #{siglip_vision_forward.13} parent=11 // pred_region
          _
        $region36: #{siglip_vision_forward.13} parent=11 // pred_fallthru
          _
        // Predicated region
        $region37: #{siglip_vision_forward.13} parent=11 // pred_check
          %p287 = pneg %p205
        $region38: #{siglip_vision_forward.13} parent=11 // pred_check_branch
          %289 = sbr.rel (%p287) target = $region40
        $region39: #{siglip_vision_forward.13} parent=11 // pred_region
          _
        $region40: #{siglip_vision_forward.13} parent=11 // pred_fallthru
          _
        // Predicated region
        $region41: #{siglip_vision_forward.13} parent=11 // pred_check
          %p290 = pneg %p226
        $region42: #{siglip_vision_forward.13} parent=11 // pred_check_branch
          %292 = sbr.rel (%p290) target = $region44
        $region43: #{siglip_vision_forward.13} parent=11 // pred_region
          _
        $region44: #{siglip_vision_forward.13} parent=11 // pred_fallthru
          _
      $region12: #{siglip_vision_forward.13} parent=5 // pred_fallthru
        _
      %p293 = scmp.lt.s32.totalorder %s18, 2
      // Predicated region
      $region45: #{siglip_vision_forward.13} parent=5 // pred_check
        %p294 = pneg %p293
      $region46: #{siglip_vision_forward.13} parent=5 // pred_check_branch
        %296 = sbr.rel (%p294) target = $region48
      $region47: #{siglip_vision_forward.13} parent=5 // pred_region
        // Predicated region
        $region49: #{siglip_vision_forward.13} parent=47 // pred_check
          %p297 = pneg %p52
        $region50: #{siglip_vision_forward.13} parent=47 // pred_check_branch
          %299 = sbr.rel (%p297) target = $region52
        $region51: #{siglip_vision_forward.13} parent=47 // pred_region
          %s300 = smul.u32 2, %s26
          %p301 = scmp.lt.s32.totalorder %s25, 1
          %s302 = scalar_select %p301, %s25, 1
          %p303 = scmp.lt.s32.totalorder %s300, 1
          %s304 = scalar_select %p303, %s300, 1
          %s305 = smul.addr %s302, 2
          %s306 = sadd.s32 %s304, %s305
          %s307 = smul.addr %s306, 4
          %s308 = scalar_lea.vmem %s0, %s307
          %s309 = smul.u32 2, %s26
        $region52: #{siglip_vision_forward.13} parent=47 // pred_fallthru
          _
      $region48: #{siglip_vision_forward.13} parent=5 // pred_fallthru
        _
      %p310 = scmp.le.s32.totalorder 1, %s18
      %p311 = scmp.lt.s32.totalorder %s18, 3
      %p312 = pnand %p310, %p311
      %p313 = pneg %p312
      // Predicated region
      $region53: #{siglip_vision_forward.13} parent=5 // pred_check
        _
      $region54: #{siglip_vision_forward.13} parent=5 // pred_check_branch
        %315 = sbr.rel (%p312) target = $region56
      $region55: #{siglip_vision_forward.13} parent=5 // pred_region
        %s316 = ssub.s32 %s18, 1
        %s317 = smul.u32 2, %s28
        %p318 = scmp.lt.s32.totalorder %s27, 1
        %s319 = scalar_select %p318, %s27, 1
        %p320 = scmp.lt.s32.totalorder %s317, 1
        %s321 = scalar_select %p320, %s317, 1
        %s322 = smul.addr %s319, 2
        %s323 = sadd.s32 %s321, %s322
        %s324 = smul.addr %s323, 4
        %s325 = scalar_lea.vmem %s0, %s324
        %p326 = pneg %p58
        %p327 = pneg %p55
        %p328 = pneg %p79
        %p329 = pneg %p76
        %p330 = pneg %p100
        %p331 = pneg %p97
        %p332 = pneg %p121
        %p333 = pneg %p118
        %p334 = pneg %p142
        %p335 = pneg %p139
        %p336 = pneg %p163
        %p337 = pneg %p160
        %p338 = pneg %p184
        %p339 = pneg %p181
        %p340 = pneg %p205
        %p341 = pneg %p202
        %p342 = pneg %p226
        %p343 = pneg %p223
        %p344 = pneg %p254
        %p345 = pneg %p251
        %s346 = sand.u32 %s241, 1
        %s347 = scalar_lea.sflag [#allocation3], %s346
        %s348 = sand.u32 %s241, 1
        %s349 = smul.addr %s348, 16
        %s350 = scalar_lea.vmem [#allocation2], %s349
        %s351 = smul.u32 2, %s28
        %p352 = scmp.lt.s32.totalorder %s27, 1
        %s353 = scalar_select %p352, %s27, 1
        %p354 = scmp.lt.s32.totalorder %s351, 1
        %s355 = scalar_select %p354, %s351, 1
        %s356 = smul.addr %s353, 2
        %s357 = sadd.s32 %s355, %s356
        %s358 = smul.addr %s357, 4
        %s359 = scalar_lea.vmem %s0, %s358
        %s360 = smul.u32 2, %s28
        %s361 = smul.u32 2, %s28
        %v363 = vld [vmem:[%s359] sm:$0xf]
        %v364 = vld [vmem:[%s359 + $0x4] sm:$0xf]
        %v365 = vunpack.c.l.bf16 %v363
        %v366 = vunpack.c.l.bf16 %v364
        %v367 = vld [vmem:[%s1] sm:$0x1]
        %v368 = vld [vmem:[%s2] sm:$0x1]
        %369 = vadd.xlane.f32.xlu0 %v365
        %v370 = vpop.xlane.xlu0 %369
        %371 = vadd.xlane.f32.xlu0 %v366
        %v372 = vpop.xlane.xlu0 %371
        %v373 = vrcp.pop 128.0
        %v374 = vmul.f32 %v370, %v373
        %v375 = vmul.f32 %v372, %v373
        %v376 = vsub.f32 %v365, %v374
        %v377 = vsub.f32 %v366, %v375
        %v378 = vmul.f32 %v376, %v376
        %v379 = vmul.f32 %v377, %v377
        %380 = vadd.xlane.f32.xlu0 %v378
        %v381 = vpop.xlane.xlu0 %380
        %382 = vadd.xlane.f32.xlu0 %v379
        %v383 = vpop.xlane.xlu0 %382
        %v384 = vmul.f32 %v381, %v373
        %v385 = vmul.f32 %v383, %v373
        %v386 = vadd.f32 %v384, 1e-06
        %v387 = vadd.f32 %v385, 1e-06
        %v388 = vrsqrt.pop %v386
        %v389 = vrsqrt.pop %v387
        %v390 = vmul.f32 %v376, %v388
        %v391 = vmul.f32 %v377, %v389
        %v393 = vlaneseq
        %v394 = vshrl.u32 %v393, 7
        %v395 = vsub.s32 0, %v394
        %v396 = vrot.slane %v367, %v395
        %v398 = vmul.f32 %v390, %v396
        %v399 = vmul.f32 %v391, %v396
        %v401 = vlaneseq
        %v402 = vshrl.u32 %v401, 7
        %v403 = vsub.s32 0, %v402
        %v404 = vrot.slane %v368, %v403
        %v406 = vadd.f32 %v398, %v404
        %v407 = vadd.f32 %v399, %v404
        %v408 = vpack.c.bf16 %v407, %v406
        %v409 = vld [vmem:[%s3] sm:$0xff]
        %v410 = vld [vmem:[%s3 + $0x8] sm:$0xff]
        %v411 = vld [vmem:[%s3 + $0x10] sm:$0xff]
        %v412 = vld [vmem:[%s3 + $0x18] sm:$0xff]
        %v413 = vld [vmem:[%s3 + $0x20] sm:$0xff]
        %v414 = vld [vmem:[%s3 + $0x28] sm:$0xff]
        %v415 = vld [vmem:[%s3 + $0x30] sm:$0xff]
        %v416 = vld [vmem:[%s3 + $0x38] sm:$0xff]
        %v417 = vld [vmem:[%s3 + $0x40] sm:$0xff]
        %v418 = vld [vmem:[%s3 + $0x48] sm:$0xff]
        %v419 = vld [vmem:[%s3 + $0x50] sm:$0xff]
        %v420 = vld [vmem:[%s3 + $0x58] sm:$0xff]
        %v421 = vld [vmem:[%s3 + $0x60] sm:$0xff]
        %v422 = vld [vmem:[%s3 + $0x68] sm:$0xff]
        %v423 = vld [vmem:[%s3 + $0x70] sm:$0xff]
        %v424 = vld [vmem:[%s3 + $0x78] sm:$0xff]
        %v425 = vld [vmem:[%s4] sm:$0x3]
        %v427 = vlaneseq
        %v428 = vshrl.u32 %v427, 7
        %v429 = vsub.s32 0, %v428
        %v430 = vrot.slane %v425, %v429
        %v431 = vlaneseq
        %v432 = vshrl.u32 %v431, 7
        %v433 = vsub.s32 1, %v432
        %v434 = vrot.slane %v425, %v433
        %v453 = vunpack.c.l.b16 %v409
        %v454 = vunpack.c.h.b16 %v409
        %v455 = vunpack.c.l.b16 %v410
        %v456 = vunpack.c.h.b16 %v410
        %v457 = vunpack.c.l.b16 %v411
        %v458 = vunpack.c.h.b16 %v411
        %v459 = vunpack.c.l.b16 %v412
        %v460 = vunpack.c.h.b16 %v412
        %v461 = vunpack.c.l.b16 %v413
        %v462 = vunpack.c.h.b16 %v413
        %v463 = vunpack.c.l.b16 %v414
        %v464 = vunpack.c.h.b16 %v414
        %v465 = vunpack.c.l.b16 %v415
        %v466 = vunpack.c.h.b16 %v415
        %v467 = vunpack.c.l.b16 %v416
        %v468 = vunpack.c.h.b16 %v416
        %v469 = vunpack.c.l.b16 %v417
        %v470 = vunpack.c.h.b16 %v417
        %v471 = vunpack.c.l.b16 %v418
        %v472 = vunpack.c.h.b16 %v418
        %v473 = vunpack.c.l.b16 %v419
        %v474 = vunpack.c.h.b16 %v419
        %v475 = vunpack.c.l.b16 %v420
        %v476 = vunpack.c.h.b16 %v420
        %v477 = vunpack.c.l.b16 %v421
        %v478 = vunpack.c.h.b16 %v421
        %v479 = vunpack.c.l.b16 %v422
        %v480 = vunpack.c.h.b16 %v422
        %v481 = vunpack.c.l.b16 %v423
        %v482 = vunpack.c.h.b16 %v423
        %v483 = vunpack.c.l.b16 %v424
        %v484 = vunpack.c.h.b16 %v424
        %v485 = vpack.c.b16 %v455, %v453
        %v486 = vpack.c.b16 %v456, %v454
        %v487 = vpack.c.b16 %v459, %v457
        %v488 = vpack.c.b16 %v460, %v458
        %v489 = vpack.c.b16 %v463, %v461
        %v490 = vpack.c.b16 %v464, %v462
        %v491 = vpack.c.b16 %v467, %v465
        %v492 = vpack.c.b16 %v468, %v466
        %v493 = vpack.c.b16 %v471, %v469
        %v494 = vpack.c.b16 %v472, %v470
        %v495 = vpack.c.b16 %v475, %v473
        %v496 = vpack.c.b16 %v476, %v474
        %v497 = vpack.c.b16 %v479, %v477
        %v498 = vpack.c.b16 %v480, %v478
        %v499 = vpack.c.b16 %v483, %v481
        %v500 = vpack.c.b16 %v484, %v482
        %517 = vmatprep.subr.bf16.mxu0 %v486
        %518 = vmatpush1.bf16.msra.mxu0 %v485
        %519 = vmatprep.subr.bf16.mxu0 %v488
        %520 = vmatpush1.bf16.msra.mxu0 %v487
        %521 = vmatprep.subr.bf16.mxu0 %v490
        %522 = vmatpush1.bf16.msra.mxu0 %v489
        %523 = vmatprep.subr.bf16.mxu0 %v492
        %524 = vmatpush1.bf16.msra.mxu0 %v491
        %525 = vmatprep.subr.bf16.mxu0 %v494
        %526 = vmatpush1.bf16.msra.mxu0 %v493
        %527 = vmatprep.subr.bf16.mxu0 %v496
        %528 = vmatpush1.bf16.msra.mxu0 %v495
        %529 = vmatprep.subr.bf16.mxu0 %v498
        %530 = vmatpush1.bf16.msra.mxu0 %v497
        %531 = vmatprep.subr.bf16.mxu0 %v500
        %532 = vmatpush1.bf16.msra.mxu0 %v499
        %533 = vmatprep.subr.bf16.mxu0 0
        %534 = vmatpush1.bf16.msra.mxu0 0
        %535 = vmatprep.subr.bf16.mxu0 0
        %536 = vmatpush1.bf16.msra.mxu0 0
        %537 = vmatprep.subr.bf16.mxu0 0
        %538 = vmatpush1.bf16.msra.mxu0 0
        %539 = vmatprep.subr.bf16.mxu0 0
        %540 = vmatpush1.bf16.msra.mxu0 0
        %541 = vmatprep.subr.bf16.mxu0 0
        %542 = vmatpush1.bf16.msra.mxu0 0
        %543 = vmatprep.subr.bf16.mxu0 0
        %544 = vmatpush1.bf16.msra.mxu0 0
        %545 = vmatprep.subr.bf16.mxu0 0
        %546 = vmatpush1.bf16.msra.mxu0 0
        %547 = vmatprep.subr.bf16.mxu0 0
        %548 = vmatpush1.bf16.msra.mxu0 0
        %549 = vmatprep.mubr.bf16.mxu0 0
        %550 = vmatmul.mubr.bf16.gmra.mrb[0].mxu0 %v408
        %v551 = vpop.f32.mrb[0].mxu0
        %v552 = vadd.f32 %v430, %v551
        %v553 = vpop.f32.mrb[0].mxu0
        %v554 = vadd.f32 %v434, %v553
        %v555 = vpop.f32.mrb[0].mxu0
        %v556 = vadd.f32 %v430, %v555
        %v557 = vpop.f32.mrb[0].mxu0
        %v558 = vadd.f32 %v434, %v557
        %559 = vdwg.mxu0
        %v560 = vmul.f32 %v552, 0.5
        %v561 = vmul.f32 %v554, 0.5
        %v562 = vmul.f32 %v556, 0.5
        %v563 = vmul.f32 %v558, 0.5
        %v564 = vmul.f32 %v552, 0.044715
        %v565 = vmul.f32 %v554, 0.044715
        %v566 = vmul.f32 %v556, 0.044715
        %v567 = vmul.f32 %v558, 0.044715
        %v568 = vmul.f32 %v564, %v552
        %v569 = vmul.f32 %v565, %v554
        %v570 = vmul.f32 %v566, %v556
        %v571 = vmul.f32 %v567, %v558
        %v572 = vmul.f32 %v568, %v552
        %v573 = vmul.f32 %v569, %v554
        %v574 = vmul.f32 %v570, %v556
        %v575 = vmul.f32 %v571, %v558
        %v576 = vadd.f32 %v552, %v572
        %v577 = vadd.f32 %v554, %v573
        %v578 = vadd.f32 %v556, %v574
        %v579 = vadd.f32 %v558, %v575
        %v580 = vmul.f32 %v576, 0.7978845
        %v581 = vmul.f32 %v577, 0.7978845
        %v582 = vmul.f32 %v578, 0.7978845
        %v583 = vmul.f32 %v579, 0.7978845
        %v584 = vtanh.pop %v580
        %v585 = vtanh.pop %v581
        %v586 = vtanh.pop %v582
        %v587 = vtanh.pop %v583
        %v588 = vadd.f32 %v584, 1.0
        %v589 = vadd.f32 %v585, 1.0
        %v590 = vadd.f32 %v586, 1.0
        %v591 = vadd.f32 %v587, 1.0
        %v592 = vmul.f32 %v560, %v588
        %v593 = vmul.f32 %v561, %v589
        %v594 = vmul.f32 %v562, %v590
        %v595 = vmul.f32 %v563, %v591
        %v596 = vpack.c.bf16 %v594, %v592
        %v597 = vpack.c.bf16 %v595, %v593
        %v598 = vld [vmem:[%s5] sm:$0xf]
        %v599 = vld [vmem:[%s5 + $0x4] sm:$0xf]
        %v600 = vld [vmem:[%s5 + $0x8] sm:$0xf]
        %v601 = vld [vmem:[%s5 + $0xc] sm:$0xf]
        %v602 = vld [vmem:[%s5 + $0x10] sm:$0xf]
        %v603 = vld [vmem:[%s5 + $0x14] sm:$0xf]
        %v604 = vld [vmem:[%s5 + $0x18] sm:$0xf]
        %v605 = vld [vmem:[%s5 + $0x1c] sm:$0xf]
        %v606 = vld [vmem:[%s5 + $0x20] sm:$0xf]
        %v607 = vld [vmem:[%s5 + $0x24] sm:$0xf]
        %v608 = vld [vmem:[%s5 + $0x28] sm:$0xf]
        %v609 = vld [vmem:[%s5 + $0x2c] sm:$0xf]
        %v610 = vld [vmem:[%s5 + $0x30] sm:$0xf]
        %v611 = vld [vmem:[%s5 + $0x34] sm:$0xf]
        %v612 = vld [vmem:[%s5 + $0x38] sm:$0xf]
        %v613 = vld [vmem:[%s5 + $0x3c] sm:$0xf]
        %v614 = vld [vmem:[%s5 + $0x40] sm:$0xf]
        %v615 = vld [vmem:[%s5 + $0x44] sm:$0xf]
        %v616 = vld [vmem:[%s5 + $0x48] sm:$0xf]
        %v617 = vld [vmem:[%s5 + $0x4c] sm:$0xf]
        %v618 = vld [vmem:[%s5 + $0x50] sm:$0xf]
        %v619 = vld [vmem:[%s5 + $0x54] sm:$0xf]
        %v620 = vld [vmem:[%s5 + $0x58] sm:$0xf]
        %v621 = vld [vmem:[%s5 + $0x5c] sm:$0xf]
        %v622 = vld [vmem:[%s5 + $0x60] sm:$0xf]
        %v623 = vld [vmem:[%s5 + $0x64] sm:$0xf]
        %v624 = vld [vmem:[%s5 + $0x68] sm:$0xf]
        %v625 = vld [vmem:[%s5 + $0x6c] sm:$0xf]
        %v626 = vld [vmem:[%s5 + $0x70] sm:$0xf]
        %v627 = vld [vmem:[%s5 + $0x74] sm:$0xf]
        %v628 = vld [vmem:[%s5 + $0x78] sm:$0xf]
        %v629 = vld [vmem:[%s5 + $0x7c] sm:$0xf]
        %v630 = vld [vmem:[%s6] sm:$0x1]
        %v632 = vlaneseq
        %v633 = vshrl.u32 %v632, 7
        %v634 = vsub.s32 0, %v633
        %v635 = vrot.slane %v630, %v634
        %v669 = vunpack.c.l.b16 %v598
        %v670 = vunpack.c.l.b16 %v599
        %v671 = vunpack.c.l.b16 %v600
        %v672 = vunpack.c.l.b16 %v601
        %v673 = vunpack.c.l.b16 %v602
        %v674 = vunpack.c.l.b16 %v603
        %v675 = vunpack.c.l.b16 %v604
        %v676 = vunpack.c.l.b16 %v605
        %v677 = vunpack.c.l.b16 %v606
        %v678 = vunpack.c.l.b16 %v607
        %v679 = vunpack.c.l.b16 %v608
        %v680 = vunpack.c.l.b16 %v609
        %v681 = vunpack.c.l.b16 %v610
        %v682 = vunpack.c.l.b16 %v611
        %v683 = vunpack.c.l.b16 %v612
        %v684 = vunpack.c.l.b16 %v613
        %v685 = vunpack.c.l.b16 %v614
        %v686 = vunpack.c.l.b16 %v615
        %v687 = vunpack.c.l.b16 %v616
        %v688 = vunpack.c.l.b16 %v617
        %v689 = vunpack.c.l.b16 %v618
        %v690 = vunpack.c.l.b16 %v619
        %v691 = vunpack.c.l.b16 %v620
        %v692 = vunpack.c.l.b16 %v621
        %v693 = vunpack.c.l.b16 %v622
        %v694 = vunpack.c.l.b16 %v623
        %v695 = vunpack.c.l.b16 %v624
        %v696 = vunpack.c.l.b16 %v625
        %v697 = vunpack.c.l.b16 %v626
        %v698 = vunpack.c.l.b16 %v627
        %v699 = vunpack.c.l.b16 %v628
        %v700 = vunpack.c.l.b16 %v629
        %v701 = vpack.c.b16 %v670, %v669
        %v702 = vpack.c.b16 %v672, %v671
        %v703 = vpack.c.b16 %v674, %v673
        %v704 = vpack.c.b16 %v676, %v675
        %v705 = vpack.c.b16 %v678, %v677
        %v706 = vpack.c.b16 %v680, %v679
        %v707 = vpack.c.b16 %v682, %v681
        %v708 = vpack.c.b16 %v684, %v683
        %v709 = vpack.c.b16 %v686, %v685
        %v710 = vpack.c.b16 %v688, %v687
        %v711 = vpack.c.b16 %v690, %v689
        %v712 = vpack.c.b16 %v692, %v691
        %v713 = vpack.c.b16 %v694, %v693
        %v714 = vpack.c.b16 %v696, %v695
        %v715 = vpack.c.b16 %v698, %v697
        %v716 = vpack.c.b16 %v700, %v699
        %733 = vmatprep.subr.bf16.mxu0 0
        %734 = vmatpush1.bf16.msra.mxu0 %v701
        %735 = vmatprep.subr.bf16.mxu0 0
        %736 = vmatpush1.bf16.msra.mxu0 %v702
        %737 = vmatprep.subr.bf16.mxu0 0
        %738 = vmatpush1.bf16.msra.mxu0 %v703
        %739 = vmatprep.subr.bf16.mxu0 0
        %740 = vmatpush1.bf16.msra.mxu0 %v704
        %741 = vmatprep.subr.bf16.mxu0 0
        %742 = vmatpush1.bf16.msra.mxu0 %v705
        %743 = vmatprep.subr.bf16.mxu0 0
        %744 = vmatpush1.bf16.msra.mxu0 %v706
        %745 = vmatprep.subr.bf16.mxu0 0
        %746 = vmatpush1.bf16.msra.mxu0 %v707
        %747 = vmatprep.subr.bf16.mxu0 0
        %748 = vmatpush1.bf16.msra.mxu0 %v708
        %749 = vmatprep.subr.bf16.mxu0 0
        %750 = vmatpush1.bf16.msra.mxu0 %v709
        %751 = vmatprep.subr.bf16.mxu0 0
        %752 = vmatpush1.bf16.msra.mxu0 %v710
        %753 = vmatprep.subr.bf16.mxu0 0
        %754 = vmatpush1.bf16.msra.mxu0 %v711
        %755 = vmatprep.subr.bf16.mxu0 0
        %756 = vmatpush1.bf16.msra.mxu0 %v712
        %757 = vmatprep.subr.bf16.mxu0 0
        %758 = vmatpush1.bf16.msra.mxu0 %v713
        %759 = vmatprep.subr.bf16.mxu0 0
        %760 = vmatpush1.bf16.msra.mxu0 %v714
        %761 = vmatprep.subr.bf16.mxu0 0
        %762 = vmatpush1.bf16.msra.mxu0 %v715
        %763 = vmatprep.subr.bf16.mxu0 0
        %764 = vmatpush1.bf16.msra.mxu0 %v716
        %765 = vmatprep.mubr.bf16.mxu0 %v597
        %766 = vmatmul.mubr.bf16.gmra.mrb[0].mxu0 %v596
        %v767 = vpop.f32.mrb[0].mxu0
        %v768 = vadd.f32 %v635, %v767
        %v769 = vpop.f32.mrb[0].mxu0
        %v770 = vpop.f32.mrb[0].mxu0
        %v771 = vadd.f32 %v635, %v770
        %v772 = vpop.f32.mrb[0].mxu0
        %773 = vdwg.mxu0
        %v774 = vadd.f32 %v365, %v768
        %v775 = vadd.f32 %v366, %v771
        %v776 = vld [vmem:[%s7] sm:$0x1]
        %v777 = vld [vmem:[%s8] sm:$0x1]
        %778 = vadd.xlane.f32.xlu0 %v774
        %v779 = vpop.xlane.xlu0 %778
        %780 = vadd.xlane.f32.xlu0 %v775
        %v781 = vpop.xlane.xlu0 %780
        %v782 = vmul.f32 %v779, %v373
        %v783 = vmul.f32 %v781, %v373
        %v784 = vsub.f32 %v774, %v782
        %v785 = vsub.f32 %v775, %v783
        %v786 = vmul.f32 %v784, %v784
        %v787 = vmul.f32 %v785, %v785
        %788 = vadd.xlane.f32.xlu0 %v786
        %v789 = vpop.xlane.xlu0 %788
        %790 = vadd.xlane.f32.xlu0 %v787
        %v791 = vpop.xlane.xlu0 %790
        %v792 = vmul.f32 %v789, %v373
        %v793 = vmul.f32 %v791, %v373
        %v794 = vadd.f32 %v792, 1e-06
        %v795 = vadd.f32 %v793, 1e-06
        %v796 = vrsqrt.pop %v794
        %v797 = vrsqrt.pop %v795
        %v798 = vmul.f32 %v784, %v796
        %v799 = vmul.f32 %v785, %v797
        %v801 = vlaneseq
        %v802 = vshrl.u32 %v801, 7
        %v803 = vsub.s32 0, %v802
        %v804 = vrot.slane %v776, %v803
        %v806 = vmul.f32 %v798, %v804
        %v807 = vmul.f32 %v799, %v804
        %v809 = vlaneseq
        %v810 = vshrl.u32 %v809, 7
        %v811 = vsub.s32 0, %v810
        %v812 = vrot.slane %v777, %v811
        %v814 = vadd.f32 %v806, %v812
        %v815 = vadd.f32 %v807, %v812
        %816 = vst [vmem:[%s350] sm:$0xff] %v814
        %817 = vst [vmem:[%s350 + $0x8] sm:$0xff] %v815
        %s818 = sand.u32 %s241, 1
        %s819 = scalar_lea.sflag [#allocation3], %s818
        %s820 = sand.u32 %s241, 1
        %s821 = smul.addr %s820, 16
        %s822 = scalar_lea.vmem [#allocation2], %s821
        // Predicated region
        $region57: #{siglip_vision_forward.13} parent=55 // pred_check
          %p823 = pneg %p251
        $region58: #{siglip_vision_forward.13} parent=55 // pred_check_branch
          %825 = sbr.rel (%p823) target = $region60
        $region59: #{siglip_vision_forward.13} parent=55 // pred_region
          %s826 = smul.u32 2, %s28
          %s828 = ssub.s32 256, 256
          %829 = vsyncadd %s819, %s828
          %s830 = smul.addr %s27, 2
          %s831 = sadd.s32 %s826, %s830
          %s832 = smul.addr %s831, 128
          %s833 = scalar_lea.hbm %s9, %s832
          %s834 = sshll.u32 %s822, 4
          %s835 = int_to_ptr.vmem [resolvable:$true] %s834
          %840 = dma.vmem_to_hbm [thread:$0]  %s835, 256, %s833, %s819, 128, 128, 8
        $region60: #{siglip_vision_forward.13} parent=55 // pred_fallthru
          _
      $region56: #{siglip_vision_forward.13} parent=5 // pred_fallthru
        _
      %p841 = scmp.le.s32.totalorder 2, %s18
      // Predicated region
      $region61: #{siglip_vision_forward.13} parent=5 // pred_check
        %p842 = pneg %p841
      $region62: #{siglip_vision_forward.13} parent=5 // pred_check_branch
        %844 = sbr.rel (%p842) target = $region64
      $region63: #{siglip_vision_forward.13} parent=5 // pred_region
        %s845 = ssub.s32 %s18, 2
        // Predicated region
        $region65: #{siglip_vision_forward.13} parent=63 // pred_check
          %p846 = pneg %p257
        $region66: #{siglip_vision_forward.13} parent=63 // pred_check_branch
          %848 = sbr.rel (%p846) target = $region68
        $region67: #{siglip_vision_forward.13} parent=63 // pred_region
          %s849 = sand.u32 %s242, 1
          %s850 = scalar_lea.sflag [#allocation3], %s849
          %s851 = sand.u32 %s242, 1
          %s852 = smul.addr %s851, 16
          %s853 = scalar_lea.vmem [#allocation2], %s852
          %854 = dma.done %s850, 256
        $region68: #{siglip_vision_forward.13} parent=63 // pred_fallthru
          _
      $region64: #{siglip_vision_forward.13} parent=5 // pred_fallthru
        _
    $region6: #{siglip_vision_forward.13} parent=1 // loop_footer
      %s22 = sadd.s32 1, %s18
    $region7: #{siglip_vision_forward.13} parent=1 // loop_footer_branch
      %17 = sbr.rel target = $region3
    $region8: #{siglip_vision_forward.13} parent=1 // loop_exit
      _
    %855 = vsyncpa [#allocation3], 1
    %s856 = scalar_lea.sflag [#allocation3], 1
    %857 = vsyncpa %s856, 1

</llo_original>
